<compile_context>
chip_gen: v7x
topology: tpu7x:2x2x1
jax: 0.10.0
libtpu: 0.0.40
codegen_flags: <defaults>
</compile_context>

<pallas_src>
import jax
import jax.numpy as jnp
import numpy as np
from jax.experimental import pallas as pl
from jax.experimental.pallas import tpu as pltpu


def context_module_forward(x_im, x_m, params, batch_size=1, num_context=3):
    """Fused Pallas implementation of ContextModule.forward.

    x_im : (B, NC, C, H, W) float32  (NCHW per context element, PyTorch layout)
    x_m  : (B, NC, M)       float32
    returns (x_im_agg: (B, D), x_m_agg: (B, Dm))
    """
    B, NC, C, H, W = x_im.shape
    _, _, M = x_m.shape
    assert B == batch_size and NC == num_context and NC >= 1

    wc, bc, wf, bf = params["wc"], params["bc"], params["wf"], params["bf"]
    w1, b1, w2, b2 = params["w1"], params["b1"], params["w2"], params["b2"]
    F, D = wc.shape[-1], wf.shape[-1]
    Hm, Dm = w1.shape[-1], w2.shape[-1]

    Hp, Wp = H + 2, W + 2
    L = (H - 1) * Wp + W          # flattened conv-output rows (incl. masked junk cols)
    inv_nc = 1.0 / NC

    # ---------------- wrapper glue (cheap, no 9x expansion) ----------------
    # NCHW -> channels-last, zero-pad H/W by 1, flatten spatial, cast to bf16.
    x_nhwc = jnp.transpose(x_im, (0, 1, 3, 4, 2))                   # (B, NC, H, W, C)
    x_pad = jnp.pad(x_nhwc, ((0, 0), (0, 0), (1, 1), (1, 1), (0, 0)))
    x_flat = x_pad.reshape(B, NC, Hp * Wp, C).astype(jnp.bfloat16)  # (B, NC, Hp*Wp, C)

    # valid-row mask with the 1/(H*W) pooling mean folded in (tiny constant).
    valid = (np.arange(L) % Wp) < W
    mask = jnp.asarray((valid.astype(np.float32) / (H * W)).reshape(L, 1))

    # ------------------------------ kernel ---------------------------------
    def kernel(xim_ref, mask_ref, wc_ref, bc_ref, wf_ref, bf_ref,
               xm_ref, w1_ref, b1_ref, w2_ref, b2_ref,
               out_im_ref, out_m_ref):
        k = pl.program_id(1)

        # ---- perception: conv3x3(pad=1) as 9 shifted-slice matmuls ----
        x = xim_ref[...].astype(jnp.float32)                 # (Hp*Wp, C)
        acc = jnp.zeros((L, F), jnp.float32)
        for di in range(3):
            for dj in range(3):
                s = di * Wp + dj
                xs = x[s:s + L, :]                            # (L, C) static slice
                acc = acc + jnp.dot(xs,
                                    wc_ref[di * 3 + dj].astype(jnp.float32),
                                    preferred_element_type=jnp.float32)
        h = jnp.maximum(acc + bc_ref[...], 0.0)               # conv + ReLU, (L, F)
        # global average pool == masked in-kernel reduction (no dense pool matrix)
        pooled = jnp.sum(h * mask_ref[...], axis=0, keepdims=True)        # (1, F)
        feat = jnp.dot(pooled, wf_ref[...].astype(jnp.float32),
                       preferred_element_type=jnp.float32) + bf_ref[...]
        feat = jnp.maximum(feat, 0.0) * inv_nc                # (1, D), pre-scaled

        @pl.when(k == 0)
        def _():
            # init context-mean accumulator for this batch row
            out_im_ref[...] = feat
            # ---- measurement path: all NC rows of this batch at once,
            #      context-mean folded before the (affine) second linear ----
            h1 = jnp.dot(xm_ref[...], w1_ref[...],
                         preferred_element_type=jnp.float32) + b1_ref[...]
            h1 = jnp.maximum(h1, 0.0)                         # (NC, Hm)
            h1m = jnp.mean(h1, axis=0, keepdims=True)         # (1, Hm)
            out_m_ref[...] = jnp.dot(h1m, w2_ref[...],
                                     preferred_element_type=jnp.float32) + b2_ref[...]

        @pl.when(k > 0)
        def _():
            out_im_ref[...] = out_im_ref[...] + feat

    out_im3, out_m3 = pl.pallas_call(
        kernel,
        out_shape=(jax.ShapeDtypeStruct((B, 1, D), jnp.float32),
                   jax.ShapeDtypeStruct((B, 1, Dm), jnp.float32)),
        grid_spec=pltpu.PrefetchScalarGridSpec(
            num_scalar_prefetch=0,
            grid=(B, NC),
            in_specs=[
                pl.BlockSpec((None, None, Hp * Wp, C), lambda b, k: (b, k, 0, 0)),
                pl.BlockSpec((L, 1), lambda b, k: (0, 0)),
                pl.BlockSpec((9, C, F), lambda b, k: (0, 0, 0)),
                pl.BlockSpec((1, F), lambda b, k: (0, 0)),
                pl.BlockSpec((F, D), lambda b, k: (0, 0)),
                pl.BlockSpec((1, D), lambda b, k: (0, 0)),
                pl.BlockSpec((None, NC, M), lambda b, k: (b, 0, 0)),
                pl.BlockSpec((M, Hm), lambda b, k: (0, 0)),
                pl.BlockSpec((1, Hm), lambda b, k: (0, 0)),
                pl.BlockSpec((Hm, Dm), lambda b, k: (0, 0)),
                pl.BlockSpec((1, Dm), lambda b, k: (0, 0)),
            ],
            out_specs=(
                pl.BlockSpec((None, 1, D), lambda b, k: (b, 0, 0)),
                pl.BlockSpec((None, 1, Dm), lambda b, k: (b, 0, 0)),
            ),
        ),
        compiler_params=pltpu.CompilerParams(
            dimension_semantics=("parallel", "arbitrary"),
            vmem_limit_bytes=32 * 1024 * 1024,
        ),
    )(x_flat, mask, wc, bc, wf, bf, x_m, w1, b1, w2, b2)

    return out_im3.reshape(B, D), out_m3.reshape(B, Dm)


# ------------------- pure-JAX reference (same math, no Pallas) -------------------
def context_module_reference(x_im, x_m, params, batch_size, num_context):
    B, NC, C, H, W = x_im.shape
    _, _, M = x_m.shape
    N = B * NC
    wc = params["wc"].astype(jnp.float32)       # (9, C, F)
    bc = params["bc"]
    wf = params["wf"].astype(jnp.float32)
    bf = params["bf"]
    w1, b1, w2, b2 = params["w1"], params["b1"], params["w2"], params["b2"]
    F = wc.shape[-1]

    # perception: conv3x3(pad=1) -> ReLU -> global-avg-pool -> fc -> ReLU
    x = x_im.reshape(N, C, H, W).astype(jnp.bfloat16).astype(jnp.float32)
    xp = jnp.pad(x, ((0, 0), (0, 0), (1, 1), (1, 1)))
    acc = jnp.zeros((N, H, W, F), jnp.float32)
    for di in range(3):
        for dj in range(3):
            xs = xp[:, :, di:di + H, dj:dj + W]               # (N, C, H, W)
            acc = acc + jnp.einsum("nchw,cf->nhwf", xs, wc[di * 3 + dj])
    h = jnp.maximum(acc + bc, 0.0)
    pooled = h.mean(axis=(1, 2))                              # (N, F)
    feat = jnp.maximum(pooled @ wf + bf, 0.0)                 # (N, D)
    im_out = feat.reshape(B, NC, -1).mean(axis=1)

    # measurement: fc -> ReLU -> fc
    xm = x_m.reshape(N, M)
    h1 = jnp.maximum(xm @ w1 + b1, 0.0)
    ym = h1 @ w2 + b2
    m_out = ym.reshape(B, NC, -1).mean(axis=1)
    return im_out, m_out


# ------------------------------------ main ------------------------------------
if __name__ == "__main__":
    B, NC = 2, 3              # batch_size, num_context
    C, H, W = 4, 16, 16       # image channels / spatial
    M = 8                     # measurement vector length
    F, D = 128, 128           # conv out channels / perception feature dim (lane-dense)
    Hm, Dm = 128, 128         # measurement MLP dims (lane-dense)

    key = jax.random.PRNGKey(0)
    keys = jax.random.split(key, 10)

    x_im = jax.random.normal(keys[0], (B, NC, C, H, W), dtype=jnp.float32)
    x_m = jax.random.normal(keys[1], (B, NC, M), dtype=jnp.float32)

    params = {
        # conv weight laid out (9, C, F); index di*3+dj matches the kernel's shifts
        "wc": (jax.random.normal(keys[2], (9, C, F), jnp.float32) * 0.1
               ).astype(jnp.bfloat16),
        "bc": jax.random.normal(keys[3], (1, F), jnp.float32) * 0.05,
        "wf": (jax.random.normal(keys[4], (F, D), jnp.float32) * 0.1
               ).astype(jnp.bfloat16),
        "bf": jax.random.normal(keys[5], (1, D), jnp.float32) * 0.05,
        "w1": jax.random.normal(keys[6], (M, Hm), jnp.float32) * 0.1,
        "b1": jax.random.normal(keys[7], (1, Hm), jnp.float32) * 0.05,
        "w2": jax.random.normal(keys[8], (Hm, Dm), jnp.float32) * 0.1,
        "b2": jax.random.normal(keys[9], (1, Dm), jnp.float32) * 0.05,
    }

    fwd = jax.jit(context_module_forward, static_argnums=(3, 4))
    im_out, m_out = fwd(x_im, x_m, params, B, NC)
    im_out, m_out = jax.block_until_ready((im_out, m_out))

    im_ref, m_ref = context_module_reference(x_im, x_m, params, B, NC)
    np.testing.assert_allclose(np.asarray(im_out), np.asarray(im_ref),
                               rtol=2e-3, atol=2e-3)
    np.testing.assert_allclose(np.asarray(m_out), np.asarray(m_ref),
                               rtol=1e-5, atol=1e-5)
    assert im_out.shape == (B, D) and m_out.shape == (B, Dm)

    print("KERNEL_OK")
</pallas_src>

<mosaic_0001>
module attributes {stable_mosaic.version = 11 : i64} {
  func.func @kernel(%arg0: i32, %arg1: i32, %arg2: memref<1x1x324x4xbf16, #tpu.memory_space<vmem>>, %arg3: memref<286x1xf32, #tpu.memory_space<vmem>>, %arg4: memref<9x4x128xbf16, #tpu.memory_space<vmem>>, %arg5: memref<1x128xf32, #tpu.memory_space<vmem>>, %arg6: memref<128x128xbf16, #tpu.memory_space<vmem>>, %arg7: memref<1x128xf32, #tpu.memory_space<vmem>>, %arg8: memref<1x3x8xf32, #tpu.memory_space<vmem>>, %arg9: memref<8x128xf32, #tpu.memory_space<vmem>>, %arg10: memref<1x128xf32, #tpu.memory_space<vmem>>, %arg11: memref<128x128xf32, #tpu.memory_space<vmem>>, %arg12: memref<1x128xf32, #tpu.memory_space<vmem>>, %arg13: memref<1x1x128xf32, #tpu.memory_space<vmem>>, %arg14: memref<1x1x128xf32, #tpu.memory_space<vmem>>) attributes {dimension_semantics = [#tpu.dimension_semantics<parallel>, #tpu.dimension_semantics<arbitrary>], iteration_bounds = array<i64: 2, 3>, scalar_prefetch = 0 : i64, scratch_operands = 0 : i64, tpu.core_type = #tpu.core_type<tc>, window_params = [{transform_indices = @transform_0, window_bounds = array<i64: 1, 1, 324, 4>}, {pipeline_mode = #tpu.pipeline_mode<synchronous>, transform_indices = @transform_1, window_bounds = array<i64: 286, 1>}, {pipeline_mode = #tpu.pipeline_mode<synchronous>, transform_indices = @transform_2, window_bounds = array<i64: 9, 4, 128>}, {pipeline_mode = #tpu.pipeline_mode<synchronous>, transform_indices = @transform_3, window_bounds = array<i64: 1, 128>}, {pipeline_mode = #tpu.pipeline_mode<synchronous>, transform_indices = @transform_4, window_bounds = array<i64: 128, 128>}, {pipeline_mode = #tpu.pipeline_mode<synchronous>, transform_indices = @transform_5, window_bounds = array<i64: 1, 128>}, {transform_indices = @transform_6, window_bounds = array<i64: 1, 3, 8>}, {pipeline_mode = #tpu.pipeline_mode<synchronous>, transform_indices = @transform_7, window_bounds = array<i64: 8, 128>}, {pipeline_mode = #tpu.pipeline_mode<synchronous>, transform_indices = @transform_8, window_bounds = array<i64: 1, 128>}, {pipeline_mode = #tpu.pipeline_mode<synchronous>, transform_indices = @transform_9, window_bounds = array<i64: 128, 128>}, {pipeline_mode = #tpu.pipeline_mode<synchronous>, transform_indices = @transform_10, window_bounds = array<i64: 1, 128>}, {transform_indices = @transform_11, window_bounds = array<i64: 1, 1, 128>}, {transform_indices = @transform_12, window_bounds = array<i64: 1, 1, 128>}]} {
    %c0 = arith.constant 0 : index
    %c0_0 = arith.constant 0 : index
    %c0_1 = arith.constant 0 : index
    %c0_2 = arith.constant 0 : index
    %0 = vector.load %arg2[%c0, %c0_0, %c0_1, %c0_2] : memref<1x1x324x4xbf16, #tpu.memory_space<vmem>>, vector<1x1x324x4xbf16>
    %1 = vector.shape_cast %0 : vector<1x1x324x4xbf16> to vector<324x4xbf16>
    %2 = arith.extf %1 : vector<324x4xbf16> to vector<324x4xf32>
    %cst = arith.constant 0.000000e+00 : f32
    %3 = vector.broadcast %cst : f32 to vector<286x128xf32>
    %4 = vector.extract_strided_slice %2 {offsets = [0, 0], sizes = [286, 4], strides = [1, 1]} : vector<324x4xf32> to vector<286x4xf32>
    %c0_3 = arith.constant 0 : index
    %c0_4 = arith.constant 0 : index
    %c0_5 = arith.constant 0 : index
    %5 = vector.load %arg4[%c0_3, %c0_4, %c0_5] : memref<9x4x128xbf16, #tpu.memory_space<vmem>>, vector<1x4x128xbf16>
    %6 = vector.shape_cast %5 : vector<1x4x128xbf16> to vector<4x128xbf16>
    %7 = arith.extf %6 : vector<4x128xbf16> to vector<4x128xf32>
    %cst_6 = arith.constant dense<0.000000e+00> : vector<286x128xf32>
    %8 = tpu.matmul %4, %7, %cst_6 {dimension_numbers = #tpu.dot_dimension_numbers<[1], [0], [0], [1], [0, 0, 1, 1], [], []>} : vector<286x4xf32>, vector<4x128xf32>, vector<286x128xf32> -> vector<286x128xf32>
    %9 = arith.addf %3, %8 : vector<286x128xf32>
    %10 = vector.extract_strided_slice %2 {offsets = [1, 0], sizes = [286, 4], strides = [1, 1]} : vector<324x4xf32> to vector<286x4xf32>
    %c1 = arith.constant 1 : index
    %c0_7 = arith.constant 0 : index
    %c0_8 = arith.constant 0 : index
    %11 = vector.load %arg4[%c1, %c0_7, %c0_8] : memref<9x4x128xbf16, #tpu.memory_space<vmem>>, vector<1x4x128xbf16>
    %12 = vector.shape_cast %11 : vector<1x4x128xbf16> to vector<4x128xbf16>
    %13 = arith.extf %12 : vector<4x128xbf16> to vector<4x128xf32>
    %cst_9 = arith.constant dense<0.000000e+00> : vector<286x128xf32>
    %14 = tpu.matmul %10, %13, %cst_9 {dimension_numbers = #tpu.dot_dimension_numbers<[1], [0], [0], [1], [0, 0, 1, 1], [], []>} : vector<286x4xf32>, vector<4x128xf32>, vector<286x128xf32> -> vector<286x128xf32>
    %15 = arith.addf %9, %14 : vector<286x128xf32>
    %16 = vector.extract_strided_slice %2 {offsets = [2, 0], sizes = [286, 4], strides = [1, 1]} : vector<324x4xf32> to vector<286x4xf32>
    %c2 = arith.constant 2 : index
    %c0_10 = arith.constant 0 : index
    %c0_11 = arith.constant 0 : index
    %17 = vector.load %arg4[%c2, %c0_10, %c0_11] : memref<9x4x128xbf16, #tpu.memory_space<vmem>>, vector<1x4x128xbf16>
    %18 = vector.shape_cast %17 : vector<1x4x128xbf16> to vector<4x128xbf16>
    %19 = arith.extf %18 : vector<4x128xbf16> to vector<4x128xf32>
    %cst_12 = arith.constant dense<0.000000e+00> : vector<286x128xf32>
    %20 = tpu.matmul %16, %19, %cst_12 {dimension_numbers = #tpu.dot_dimension_numbers<[1], [0], [0], [1], [0, 0, 1, 1], [], []>} : vector<286x4xf32>, vector<4x128xf32>, vector<286x128xf32> -> vector<286x128xf32>
    %21 = arith.addf %15, %20 : vector<286x128xf32>
    %22 = vector.extract_strided_slice %2 {offsets = [18, 0], sizes = [286, 4], strides = [1, 1]} : vector<324x4xf32> to vector<286x4xf32>
    %c3 = arith.constant 3 : index
    %c0_13 = arith.constant 0 : index
    %c0_14 = arith.constant 0 : index
    %23 = vector.load %arg4[%c3, %c0_13, %c0_14] : memref<9x4x128xbf16, #tpu.memory_space<vmem>>, vector<1x4x128xbf16>
    %24 = vector.shape_cast %23 : vector<1x4x128xbf16> to vector<4x128xbf16>
    %25 = arith.extf %24 : vector<4x128xbf16> to vector<4x128xf32>
    %cst_15 = arith.constant dense<0.000000e+00> : vector<286x128xf32>
    %26 = tpu.matmul %22, %25, %cst_15 {dimension_numbers = #tpu.dot_dimension_numbers<[1], [0], [0], [1], [0, 0, 1, 1], [], []>} : vector<286x4xf32>, vector<4x128xf32>, vector<286x128xf32> -> vector<286x128xf32>
    %27 = arith.addf %21, %26 : vector<286x128xf32>
    %28 = vector.extract_strided_slice %2 {offsets = [19, 0], sizes = [286, 4], strides = [1, 1]} : vector<324x4xf32> to vector<286x4xf32>
    %c4 = arith.constant 4 : index
    %c0_16 = arith.constant 0 : index
    %c0_17 = arith.constant 0 : index
    %29 = vector.load %arg4[%c4, %c0_16, %c0_17] : memref<9x4x128xbf16, #tpu.memory_space<vmem>>, vector<1x4x128xbf16>
    %30 = vector.shape_cast %29 : vector<1x4x128xbf16> to vector<4x128xbf16>
    %31 = arith.extf %30 : vector<4x128xbf16> to vector<4x128xf32>
    %cst_18 = arith.constant dense<0.000000e+00> : vector<286x128xf32>
    %32 = tpu.matmul %28, %31, %cst_18 {dimension_numbers = #tpu.dot_dimension_numbers<[1], [0], [0], [1], [0, 0, 1, 1], [], []>} : vector<286x4xf32>, vector<4x128xf32>, vector<286x128xf32> -> vector<286x128xf32>
    %33 = arith.addf %27, %32 : vector<286x128xf32>
    %34 = vector.extract_strided_slice %2 {offsets = [20, 0], sizes = [286, 4], strides = [1, 1]} : vector<324x4xf32> to vector<286x4xf32>
    %c5 = arith.constant 5 : index
    %c0_19 = arith.constant 0 : index
    %c0_20 = arith.constant 0 : index
    %35 = vector.load %arg4[%c5, %c0_19, %c0_20] : memref<9x4x128xbf16, #tpu.memory_space<vmem>>, vector<1x4x128xbf16>
    %36 = vector.shape_cast %35 : vector<1x4x128xbf16> to vector<4x128xbf16>
    %37 = arith.extf %36 : vector<4x128xbf16> to vector<4x128xf32>
    %cst_21 = arith.constant dense<0.000000e+00> : vector<286x128xf32>
    %38 = tpu.matmul %34, %37, %cst_21 {dimension_numbers = #tpu.dot_dimension_numbers<[1], [0], [0], [1], [0, 0, 1, 1], [], []>} : vector<286x4xf32>, vector<4x128xf32>, vector<286x128xf32> -> vector<286x128xf32>
    %39 = arith.addf %33, %38 : vector<286x128xf32>
    %40 = vector.extract_strided_slice %2 {offsets = [36, 0], sizes = [286, 4], strides = [1, 1]} : vector<324x4xf32> to vector<286x4xf32>
    %c6 = arith.constant 6 : index
    %c0_22 = arith.constant 0 : index
    %c0_23 = arith.constant 0 : index
    %41 = vector.load %arg4[%c6, %c0_22, %c0_23] : memref<9x4x128xbf16, #tpu.memory_space<vmem>>, vector<1x4x128xbf16>
    %42 = vector.shape_cast %41 : vector<1x4x128xbf16> to vector<4x128xbf16>
    %43 = arith.extf %42 : vector<4x128xbf16> to vector<4x128xf32>
    %cst_24 = arith.constant dense<0.000000e+00> : vector<286x128xf32>
    %44 = tpu.matmul %40, %43, %cst_24 {dimension_numbers = #tpu.dot_dimension_numbers<[1], [0], [0], [1], [0, 0, 1, 1], [], []>} : vector<286x4xf32>, vector<4x128xf32>, vector<286x128xf32> -> vector<286x128xf32>
    %45 = arith.addf %39, %44 : vector<286x128xf32>
    %46 = vector.extract_strided_slice %2 {offsets = [37, 0], sizes = [286, 4], strides = [1, 1]} : vector<324x4xf32> to vector<286x4xf32>
    %c7 = arith.constant 7 : index
    %c0_25 = arith.constant 0 : index
    %c0_26 = arith.constant 0 : index
    %47 = vector.load %arg4[%c7, %c0_25, %c0_26] : memref<9x4x128xbf16, #tpu.memory_space<vmem>>, vector<1x4x128xbf16>
    %48 = vector.shape_cast %47 : vector<1x4x128xbf16> to vector<4x128xbf16>
    %49 = arith.extf %48 : vector<4x128xbf16> to vector<4x128xf32>
    %cst_27 = arith.constant dense<0.000000e+00> : vector<286x128xf32>
    %50 = tpu.matmul %46, %49, %cst_27 {dimension_numbers = #tpu.dot_dimension_numbers<[1], [0], [0], [1], [0, 0, 1, 1], [], []>} : vector<286x4xf32>, vector<4x128xf32>, vector<286x128xf32> -> vector<286x128xf32>
    %51 = arith.addf %45, %50 : vector<286x128xf32>
    %52 = vector.extract_strided_slice %2 {offsets = [38, 0], sizes = [286, 4], strides = [1, 1]} : vector<324x4xf32> to vector<286x4xf32>
    %c8 = arith.constant 8 : index
    %c0_28 = arith.constant 0 : index
    %c0_29 = arith.constant 0 : index
    %53 = vector.load %arg4[%c8, %c0_28, %c0_29] : memref<9x4x128xbf16, #tpu.memory_space<vmem>>, vector<1x4x128xbf16>
    %54 = vector.shape_cast %53 : vector<1x4x128xbf16> to vector<4x128xbf16>
    %55 = arith.extf %54 : vector<4x128xbf16> to vector<4x128xf32>
    %cst_30 = arith.constant dense<0.000000e+00> : vector<286x128xf32>
    %56 = tpu.matmul %52, %55, %cst_30 {dimension_numbers = #tpu.dot_dimension_numbers<[1], [0], [0], [1], [0, 0, 1, 1], [], []>} : vector<286x4xf32>, vector<4x128xf32>, vector<286x128xf32> -> vector<286x128xf32>
    %57 = arith.addf %51, %56 : vector<286x128xf32>
    %c0_31 = arith.constant 0 : index
    %c0_32 = arith.constant 0 : index
    %58 = vector.load %arg5[%c0_31, %c0_32] : memref<1x128xf32, #tpu.memory_space<vmem>>, vector<1x128xf32>
    %59 = vector.broadcast %58 : vector<1x128xf32> to vector<286x128xf32>
    %60 = arith.addf %57, %59 : vector<286x128xf32>
    %cst_33 = arith.constant 0.000000e+00 : f32
    %61 = vector.broadcast %cst_33 : f32 to vector<286x128xf32>
    %62 = arith.maximumf %60, %61 : vector<286x128xf32>
    %c0_34 = arith.constant 0 : index
    %c0_35 = arith.constant 0 : index
    %63 = vector.load %arg3[%c0_34, %c0_35] : memref<286x1xf32, #tpu.memory_space<vmem>>, vector<286x1xf32>
    %64 = vector.broadcast %63 : vector<286x1xf32> to vector<286x128xf32>
    %65 = arith.mulf %62, %64 : vector<286x128xf32>
    %cst_36 = arith.constant dense<0.000000e+00> : vector<128xf32>
    %66 = vector.multi_reduction <add>, %65, %cst_36 [0] : vector<286x128xf32> to vector<128xf32>
    %67 = vector.shape_cast %66 : vector<128xf32> to vector<1x128xf32>
    %c0_37 = arith.constant 0 : index
    %c0_38 = arith.constant 0 : index
    %68 = vector.load %arg6[%c0_37, %c0_38] : memref<128x128xbf16, #tpu.memory_space<vmem>>, vector<128x128xbf16>
    %69 = arith.extf %68 : vector<128x128xbf16> to vector<128x128xf32>
    %cst_39 = arith.constant dense<0.000000e+00> : vector<1x128xf32>
    %70 = tpu.matmul %67, %69, %cst_39 {dimension_numbers = #tpu.dot_dimension_numbers<[1], [0], [0], [1], [0, 0, 1, 1], [], []>} : vector<1x128xf32>, vector<128x128xf32>, vector<1x128xf32> -> vector<1x128xf32>
    %c0_40 = arith.constant 0 : index
    %c0_41 = arith.constant 0 : index
    %71 = vector.load %arg7[%c0_40, %c0_41] : memref<1x128xf32, #tpu.memory_space<vmem>>, vector<1x128xf32>
    %72 = arith.addf %70, %71 : vector<1x128xf32>
    %cst_42 = arith.constant 0.000000e+00 : f32
    %73 = vector.broadcast %cst_42 : f32 to vector<1x128xf32>
    %74 = arith.maximumf %72, %73 : vector<1x128xf32>
    %cst_43 = arith.constant 0.333333343 : f32
    %75 = vector.broadcast %cst_43 : f32 to vector<1x128xf32>
    %76 = arith.mulf %74, %75 : vector<1x128xf32>
    %c0_i32 = arith.constant 0 : i32
    %77 = arith.cmpi eq, %arg1, %c0_i32 : i32
    %78 = arith.extui %77 : i1 to i32
    %c0_i32_44 = arith.constant 0 : i32
    %79 = arith.cmpi ne, %78, %c0_i32_44 : i32
    scf.if %79 {
      %c0_47 = arith.constant 0 : index
      %c0_48 = arith.constant 0 : index
      %c0_49 = arith.constant 0 : index
      %83 = vector.load %arg13[%c0_47, %c0_48, %c0_49] : memref<1x1x128xf32, #tpu.memory_space<vmem>>, vector<1x1x128xf32>
      %84 = vector.shape_cast %83 : vector<1x1x128xf32> to vector<1x128xf32>
      %85 = vector.shape_cast %76 : vector<1x128xf32> to vector<1x1x128xf32>
      tpu.vector_store %arg13[%c0_47, %c0_48, %c0_49], %85 {strides = array<i32>} : memref<1x1x128xf32, #tpu.memory_space<vmem>>, vector<1x1x128xf32>,
      %c0_50 = arith.constant 0 : index
      %c0_51 = arith.constant 0 : index
      %c0_52 = arith.constant 0 : index
      %86 = vector.load %arg8[%c0_50, %c0_51, %c0_52] : memref<1x3x8xf32, #tpu.memory_space<vmem>>, vector<1x3x8xf32>
      %87 = vector.shape_cast %86 : vector<1x3x8xf32> to vector<3x8xf32>
      %c0_53 = arith.constant 0 : index
      %c0_54 = arith.constant 0 : index
      %88 = vector.load %arg9[%c0_53, %c0_54] : memref<8x128xf32, #tpu.memory_space<vmem>>, vector<8x128xf32>
      %cst_55 = arith.constant dense<0.000000e+00> : vector<3x128xf32>
      %89 = tpu.matmul %87, %88, %cst_55 {dimension_numbers = #tpu.dot_dimension_numbers<[1], [0], [0], [1], [0, 0, 1, 1], [], []>} : vector<3x8xf32>, vector<8x128xf32>, vector<3x128xf32> -> vector<3x128xf32>
      %c0_56 = arith.constant 0 : index
      %c0_57 = arith.constant 0 : index
      %90 = vector.load %arg10[%c0_56, %c0_57] : memref<1x128xf32, #tpu.memory_space<vmem>>, vector<1x128xf32>
      %91 = vector.broadcast %90 : vector<1x128xf32> to vector<3x128xf32>
      %92 = arith.addf %89, %91 : vector<3x128xf32>
      %cst_58 = arith.constant 0.000000e+00 : f32
      %93 = vector.broadcast %cst_58 : f32 to vector<3x128xf32>
      %94 = arith.maximumf %92, %93 : vector<3x128xf32>
      %cst_59 = arith.constant dense<0.000000e+00> : vector<128xf32>
      %95 = vector.multi_reduction <add>, %94, %cst_59 [0] : vector<3x128xf32> to vector<128xf32>
      %96 = vector.shape_cast %95 : vector<128xf32> to vector<1x128xf32>
      %cst_60 = arith.constant 3.000000e+00 : f32
      %97 = vector.broadcast %cst_60 : f32 to vector<1x128xf32>
      %98 = arith.divf %96, %97 : vector<1x128xf32>
      %c0_61 = arith.constant 0 : index
      %c0_62 = arith.constant 0 : index
      %99 = vector.load %arg11[%c0_61, %c0_62] : memref<128x128xf32, #tpu.memory_space<vmem>>, vector<128x128xf32>
      %cst_63 = arith.constant dense<0.000000e+00> : vector<1x128xf32>
      %100 = tpu.matmul %98, %99, %cst_63 {dimension_numbers = #tpu.dot_dimension_numbers<[1], [0], [0], [1], [0, 0, 1, 1], [], []>} : vector<1x128xf32>, vector<128x128xf32>, vector<1x128xf32> -> vector<1x128xf32>
      %c0_64 = arith.constant 0 : index
      %c0_65 = arith.constant 0 : index
      %101 = vector.load %arg12[%c0_64, %c0_65] : memref<1x128xf32, #tpu.memory_space<vmem>>, vector<1x128xf32>
      %102 = arith.addf %100, %101 : vector<1x128xf32>
      %c0_66 = arith.constant 0 : index
      %c0_67 = arith.constant 0 : index
      %c0_68 = arith.constant 0 : index
      %103 = vector.load %arg14[%c0_66, %c0_67, %c0_68] : memref<1x1x128xf32, #tpu.memory_space<vmem>>, vector<1x1x128xf32>
      %104 = vector.shape_cast %103 : vector<1x1x128xf32> to vector<1x128xf32>
      %105 = vector.shape_cast %102 : vector<1x128xf32> to vector<1x1x128xf32>
      tpu.vector_store %arg14[%c0_66, %c0_67, %c0_68], %105 {strides = array<i32>} : memref<1x1x128xf32, #tpu.memory_space<vmem>>, vector<1x1x128xf32>,
    } else {
    }
    %c0_i32_45 = arith.constant 0 : i32
    %80 = arith.cmpi sgt, %arg1, %c0_i32_45 : i32
    %81 = arith.extui %80 : i1 to i32
    %c0_i32_46 = arith.constant 0 : i32
    %82 = arith.cmpi ne, %81, %c0_i32_46 : i32
    scf.if %82 {
      %c0_47 = arith.constant 0 : index
      %c0_48 = arith.constant 0 : index
      %c0_49 = arith.constant 0 : index
      %83 = vector.load %arg13[%c0_47, %c0_48, %c0_49] : memref<1x1x128xf32, #tpu.memory_space<vmem>>, vector<1x1x128xf32>
      %84 = vector.shape_cast %83 : vector<1x1x128xf32> to vector<1x128xf32>
      %85 = arith.addf %84, %76 : vector<1x128xf32>
      %c0_50 = arith.constant 0 : index
      %c0_51 = arith.constant 0 : index
      %c0_52 = arith.constant 0 : index
      %86 = vector.load %arg13[%c0_50, %c0_51, %c0_52] : memref<1x1x128xf32, #tpu.memory_space<vmem>>, vector<1x1x128xf32>
      %87 = vector.shape_cast %86 : vector<1x1x128xf32> to vector<1x128xf32>
      %88 = vector.shape_cast %85 : vector<1x128xf32> to vector<1x1x128xf32>
      tpu.vector_store %arg13[%c0_50, %c0_51, %c0_52], %88 {strides = array<i32>} : memref<1x1x128xf32, #tpu.memory_space<vmem>>, vector<1x1x128xf32>,
    } else {
    }
    return
  }
  func.func @transform_0(%arg0: i32, %arg1: i32) -> (i32, i32, i32, i32) {
    %c0_i32 = arith.constant 0 : i32
    %c0_i32_0 = arith.constant 0 : i32
    %c0_i32_1 = arith.constant 0 : i32
    return %arg0, %arg1, %c0_i32, %c0_i32_0 : i32, i32, i32, i32
  }
  func.func @transform_1(%arg0: i32, %arg1: i32) -> (i32, i32) {
    %c0_i32 = arith.constant 0 : i32
    %c0_i32_0 = arith.constant 0 : i32
    %c0_i32_1 = arith.constant 0 : i32
    return %c0_i32, %c0_i32_0 : i32, i32
  }
  func.func @transform_2(%arg0: i32, %arg1: i32) -> (i32, i32, i32) {
    %c0_i32 = arith.constant 0 : i32
    %c0_i32_0 = arith.constant 0 : i32
    %c0_i32_1 = arith.constant 0 : i32
    %c0_i32_2 = arith.constant 0 : i32
    return %c0_i32, %c0_i32_0, %c0_i32_1 : i32, i32, i32
  }
  func.func @transform_3(%arg0: i32, %arg1: i32) -> (i32, i32) {
    %c0_i32 = arith.constant 0 : i32
    %c0_i32_0 = arith.constant 0 : i32
    %c0_i32_1 = arith.constant 0 : i32
    return %c0_i32, %c0_i32_0 : i32, i32
  }
  func.func @transform_4(%arg0: i32, %arg1: i32) -> (i32, i32) {
    %c0_i32 = arith.constant 0 : i32
    %c0_i32_0 = arith.constant 0 : i32
    %c0_i32_1 = arith.constant 0 : i32
    return %c0_i32, %c0_i32_0 : i32, i32
  }
  func.func @transform_5(%arg0: i32, %arg1: i32) -> (i32, i32) {
    %c0_i32 = arith.constant 0 : i32
    %c0_i32_0 = arith.constant 0 : i32
    %c0_i32_1 = arith.constant 0 : i32
    return %c0_i32, %c0_i32_0 : i32, i32
  }
  func.func @transform_6(%arg0: i32, %arg1: i32) -> (i32, i32, i32) {
    %c0_i32 = arith.constant 0 : i32
    %c0_i32_0 = arith.constant 0 : i32
    %c0_i32_1 = arith.constant 0 : i32
    return %arg0, %c0_i32, %c0_i32_0 : i32, i32, i32
  }
  func.func @transform_7(%arg0: i32, %arg1: i32) -> (i32, i32) {
    %c0_i32 = arith.constant 0 : i32
    %c0_i32_0 = arith.constant 0 : i32
    %c0_i32_1 = arith.constant 0 : i32
    return %c0_i32, %c0_i32_0 : i32, i32
  }
  func.func @transform_8(%arg0: i32, %arg1: i32) -> (i32, i32) {
    %c0_i32 = arith.constant 0 : i32
    %c0_i32_0 = arith.constant 0 : i32
    %c0_i32_1 = arith.constant 0 : i32
    return %c0_i32, %c0_i32_0 : i32, i32
  }
  func.func @transform_9(%arg0: i32, %arg1: i32) -> (i32, i32) {
    %c0_i32 = arith.constant 0 : i32
    %c0_i32_0 = arith.constant 0 : i32
    %c0_i32_1 = arith.constant 0 : i32
    return %c0_i32, %c0_i32_0 : i32, i32
  }
  func.func @transform_10(%arg0: i32, %arg1: i32) -> (i32, i32) {
    %c0_i32 = arith.constant 0 : i32
    %c0_i32_0 = arith.constant 0 : i32
    %c0_i32_1 = arith.constant 0 : i32
    return %c0_i32, %c0_i32_0 : i32, i32
  }
  func.func @transform_11(%arg0: i32, %arg1: i32) -> (i32, i32, i32) {
    %c0_i32 = arith.constant 0 : i32
    %c0_i32_0 = arith.constant 0 : i32
    %c0_i32_1 = arith.constant 0 : i32
    return %arg0, %c0_i32, %c0_i32_0 : i32, i32, i32
  }
  func.func @transform_12(%arg0: i32, %arg1: i32) -> (i32, i32, i32) {
    %c0_i32 = arith.constant 0 : i32
    %c0_i32_0 = arith.constant 0 : i32
    %c0_i32_1 = arith.constant 0 : i32
    return %arg0, %c0_i32, %c0_i32_0 : i32, i32, i32
  }
}

</mosaic_0001>

<llo_original>
// kernel: context_module_forward.1
$region0: #{context_module_forward.1}
  #allocation0 [shape = 'u32[]', space=smem, size = 0x4, offset = 0x4, fixed_abs, tag = 'smem constant byte address 0x4 - core index']
  #allocation1 [shape = 'u32[144,128]{1,0:T(1,128)}', space=vmem, size = 0x12000, scoped, tag = 'internal scratch']
  %s0 = inlined_call_operand.vmem [shape: bf16[2,3,324,4], index: 0, kind: input, shape index: {}]
  %s1 = inlined_call_operand.vmem [shape: f32[286,1], index: 1, kind: input, shape index: {}]
  %s2 = inlined_call_operand.vmem [shape: bf16[9,4,128], index: 2, kind: input, shape index: {}]
  %s3 = inlined_call_operand.vmem [shape: f32[1,128], index: 3, kind: input, shape index: {}]
  %s4 = inlined_call_operand.vmem [shape: bf16[128,128], index: 4, kind: input, shape index: {}]
  %s5 = inlined_call_operand.vmem [shape: f32[1,128], index: 5, kind: input, shape index: {}]
  %s6 = inlined_call_operand.vmem [shape: f32[2,3,8], index: 6, kind: input, shape index: {}]
  %s7 = inlined_call_operand.vmem [shape: f32[8,128], index: 7, kind: input, shape index: {}]
  %s8 = inlined_call_operand.vmem [shape: f32[1,128], index: 8, kind: input, shape index: {}]
  %s9 = inlined_call_operand.vmem [shape: f32[128,128], index: 9, kind: input, shape index: {}]
  %s10 = inlined_call_operand.vmem [shape: f32[1,128], index: 10, kind: input, shape index: {}]
  %s11 = inlined_call_operand.hbm [shape: f32[2,1,128], index: 11, kind: output, shape index: {0}]
  %s12 = inlined_call_operand.hbm [shape: f32[2,1,128], index: 12, kind: output, shape index: {1}]
  %13 = xla_tuple %s11, %s12
  %s14 = sld [smem:[#allocation0]]
  $region93: #{context_module_forward.1} parent=0
    _
  %s16 = ssub.s32 1, %s14
  %s17 = scalar_select 0, %s16, %s14
  $region1: #{context_module_forward.1} parent=0
    #allocation2 [shape = 'u8[1024]{0}', space=vmem, size = 0x400, scoped, tag = 'output window, operand 0']
    #allocation3 [shape = 's32[2]{0}', space=sflag, size = 0x8, scoped, tag = 'scoped memory for context_module_forward.1']
    #allocation4 [shape = 'u8[1024]{0}', space=vmem, size = 0x400, scoped, tag = 'output window, operand 1']
    #allocation5 [shape = 's32[2]{0}', space=sflag, size = 0x8, scoped, tag = 'scoped memory for context_module_forward.1']
    %18 = vsyncpa [#allocation3], 0
    %s19 = scalar_lea.sflag [#allocation3], 1
    %20 = vsyncpa %s19, 0
    %21 = vsyncpa [#allocation5], 0
    %s22 = scalar_lea.sflag [#allocation5], 1
    %23 = vsyncpa %s22, 0
    loop: start=0, step=1, limit=8
    $region2: #{context_module_forward.1} parent=1 // loop_pre_header
      _
    $region3: #{context_module_forward.1} parent=1 // loop_header
      %s25 = sphi 0, %s29
      %p26 = scmp.ge.s32.totalorder %s25, 8
      %s32 = sphi 0, %s44
      %s33 = sphi 0, %s40
      %s34 = sphi 0, %s32
      %s35 = sphi 0, %s33
      %s36 = sphi 0, %s34
      %s37 = sphi 0, %s35
      %s49 = sphi 0, %s51
      %s52 = sphi 0, %s49
      %s53 = sphi 0, %s52
      %s69 = sphi 0, %s53
      %s73 = sphi 0, %s73
      %s75 = sphi 0, %s73
      %s76 = sphi 0, %s75
      %s90 = sphi 0, %s76
      %s94 = sphi 0, %s94
      %s96 = sphi 0, %s94
      %s97 = sphi 0, %s96
      %s111 = sphi 0, %s97
      %s115 = sphi 0, %s115
      %s117 = sphi 0, %s115
      %s118 = sphi 0, %s117
      %s132 = sphi 0, %s118
      %s136 = sphi 0, %s136
      %s138 = sphi 0, %s136
      %s139 = sphi 0, %s138
      %s153 = sphi 0, %s139
      %s157 = sphi 0, %s157
      %s159 = sphi 0, %s157
      %s160 = sphi 0, %s159
      %s174 = sphi 0, %s160
      %s180 = sphi 0, %s182
      %s183 = sphi 0, %s180
      %s184 = sphi 0, %s183
      %s200 = sphi 0, %s184
      %s204 = sphi 0, %s204
      %s206 = sphi 0, %s204
      %s207 = sphi 0, %s206
      %s221 = sphi 0, %s207
      %s225 = sphi 0, %s225
      %s227 = sphi 0, %s225
      %s228 = sphi 0, %s227
      %s242 = sphi 0, %s228
      %s246 = sphi 0, %s246
      %s248 = sphi 0, %s246
      %s249 = sphi 0, %s248
      %s263 = sphi 0, %s249
      %s267 = sphi 0, %s267
      %s269 = sphi 0, %s267
      %s270 = sphi 0, %s269
      %s284 = sphi 0, %s270
      %s290 = sphi 0, %s292
      %s293 = sphi 0, %s290
      %s294 = sphi 0, %s293
      %s310 = sphi 0, %s294
      %s316 = sphi 0, %s318
      %s319 = sphi 0, %s316
      %s320 = sphi 0, %s319
      %s336 = sphi 0, %s320
    $region4: #{context_module_forward.1} parent=1 // loop_header_branch
      %28 = sbr.rel (%p26) target = $region8
    $region5: #{context_module_forward.1} parent=1 // loop_body
      %s30 = ssub.s32 %s25, 1
      %s31 = ssub.s32 %s25, 2
      %s38 = sadd.s32 1, %s33
      %p39 = scmp.ge.s32.totalorder %s38, 3
      %s40 = scalar_select %p39, 0, %s38
      %s41 = sadd.s32 1, %s32
      %s42 = scalar_select %p39, %s41, %s32
      %p43 = scmp.ge.s32.totalorder %s42, 2
      %s44 = scalar_select %p43, 0, %s42
      %s45 = ssub.s32 %s32, %s44
      %s46 = ssub.s32 %s33, %s40
      %s47 = sor.u32 %s45, %s46
      %p48 = scmp.eq.s32.totalorder %s47, 0
      %s50 = sadd.s32 %s49, 1
      %s51 = scalar_select %p48, %s49, %s50
      %p54 = pneg %p48
      %p55 = scmp.eq.s32.totalorder %s25, 5
      %p56 = por %p54, %p55
      %p57 = scmp.ne.s32.totalorder %s49, %s52
      %p58 = scmp.eq.s32.totalorder %s25, 0
      %p59 = por %p57, %p58
      %p60 = scmp.ne.s32.totalorder %s49, %s52
      %p61 = scmp.eq.s32.totalorder %s30, 5
      %p62 = por %p60, %p61
      %p63 = scmp.ne.s32.totalorder %s52, %s53
      %p64 = scmp.eq.s32.totalorder %s30, 0
      %p65 = por %p63, %p64
      %p66 = scmp.ne.s32.totalorder %s52, %s53
      %p67 = scmp.eq.s32.totalorder %s31, 5
      %p68 = por %p66, %p67
      %p70 = scmp.ne.s32.totalorder %s53, %s69
      %p71 = scmp.eq.s32.totalorder %s31, 0
      %p72 = por %p70, %p71
      %s74 = sadd.s32 %s73, 1
      %p77 = scmp.eq.s32.totalorder %s25, 5
      %p78 = scmp.ne.s32.totalorder %s73, %s75
      %p79 = scmp.eq.s32.totalorder %s25, 0
      %p80 = por %p78, %p79
      %p81 = scmp.ne.s32.totalorder %s73, %s75
      %p82 = scmp.eq.s32.totalorder %s30, 5
      %p83 = por %p81, %p82
      %p84 = scmp.ne.s32.totalorder %s75, %s76
      %p85 = scmp.eq.s32.totalorder %s30, 0
      %p86 = por %p84, %p85
      %p87 = scmp.ne.s32.totalorder %s75, %s76
      %p88 = scmp.eq.s32.totalorder %s31, 5
      %p89 = por %p87, %p88
      %p91 = scmp.ne.s32.totalorder %s76, %s90
      %p92 = scmp.eq.s32.totalorder %s31, 0
      %p93 = por %p91, %p92
      %s95 = sadd.s32 %s94, 1
      %p98 = scmp.eq.s32.totalorder %s25, 5
      %p99 = scmp.ne.s32.totalorder %s94, %s96
      %p100 = scmp.eq.s32.totalorder %s25, 0
      %p101 = por %p99, %p100
      %p102 = scmp.ne.s32.totalorder %s94, %s96
      %p103 = scmp.eq.s32.totalorder %s30, 5
      %p104 = por %p102, %p103
      %p105 = scmp.ne.s32.totalorder %s96, %s97
      %p106 = scmp.eq.s32.totalorder %s30, 0
      %p107 = por %p105, %p106
      %p108 = scmp.ne.s32.totalorder %s96, %s97
      %p109 = scmp.eq.s32.totalorder %s31, 5
      %p110 = por %p108, %p109
      %p112 = scmp.ne.s32.totalorder %s97, %s111
      %p113 = scmp.eq.s32.totalorder %s31, 0
      %p114 = por %p112, %p113
      %s116 = sadd.s32 %s115, 1
      %p119 = scmp.eq.s32.totalorder %s25, 5
      %p120 = scmp.ne.s32.totalorder %s115, %s117
      %p121 = scmp.eq.s32.totalorder %s25, 0
      %p122 = por %p120, %p121
      %p123 = scmp.ne.s32.totalorder %s115, %s117
      %p124 = scmp.eq.s32.totalorder %s30, 5
      %p125 = por %p123, %p124
      %p126 = scmp.ne.s32.totalorder %s117, %s118
      %p127 = scmp.eq.s32.totalorder %s30, 0
      %p128 = por %p126, %p127
      %p129 = scmp.ne.s32.totalorder %s117, %s118
      %p130 = scmp.eq.s32.totalorder %s31, 5
      %p131 = por %p129, %p130
      %p133 = scmp.ne.s32.totalorder %s118, %s132
      %p134 = scmp.eq.s32.totalorder %s31, 0
      %p135 = por %p133, %p134
      %s137 = sadd.s32 %s136, 1
      %p140 = scmp.eq.s32.totalorder %s25, 5
      %p141 = scmp.ne.s32.totalorder %s136, %s138
      %p142 = scmp.eq.s32.totalorder %s25, 0
      %p143 = por %p141, %p142
      %p144 = scmp.ne.s32.totalorder %s136, %s138
      %p145 = scmp.eq.s32.totalorder %s30, 5
      %p146 = por %p144, %p145
      %p147 = scmp.ne.s32.totalorder %s138, %s139
      %p148 = scmp.eq.s32.totalorder %s30, 0
      %p149 = por %p147, %p148
      %p150 = scmp.ne.s32.totalorder %s138, %s139
      %p151 = scmp.eq.s32.totalorder %s31, 5
      %p152 = por %p150, %p151
      %p154 = scmp.ne.s32.totalorder %s139, %s153
      %p155 = scmp.eq.s32.totalorder %s31, 0
      %p156 = por %p154, %p155
      %s158 = sadd.s32 %s157, 1
      %p161 = scmp.eq.s32.totalorder %s25, 5
      %p162 = scmp.ne.s32.totalorder %s157, %s159
      %p163 = scmp.eq.s32.totalorder %s25, 0
      %p164 = por %p162, %p163
      %p165 = scmp.ne.s32.totalorder %s157, %s159
      %p166 = scmp.eq.s32.totalorder %s30, 5
      %p167 = por %p165, %p166
      %p168 = scmp.ne.s32.totalorder %s159, %s160
      %p169 = scmp.eq.s32.totalorder %s30, 0
      %p170 = por %p168, %p169
      %p171 = scmp.ne.s32.totalorder %s159, %s160
      %p172 = scmp.eq.s32.totalorder %s31, 5
      %p173 = por %p171, %p172
      %p175 = scmp.ne.s32.totalorder %s160, %s174
      %p176 = scmp.eq.s32.totalorder %s31, 0
      %p177 = por %p175, %p176
      %s178 = ssub.s32 %s32, %s44
      %p179 = scmp.eq.s32.totalorder %s178, 0
      %s181 = sadd.s32 %s180, 1
      %s182 = scalar_select %p179, %s180, %s181
      %p185 = pneg %p179
      %p186 = scmp.eq.s32.totalorder %s25, 5
      %p187 = por %p185, %p186
      %p188 = scmp.ne.s32.totalorder %s180, %s183
      %p189 = scmp.eq.s32.totalorder %s25, 0
      %p190 = por %p188, %p189
      %p191 = scmp.ne.s32.totalorder %s180, %s183
      %p192 = scmp.eq.s32.totalorder %s30, 5
      %p193 = por %p191, %p192
      %p194 = scmp.ne.s32.totalorder %s183, %s184
      %p195 = scmp.eq.s32.totalorder %s30, 0
      %p196 = por %p194, %p195
      %p197 = scmp.ne.s32.totalorder %s183, %s184
      %p198 = scmp.eq.s32.totalorder %s31, 5
      %p199 = por %p197, %p198
      %p201 = scmp.ne.s32.totalorder %s184, %s200
      %p202 = scmp.eq.s32.totalorder %s31, 0
      %p203 = por %p201, %p202
      %s205 = sadd.s32 %s204, 1
      %p208 = scmp.eq.s32.totalorder %s25, 5
      %p209 = scmp.ne.s32.totalorder %s204, %s206
      %p210 = scmp.eq.s32.totalorder %s25, 0
      %p211 = por %p209, %p210
      %p212 = scmp.ne.s32.totalorder %s204, %s206
      %p213 = scmp.eq.s32.totalorder %s30, 5
      %p214 = por %p212, %p213
      %p215 = scmp.ne.s32.totalorder %s206, %s207
      %p216 = scmp.eq.s32.totalorder %s30, 0
      %p217 = por %p215, %p216
      %p218 = scmp.ne.s32.totalorder %s206, %s207
      %p219 = scmp.eq.s32.totalorder %s31, 5
      %p220 = por %p218, %p219
      %p222 = scmp.ne.s32.totalorder %s207, %s221
      %p223 = scmp.eq.s32.totalorder %s31, 0
      %p224 = por %p222, %p223
      %s226 = sadd.s32 %s225, 1
      %p229 = scmp.eq.s32.totalorder %s25, 5
      %p230 = scmp.ne.s32.totalorder %s225, %s227
      %p231 = scmp.eq.s32.totalorder %s25, 0
      %p232 = por %p230, %p231
      %p233 = scmp.ne.s32.totalorder %s225, %s227
      %p234 = scmp.eq.s32.totalorder %s30, 5
      %p235 = por %p233, %p234
      %p236 = scmp.ne.s32.totalorder %s227, %s228
      %p237 = scmp.eq.s32.totalorder %s30, 0
      %p238 = por %p236, %p237
      %p239 = scmp.ne.s32.totalorder %s227, %s228
      %p240 = scmp.eq.s32.totalorder %s31, 5
      %p241 = por %p239, %p240
      %p243 = scmp.ne.s32.totalorder %s228, %s242
      %p244 = scmp.eq.s32.totalorder %s31, 0
      %p245 = por %p243, %p244
      %s247 = sadd.s32 %s246, 1
      %p250 = scmp.eq.s32.totalorder %s25, 5
      %p251 = scmp.ne.s32.totalorder %s246, %s248
      %p252 = scmp.eq.s32.totalorder %s25, 0
      %p253 = por %p251, %p252
      %p254 = scmp.ne.s32.totalorder %s246, %s248
      %p255 = scmp.eq.s32.totalorder %s30, 5
      %p256 = por %p254, %p255
      %p257 = scmp.ne.s32.totalorder %s248, %s249
      %p258 = scmp.eq.s32.totalorder %s30, 0
      %p259 = por %p257, %p258
      %p260 = scmp.ne.s32.totalorder %s248, %s249
      %p261 = scmp.eq.s32.totalorder %s31, 5
      %p262 = por %p260, %p261
      %p264 = scmp.ne.s32.totalorder %s249, %s263
      %p265 = scmp.eq.s32.totalorder %s31, 0
      %p266 = por %p264, %p265
      %s268 = sadd.s32 %s267, 1
      %p271 = scmp.eq.s32.totalorder %s25, 5
      %p272 = scmp.ne.s32.totalorder %s267, %s269
      %p273 = scmp.eq.s32.totalorder %s25, 0
      %p274 = por %p272, %p273
      %p275 = scmp.ne.s32.totalorder %s267, %s269
      %p276 = scmp.eq.s32.totalorder %s30, 5
      %p277 = por %p275, %p276
      %p278 = scmp.ne.s32.totalorder %s269, %s270
      %p279 = scmp.eq.s32.totalorder %s30, 0
      %p280 = por %p278, %p279
      %p281 = scmp.ne.s32.totalorder %s269, %s270
      %p282 = scmp.eq.s32.totalorder %s31, 5
      %p283 = por %p281, %p282
      %p285 = scmp.ne.s32.totalorder %s270, %s284
      %p286 = scmp.eq.s32.totalorder %s31, 0
      %p287 = por %p285, %p286
      %s288 = ssub.s32 %s32, %s44
      %p289 = scmp.eq.s32.totalorder %s288, 0
      %s291 = sadd.s32 %s290, 1
      %s292 = scalar_select %p289, %s290, %s291
      %p295 = pneg %p289
      %p296 = scmp.eq.s32.totalorder %s25, 5
      %p297 = por %p295, %p296
      %p298 = scmp.ne.s32.totalorder %s290, %s293
      %p299 = scmp.eq.s32.totalorder %s25, 0
      %p300 = por %p298, %p299
      %p301 = scmp.ne.s32.totalorder %s290, %s293
      %p302 = scmp.eq.s32.totalorder %s30, 5
      %p303 = por %p301, %p302
      %p304 = scmp.ne.s32.totalorder %s293, %s294
      %p305 = scmp.eq.s32.totalorder %s30, 0
      %p306 = por %p304, %p305
      %p307 = scmp.ne.s32.totalorder %s293, %s294
      %p308 = scmp.eq.s32.totalorder %s31, 5
      %p309 = por %p307, %p308
      %p311 = scmp.ne.s32.totalorder %s294, %s310
      %p312 = scmp.eq.s32.totalorder %s31, 0
      %p313 = por %p311, %p312
      %s314 = ssub.s32 %s32, %s44
      %p315 = scmp.eq.s32.totalorder %s314, 0
      %s317 = sadd.s32 %s316, 1
      %s318 = scalar_select %p315, %s316, %s317
      %p321 = pneg %p315
      %p322 = scmp.eq.s32.totalorder %s25, 5
      %p323 = por %p321, %p322
      %p324 = scmp.ne.s32.totalorder %s316, %s319
      %p325 = scmp.eq.s32.totalorder %s25, 0
      %p326 = por %p324, %p325
      %p327 = scmp.ne.s32.totalorder %s316, %s319
      %p328 = scmp.eq.s32.totalorder %s30, 5
      %p329 = por %p327, %p328
      %p330 = scmp.ne.s32.totalorder %s319, %s320
      %p331 = scmp.eq.s32.totalorder %s30, 0
      %p332 = por %p330, %p331
      %p333 = scmp.ne.s32.totalorder %s319, %s320
      %p334 = scmp.eq.s32.totalorder %s31, 5
      %p335 = por %p333, %p334
      %p337 = scmp.ne.s32.totalorder %s320, %s336
      %p338 = scmp.eq.s32.totalorder %s31, 0
      %p339 = por %p337, %p338
      %p340 = scmp.le.s32.totalorder 1, %s25
      %p341 = scmp.lt.s32.totalorder %s25, 7
      %p342 = pnand %p340, %p341
      %p343 = pneg %p342
      // Predicated region
      $region9: #{context_module_forward.1} parent=5 // pred_check
        _
      $region10: #{context_module_forward.1} parent=5 // pred_check_branch
        %345 = sbr.rel (%p342) target = $region12
      $region11: #{context_module_forward.1} parent=5 // pred_region
        %s346 = ssub.s32 %s25, 1
        // Predicated region
        $region13: #{context_module_forward.1} parent=11 // pred_check
          %p347 = pneg %p86
        $region14: #{context_module_forward.1} parent=11 // pred_check_branch
          %349 = sbr.rel (%p347) target = $region16
        $region15: #{context_module_forward.1} parent=11 // pred_region
          _
        $region16: #{context_module_forward.1} parent=11 // pred_fallthru
          _
        // Predicated region
        $region17: #{context_module_forward.1} parent=11 // pred_check
          %p350 = pneg %p107
        $region18: #{context_module_forward.1} parent=11 // pred_check_branch
          %352 = sbr.rel (%p350) target = $region20
        $region19: #{context_module_forward.1} parent=11 // pred_region
          _
        $region20: #{context_module_forward.1} parent=11 // pred_fallthru
          _
        // Predicated region
        $region21: #{context_module_forward.1} parent=11 // pred_check
          %p353 = pneg %p128
        $region22: #{context_module_forward.1} parent=11 // pred_check_branch
          %355 = sbr.rel (%p353) target = $region24
        $region23: #{context_module_forward.1} parent=11 // pred_region
          _
        $region24: #{context_module_forward.1} parent=11 // pred_fallthru
          _
        // Predicated region
        $region25: #{context_module_forward.1} parent=11 // pred_check
          %p356 = pneg %p149
        $region26: #{context_module_forward.1} parent=11 // pred_check_branch
          %358 = sbr.rel (%p356) target = $region28
        $region27: #{context_module_forward.1} parent=11 // pred_region
          _
        $region28: #{context_module_forward.1} parent=11 // pred_fallthru
          _
        // Predicated region
        $region29: #{context_module_forward.1} parent=11 // pred_check
          %p359 = pneg %p170
        $region30: #{context_module_forward.1} parent=11 // pred_check_branch
          %361 = sbr.rel (%p359) target = $region32
        $region31: #{context_module_forward.1} parent=11 // pred_region
          _
        $region32: #{context_module_forward.1} parent=11 // pred_fallthru
          _
        // Predicated region
        $region33: #{context_module_forward.1} parent=11 // pred_check
          %p362 = pneg %p217
        $region34: #{context_module_forward.1} parent=11 // pred_check_branch
          %364 = sbr.rel (%p362) target = $region36
        $region35: #{context_module_forward.1} parent=11 // pred_region
          _
        $region36: #{context_module_forward.1} parent=11 // pred_fallthru
          _
        // Predicated region
        $region37: #{context_module_forward.1} parent=11 // pred_check
          %p365 = pneg %p238
        $region38: #{context_module_forward.1} parent=11 // pred_check_branch
          %367 = sbr.rel (%p365) target = $region40
        $region39: #{context_module_forward.1} parent=11 // pred_region
          _
        $region40: #{context_module_forward.1} parent=11 // pred_fallthru
          _
        // Predicated region
        $region41: #{context_module_forward.1} parent=11 // pred_check
          %p368 = pneg %p259
        $region42: #{context_module_forward.1} parent=11 // pred_check_branch
          %370 = sbr.rel (%p368) target = $region44
        $region43: #{context_module_forward.1} parent=11 // pred_region
          _
        $region44: #{context_module_forward.1} parent=11 // pred_fallthru
          _
        // Predicated region
        $region45: #{context_module_forward.1} parent=11 // pred_check
          %p371 = pneg %p280
        $region46: #{context_module_forward.1} parent=11 // pred_check_branch
          %373 = sbr.rel (%p371) target = $region48
        $region47: #{context_module_forward.1} parent=11 // pred_region
          _
        $region48: #{context_module_forward.1} parent=11 // pred_fallthru
          _
      $region12: #{context_module_forward.1} parent=5 // pred_fallthru
        _
      %p374 = scmp.lt.s32.totalorder %s25, 6
      // Predicated region
      $region49: #{context_module_forward.1} parent=5 // pred_check
        %p375 = pneg %p374
      $region50: #{context_module_forward.1} parent=5 // pred_check_branch
        %377 = sbr.rel (%p375) target = $region52
      $region51: #{context_module_forward.1} parent=5 // pred_region
        // Predicated region
        $region53: #{context_module_forward.1} parent=51 // pred_check
          %p378 = pneg %p59
        $region54: #{context_module_forward.1} parent=51 // pred_check_branch
          %380 = sbr.rel (%p378) target = $region56
        $region55: #{context_module_forward.1} parent=51 // pred_region
          %p381 = scmp.lt.s32.totalorder %s32, 1
          %s382 = scalar_select %p381, %s32, 1
          %p383 = scmp.lt.s32.totalorder %s33, 2
          %s384 = scalar_select %p383, %s33, 2
          %s385 = smul.addr %s384, 41
          %s386 = smul.addr %s382, 123
          %s387 = sadd.s32 %s385, %s386
          %s388 = smul.addr %s387, 4
          %s389 = scalar_lea.vmem %s0, %s388
        $region56: #{context_module_forward.1} parent=51 // pred_fallthru
          _
        // Predicated region
        $region57: #{context_module_forward.1} parent=51 // pred_check
          %p390 = pneg %p190
        $region58: #{context_module_forward.1} parent=51 // pred_check_branch
          %392 = sbr.rel (%p390) target = $region60
        $region59: #{context_module_forward.1} parent=51 // pred_region
          %p393 = scmp.lt.s32.totalorder %s32, 1
          %s394 = scalar_select %p393, %s32, 1
          %s395 = smul.addr %s394, 4
          %s396 = scalar_lea.vmem %s6, %s395
        $region60: #{context_module_forward.1} parent=51 // pred_fallthru
          _
      $region52: #{context_module_forward.1} parent=5 // pred_fallthru
        _
      %p397 = scmp.le.s32.totalorder 1, %s25
      %p398 = scmp.lt.s32.totalorder %s25, 7
      %p399 = pnand %p397, %p398
      %p400 = pneg %p399
      // Predicated region
      $region61: #{context_module_forward.1} parent=5 // pred_check
        _
      $region62: #{context_module_forward.1} parent=5 // pred_check_branch
        %402 = sbr.rel (%p399) target = $region64
      $region63: #{context_module_forward.1} parent=5 // pred_region
        %s403 = ssub.s32 %s25, 1
        %p404 = scmp.lt.s32.totalorder %s34, 1
        %s405 = scalar_select %p404, %s34, 1
        %p406 = scmp.lt.s32.totalorder %s35, 2
        %s407 = scalar_select %p406, %s35, 2
        %s408 = smul.addr %s407, 41
        %s409 = smul.addr %s405, 123
        %s410 = sadd.s32 %s408, %s409
        %s411 = smul.addr %s410, 4
        %s412 = scalar_lea.vmem %s0, %s411
        %p413 = pneg %p65
        %p414 = pneg %p62
        %p415 = pneg %p86
        %p416 = pneg %p83
        %p417 = pneg %p107
        %p418 = pneg %p104
        %p419 = pneg %p128
        %p420 = pneg %p125
        %p421 = pneg %p149
        %p422 = pneg %p146
        %p423 = pneg %p170
        %p424 = pneg %p167
        %p425 = scmp.lt.s32.totalorder %s34, 1
        %s426 = scalar_select %p425, %s34, 1
        %s427 = smul.addr %s426, 4
        %s428 = scalar_lea.vmem %s6, %s427
        %p429 = pneg %p196
        %p430 = pneg %p193
        %p431 = pneg %p217
        %p432 = pneg %p214
        %p433 = pneg %p238
        %p434 = pneg %p235
        %p435 = pneg %p259
        %p436 = pneg %p256
        %p437 = pneg %p280
        %p438 = pneg %p277
        %p439 = pneg %p306
        %p440 = pneg %p303
        %s441 = sand.u32 %s293, 1
        %s442 = scalar_lea.sflag [#allocation3], %s441
        %s443 = sand.u32 %s293, 1
        %s444 = scalar_lea.vmem [#allocation2], %s443
        %p445 = pneg %p332
        %p446 = pneg %p329
        %s447 = sand.u32 %s319, 1
        %s448 = scalar_lea.sflag [#allocation5], %s447
        %s449 = sand.u32 %s319, 1
        %s450 = scalar_lea.vmem [#allocation4], %s449
        %p451 = scmp.lt.s32.totalorder %s34, 1
        %s452 = scalar_select %p451, %s34, 1
        %p453 = scmp.lt.s32.totalorder %s35, 2
        %s454 = scalar_select %p453, %s35, 2
        %s455 = smul.addr %s454, 41
        %s456 = smul.addr %s452, 123
        %s457 = sadd.s32 %s455, %s456
        %s458 = smul.addr %s457, 4
        %s459 = scalar_lea.vmem %s0, %s458
        %p460 = scmp.lt.s32.totalorder %s34, 1
        %s461 = scalar_select %p460, %s34, 1
        %s462 = smul.addr %s461, 4
        %s463 = scalar_lea.vmem %s6, %s462
        %v464 = vld [vmem:[%s459] sm:$0xf]
        %v465 = vld [vmem:[%s459 + $0x4] sm:$0xf]
        %v466 = vld [vmem:[%s459 + $0x8] sm:$0xf]
        %v467 = vld [vmem:[%s459 + $0xc] sm:$0xf]
        %v468 = vld [vmem:[%s459 + $0x10] sm:$0xf]
        %v469 = vld [vmem:[%s459 + $0x14] sm:$0xf]
        %v470 = vld [vmem:[%s459 + $0x18] sm:$0xf]
        %v471 = vld [vmem:[%s459 + $0x1c] sm:$0xf]
        %v472 = vld [vmem:[%s459 + $0x20] sm:$0xf]
        %v473 = vld [vmem:[%s459 + $0x24] sm:$0xf]
        %v474 = vld [vmem:[%s459 + $0x28] sm:$0xf]
        %v475 = vld [vmem:[%s459 + $0x2c] sm:$0xf]
        %v476 = vld [vmem:[%s459 + $0x30] sm:$0xf]
        %v477 = vld [vmem:[%s459 + $0x34] sm:$0xf]
        %v478 = vld [vmem:[%s459 + $0x38] sm:$0xf]
        %v479 = vld [vmem:[%s459 + $0x3c] sm:$0xf]
        %v480 = vld [vmem:[%s459 + $0x40] sm:$0xf]
        %v481 = vld [vmem:[%s459 + $0x44] sm:$0xf]
        %v482 = vld [vmem:[%s459 + $0x48] sm:$0xf]
        %v483 = vld [vmem:[%s459 + $0x4c] sm:$0xf]
        %v484 = vld [vmem:[%s459 + $0x50] sm:$0xf]
        %v485 = vld [vmem:[%s459 + $0x54] sm:$0xf]
        %v486 = vld [vmem:[%s459 + $0x58] sm:$0xf]
        %v487 = vld [vmem:[%s459 + $0x5c] sm:$0xf]
        %v488 = vld [vmem:[%s459 + $0x60] sm:$0xf]
        %v489 = vld [vmem:[%s459 + $0x64] sm:$0xf]
        %v490 = vld [vmem:[%s459 + $0x68] sm:$0xf]
        %v491 = vld [vmem:[%s459 + $0x6c] sm:$0xf]
        %v492 = vld [vmem:[%s459 + $0x70] sm:$0xf]
        %v493 = vld [vmem:[%s459 + $0x74] sm:$0xf]
        %v494 = vld [vmem:[%s459 + $0x78] sm:$0xf]
        %v495 = vld [vmem:[%s459 + $0x7c] sm:$0xf]
        %v496 = vld [vmem:[%s459 + $0x80] sm:$0xf]
        %v497 = vld [vmem:[%s459 + $0x84] sm:$0xf]
        %v498 = vld [vmem:[%s459 + $0x88] sm:$0xf]
        %v499 = vld [vmem:[%s459 + $0x8c] sm:$0xf]
        %v500 = vld [vmem:[%s459 + $0x90] sm:$0xf]
        %v501 = vld [vmem:[%s459 + $0x94] sm:$0xf]
        %v502 = vld [vmem:[%s459 + $0x98] sm:$0xf]
        %v503 = vld [vmem:[%s459 + $0x9c] sm:$0xf]
        %v504 = vld [vmem:[%s459 + $0xa0] sm:$0x3]
        %v505 = vunpack.c.l.bf16 %v464
        %v506 = vunpack.c.l.bf16 %v465
        %v507 = vunpack.c.l.bf16 %v466
        %v508 = vunpack.c.l.bf16 %v467
        %v509 = vunpack.c.l.bf16 %v468
        %v510 = vunpack.c.l.bf16 %v469
        %v511 = vunpack.c.l.bf16 %v470
        %v512 = vunpack.c.l.bf16 %v471
        %v513 = vunpack.c.l.bf16 %v472
        %v514 = vunpack.c.l.bf16 %v473
        %v515 = vunpack.c.l.bf16 %v474
        %v516 = vunpack.c.l.bf16 %v475
        %v517 = vunpack.c.l.bf16 %v476
        %v518 = vunpack.c.l.bf16 %v477
        %v519 = vunpack.c.l.bf16 %v478
        %v520 = vunpack.c.l.bf16 %v479
        %v521 = vunpack.c.l.bf16 %v480
        %v522 = vunpack.c.l.bf16 %v481
        %v523 = vunpack.c.l.bf16 %v482
        %v524 = vunpack.c.l.bf16 %v483
        %v525 = vunpack.c.l.bf16 %v484
        %v526 = vunpack.c.l.bf16 %v485
        %v527 = vunpack.c.l.bf16 %v486
        %v528 = vunpack.c.l.bf16 %v487
        %v529 = vunpack.c.l.bf16 %v488
        %v530 = vunpack.c.l.bf16 %v489
        %v531 = vunpack.c.l.bf16 %v490
        %v532 = vunpack.c.l.bf16 %v491
        %v533 = vunpack.c.l.bf16 %v492
        %v534 = vunpack.c.l.bf16 %v493
        %v535 = vunpack.c.l.bf16 %v494
        %v536 = vunpack.c.l.bf16 %v495
        %v537 = vunpack.c.l.bf16 %v496
        %v538 = vunpack.c.l.bf16 %v497
        %v539 = vunpack.c.l.bf16 %v498
        %v540 = vunpack.c.l.bf16 %v499
        %v541 = vunpack.c.l.bf16 %v500
        %v542 = vunpack.c.l.bf16 %v501
        %v543 = vunpack.c.l.bf16 %v502
        %v544 = vunpack.c.l.bf16 %v503
        %v545 = vunpack.c.l.bf16 %v504
        %v546 = vld [vmem:[%s2] sm:$0x3]
        %v547 = vunpack.c.l.bf16 %v546
        %s548 = scalar_lea.vmem %s2, 2
        %v549 = vld [vmem:[%s548] sm:$0x3]
        %v550 = vunpack.c.l.bf16 %v549
        %vm587 = vcmask 1046528
        %v588 = vrot.slane %v505, 1
        %v589 = vrot.slane %v506, 1
        %v590 = vsel %vm587, %v588, %v589
        %v591 = vrot.slane %v507, 1
        %v592 = vsel %vm587, %v589, %v591
        %v593 = vrot.slane %v508, 1
        %v594 = vsel %vm587, %v591, %v593
        %v595 = vrot.slane %v509, 1
        %v596 = vsel %vm587, %v593, %v595
        %v597 = vrot.slane %v510, 1
        %v598 = vsel %vm587, %v595, %v597
        %v599 = vrot.slane %v511, 1
        %v600 = vsel %vm587, %v597, %v599
        %v601 = vrot.slane %v512, 1
        %v602 = vsel %vm587, %v599, %v601
        %v603 = vrot.slane %v513, 1
        %v604 = vsel %vm587, %v601, %v603
        %v605 = vrot.slane %v514, 1
        %v606 = vsel %vm587, %v603, %v605
        %v607 = vrot.slane %v515, 1
        %v608 = vsel %vm587, %v605, %v607
        %v609 = vrot.slane %v516, 1
        %v610 = vsel %vm587, %v607, %v609
        %v611 = vrot.slane %v517, 1
        %v612 = vsel %vm587, %v609, %v611
        %v613 = vrot.slane %v518, 1
        %v614 = vsel %vm587, %v611, %v613
        %v615 = vrot.slane %v519, 1
        %v616 = vsel %vm587, %v613, %v615
        %v617 = vrot.slane %v520, 1
        %v618 = vsel %vm587, %v615, %v617
        %v619 = vrot.slane %v521, 1
        %v620 = vsel %vm587, %v617, %v619
        %v621 = vrot.slane %v522, 1
        %v622 = vsel %vm587, %v619, %v621
        %v623 = vrot.slane %v523, 1
        %v624 = vsel %vm587, %v621, %v623
        %v625 = vrot.slane %v524, 1
        %v626 = vsel %vm587, %v623, %v625
        %v627 = vrot.slane %v525, 1
        %v628 = vsel %vm587, %v625, %v627
        %v629 = vrot.slane %v526, 1
        %v630 = vsel %vm587, %v627, %v629
        %v631 = vrot.slane %v527, 1
        %v632 = vsel %vm587, %v629, %v631
        %v633 = vrot.slane %v528, 1
        %v634 = vsel %vm587, %v631, %v633
        %v635 = vrot.slane %v529, 1
        %v636 = vsel %vm587, %v633, %v635
        %v637 = vrot.slane %v530, 1
        %v638 = vsel %vm587, %v635, %v637
        %v639 = vrot.slane %v531, 1
        %v640 = vsel %vm587, %v637, %v639
        %v641 = vrot.slane %v532, 1
        %v642 = vsel %vm587, %v639, %v641
        %v643 = vrot.slane %v533, 1
        %v644 = vsel %vm587, %v641, %v643
        %v645 = vrot.slane %v534, 1
        %v646 = vsel %vm587, %v643, %v645
        %v647 = vrot.slane %v535, 1
        %v648 = vsel %vm587, %v645, %v647
        %v649 = vrot.slane %v536, 1
        %v650 = vsel %vm587, %v647, %v649
        %v651 = vrot.slane %v537, 1
        %v652 = vsel %vm587, %v649, %v651
        %v653 = vrot.slane %v538, 1
        %v654 = vsel %vm587, %v651, %v653
        %v655 = vrot.slane %v539, 1
        %v656 = vsel %vm587, %v653, %v655
        %v657 = vrot.slane %v540, 1
        %v658 = vsel %vm587, %v655, %v657
        %vm659 = vcmask 31744
        %v660 = vsel %vm659, %v590, 0
        %v662 = vsel %vm659, %v592, 0
        %v664 = vsel %vm659, %v594, 0
        %v666 = vsel %vm659, %v596, 0
        %v668 = vsel %vm659, %v598, 0
        %v670 = vsel %vm659, %v600, 0
        %v672 = vsel %vm659, %v602, 0
        %v674 = vsel %vm659, %v604, 0
        %v676 = vsel %vm659, %v606, 0
        %v678 = vsel %vm659, %v608, 0
        %v680 = vsel %vm659, %v610, 0
        %v682 = vsel %vm659, %v612, 0
        %v684 = vsel %vm659, %v614, 0
        %v686 = vsel %vm659, %v616, 0
        %v688 = vsel %vm659, %v618, 0
        %v690 = vsel %vm659, %v620, 0
        %v692 = vsel %vm659, %v622, 0
        %v694 = vsel %vm659, %v624, 0
        %v696 = vsel %vm659, %v626, 0
        %v698 = vsel %vm659, %v628, 0
        %v700 = vsel %vm659, %v630, 0
        %v702 = vsel %vm659, %v632, 0
        %v704 = vsel %vm659, %v634, 0
        %v706 = vsel %vm659, %v636, 0
        %v708 = vsel %vm659, %v638, 0
        %v710 = vsel %vm659, %v640, 0
        %v712 = vsel %vm659, %v642, 0
        %v714 = vsel %vm659, %v644, 0
        %v716 = vsel %vm659, %v646, 0
        %v718 = vsel %vm659, %v648, 0
        %v720 = vsel %vm659, %v650, 0
        %v722 = vsel %vm659, %v652, 0
        %v724 = vsel %vm659, %v654, 0
        %v726 = vsel %vm659, %v656, 0
        %v728 = vsel %vm659, %v658, 0
        %v730 = vsel %vm659, %v657, 0
        %vm732 = vcmask 1043456
        %v734 = vsel %vm732, %v550, 0
        %736 = vmatprep.subr.mxu0 0.0
        %737 = vmatpush1.msra.mxu0 %v734
        %738 = vmatprep.subr.mxu0 0.0
        %739 = vmatpush1.msra.mxu0 0.0
        %740 = vmatprep.subr.mxu0 0.0
        %741 = vmatpush1.msra.mxu0 0.0
        %742 = vmatprep.subr.mxu0 0.0
        %743 = vmatpush1.msra.mxu0 0.0
        %744 = vmatprep.subr.mxu0 0.0
        %745 = vmatpush1.msra.mxu0 0.0
        %746 = vmatprep.subr.mxu0 0.0
        %747 = vmatpush1.msra.mxu0 0.0
        %748 = vmatprep.subr.mxu0 0.0
        %749 = vmatpush1.msra.mxu0 0.0
        %750 = vmatprep.subr.mxu0 0.0
        %751 = vmatpush1.msra.mxu0 0.0
        %752 = vmatprep.subr.mxu0 0.0
        %753 = vmatpush1.msra.mxu0 0.0
        %754 = vmatprep.subr.mxu0 0.0
        %755 = vmatpush1.msra.mxu0 0.0
        %756 = vmatprep.subr.mxu0 0.0
        %757 = vmatpush1.msra.mxu0 0.0
        %758 = vmatprep.subr.mxu0 0.0
        %759 = vmatpush1.msra.mxu0 0.0
        %760 = vmatprep.subr.mxu0 0.0
        %761 = vmatpush1.msra.mxu0 0.0
        %762 = vmatprep.subr.mxu0 0.0
        %763 = vmatpush1.msra.mxu0 0.0
        %764 = vmatprep.subr.mxu0 0.0
        %765 = vmatpush1.msra.mxu0 0.0
        %766 = vmatprep.subr.mxu0 0.0
        %767 = vmatpush1.msra.mxu0 0.0
        %768 = vmatprep.subr.mxu0 0.0
        %769 = vmatpush1.msra.mxu0 0.0
        %770 = vmatprep.subr.mxu0 0.0
        %771 = vmatpush1.msra.mxu0 0.0
        %772 = vmatprep.subr.mxu0 0.0
        %773 = vmatpush1.msra.mxu0 0.0
        %774 = vmatprep.subr.mxu0 0.0
        %775 = vmatpush1.msra.mxu0 0.0
        %776 = vmatprep.subr.mxu0 0.0
        %777 = vmatpush1.msra.mxu0 0.0
        %778 = vmatprep.subr.mxu0 0.0
        %779 = vmatpush1.msra.mxu0 0.0
        %780 = vmatprep.subr.mxu0 0.0
        %781 = vmatpush1.msra.mxu0 0.0
        %782 = vmatprep.subr.mxu0 0.0
        %783 = vmatpush1.msra.mxu0 0.0
        %784 = vmatprep.subr.mxu0 0.0
        %785 = vmatpush1.msra.mxu0 0.0
        %786 = vmatprep.subr.mxu0 0.0
        %787 = vmatpush1.msra.mxu0 0.0
        %788 = vmatprep.subr.mxu0 0.0
        %789 = vmatpush1.msra.mxu0 0.0
        %790 = vmatprep.subr.mxu0 0.0
        %791 = vmatpush1.msra.mxu0 0.0
        %792 = vmatprep.subr.mxu0 0.0
        %793 = vmatpush1.msra.mxu0 0.0
        %794 = vmatprep.subr.mxu0 0.0
        %795 = vmatpush1.msra.mxu0 0.0
        %796 = vmatprep.subr.mxu0 0.0
        %797 = vmatpush1.msra.mxu0 0.0
        %798 = vmatprep.subr.mxu0 0.0
        %799 = vmatpush1.msra.mxu0 0.0
        %800 = vmatprep.mubr.f32.mxu0 0.0
        %801 = vmatmul.mubr.f32.gmra.mrb[0].mxu0 %v660
        %v802 = vpop.f32.mrb[0].mxu0
        %v803 = vadd.f32 0.0, %v802
        %v804 = vpop.f32.mrb[0].mxu0
        %805 = vmatprep.mubr.f32.mxu0 0.0
        %806 = vmatmul.mubr.f32.gmra.mrb[0].mxu0 %v662
        %v807 = vpop.f32.mrb[0].mxu0
        %v808 = vadd.f32 0.0, %v807
        %v809 = vpop.f32.mrb[0].mxu0
        %810 = vmatprep.mubr.f32.mxu0 0.0
        %811 = vmatmul.mubr.f32.gmra.mrb[0].mxu0 %v664
        %v812 = vpop.f32.mrb[0].mxu0
        %v813 = vadd.f32 0.0, %v812
        %v814 = vpop.f32.mrb[0].mxu0
        %815 = vmatprep.mubr.f32.mxu0 0.0
        %816 = vmatmul.mubr.f32.gmra.mrb[0].mxu0 %v666
        %v817 = vpop.f32.mrb[0].mxu0
        %v818 = vadd.f32 0.0, %v817
        %v819 = vpop.f32.mrb[0].mxu0
        %820 = vmatprep.mubr.f32.mxu0 0.0
        %821 = vmatmul.mubr.f32.gmra.mrb[0].mxu0 %v668
        %v822 = vpop.f32.mrb[0].mxu0
        %v823 = vadd.f32 0.0, %v822
        %v824 = vpop.f32.mrb[0].mxu0
        %825 = vmatprep.mubr.f32.mxu0 0.0
        %826 = vmatmul.mubr.f32.gmra.mrb[0].mxu0 %v670
        %v827 = vpop.f32.mrb[0].mxu0
        %v828 = vadd.f32 0.0, %v827
        %v829 = vpop.f32.mrb[0].mxu0
        %830 = vmatprep.mubr.f32.mxu0 0.0
        %831 = vmatmul.mubr.f32.gmra.mrb[0].mxu0 %v672
        %v832 = vpop.f32.mrb[0].mxu0
        %v833 = vadd.f32 0.0, %v832
        %v834 = vpop.f32.mrb[0].mxu0
        %835 = vmatprep.mubr.f32.mxu0 0.0
        %836 = vmatmul.mubr.f32.gmra.mrb[0].mxu0 %v674
        %v837 = vpop.f32.mrb[0].mxu0
        %v838 = vadd.f32 0.0, %v837
        %v839 = vpop.f32.mrb[0].mxu0
        %840 = vmatprep.mubr.f32.mxu0 0.0
        %841 = vmatmul.mubr.f32.gmra.mrb[0].mxu0 %v676
        %v842 = vpop.f32.mrb[0].mxu0
        %v843 = vadd.f32 0.0, %v842
        %v844 = vpop.f32.mrb[0].mxu0
        %845 = vmatprep.mubr.f32.mxu0 0.0
        %846 = vmatmul.mubr.f32.gmra.mrb[0].mxu0 %v678
        %v847 = vpop.f32.mrb[0].mxu0
        %v848 = vadd.f32 0.0, %v847
        %v849 = vpop.f32.mrb[0].mxu0
        %850 = vmatprep.mubr.f32.mxu0 0.0
        %851 = vmatmul.mubr.f32.gmra.mrb[0].mxu0 %v680
        %v852 = vpop.f32.mrb[0].mxu0
        %v853 = vadd.f32 0.0, %v852
        %v854 = vpop.f32.mrb[0].mxu0
        %855 = vmatprep.mubr.f32.mxu0 0.0
        %856 = vmatmul.mubr.f32.gmra.mrb[0].mxu0 %v682
        %v857 = vpop.f32.mrb[0].mxu0
        %v858 = vadd.f32 0.0, %v857
        %v859 = vpop.f32.mrb[0].mxu0
        %860 = vmatprep.mubr.f32.mxu0 0.0
        %861 = vmatmul.mubr.f32.gmra.mrb[0].mxu0 %v684
        %v862 = vpop.f32.mrb[0].mxu0
        %v863 = vadd.f32 0.0, %v862
        %v864 = vpop.f32.mrb[0].mxu0
        %865 = vmatprep.mubr.f32.mxu0 0.0
        %866 = vmatmul.mubr.f32.gmra.mrb[0].mxu0 %v686
        %v867 = vpop.f32.mrb[0].mxu0
        %v868 = vadd.f32 0.0, %v867
        %v869 = vpop.f32.mrb[0].mxu0
        %870 = vmatprep.mubr.f32.mxu0 0.0
        %871 = vmatmul.mubr.f32.gmra.mrb[0].mxu0 %v688
        %v872 = vpop.f32.mrb[0].mxu0
        %v873 = vadd.f32 0.0, %v872
        %v874 = vpop.f32.mrb[0].mxu0
        %875 = vmatprep.mubr.f32.mxu0 0.0
        %876 = vmatmul.mubr.f32.gmra.mrb[0].mxu0 %v690
        %v877 = vpop.f32.mrb[0].mxu0
        %v878 = vadd.f32 0.0, %v877
        %v879 = vpop.f32.mrb[0].mxu0
        %880 = vmatprep.mubr.f32.mxu0 0.0
        %881 = vmatmul.mubr.f32.gmra.mrb[0].mxu0 %v692
        %v882 = vpop.f32.mrb[0].mxu0
        %v883 = vadd.f32 0.0, %v882
        %v884 = vpop.f32.mrb[0].mxu0
        %885 = vmatprep.mubr.f32.mxu0 0.0
        %886 = vmatmul.mubr.f32.gmra.mrb[0].mxu0 %v694
        %v887 = vpop.f32.mrb[0].mxu0
        %v888 = vadd.f32 0.0, %v887
        %v889 = vpop.f32.mrb[0].mxu0
        %890 = vmatprep.mubr.f32.mxu0 0.0
        %891 = vmatmul.mubr.f32.gmra.mrb[0].mxu0 %v696
        %v892 = vpop.f32.mrb[0].mxu0
        %v893 = vadd.f32 0.0, %v892
        %v894 = vpop.f32.mrb[0].mxu0
        %895 = vmatprep.mubr.f32.mxu0 0.0
        %896 = vmatmul.mubr.f32.gmra.mrb[0].mxu0 %v698
        %v897 = vpop.f32.mrb[0].mxu0
        %v898 = vadd.f32 0.0, %v897
        %v899 = vpop.f32.mrb[0].mxu0
        %900 = vmatprep.mubr.f32.mxu0 0.0
        %901 = vmatmul.mubr.f32.gmra.mrb[0].mxu0 %v700
        %v902 = vpop.f32.mrb[0].mxu0
        %v903 = vadd.f32 0.0, %v902
        %v904 = vpop.f32.mrb[0].mxu0
        %905 = vmatprep.mubr.f32.mxu0 0.0
        %906 = vmatmul.mubr.f32.gmra.mrb[0].mxu0 %v702
        %v907 = vpop.f32.mrb[0].mxu0
        %v908 = vadd.f32 0.0, %v907
        %v909 = vpop.f32.mrb[0].mxu0
        %910 = vmatprep.mubr.f32.mxu0 0.0
        %911 = vmatmul.mubr.f32.gmra.mrb[0].mxu0 %v704
        %v912 = vpop.f32.mrb[0].mxu0
        %v913 = vadd.f32 0.0, %v912
        %v914 = vpop.f32.mrb[0].mxu0
        %915 = vmatprep.mubr.f32.mxu0 0.0
        %916 = vmatmul.mubr.f32.gmra.mrb[0].mxu0 %v706
        %v917 = vpop.f32.mrb[0].mxu0
        %v918 = vadd.f32 0.0, %v917
        %v919 = vpop.f32.mrb[0].mxu0
        %920 = vmatprep.mubr.f32.mxu0 0.0
        %921 = vmatmul.mubr.f32.gmra.mrb[0].mxu0 %v708
        %v922 = vpop.f32.mrb[0].mxu0
        %v923 = vadd.f32 0.0, %v922
        %v924 = vpop.f32.mrb[0].mxu0
        %925 = vmatprep.mubr.f32.mxu0 0.0
        %926 = vmatmul.mubr.f32.gmra.mrb[0].mxu0 %v710
        %v927 = vpop.f32.mrb[0].mxu0
        %v928 = vadd.f32 0.0, %v927
        %v929 = vpop.f32.mrb[0].mxu0
        %930 = vmatprep.mubr.f32.mxu0 0.0
        %931 = vmatmul.mubr.f32.gmra.mrb[0].mxu0 %v712
        %v932 = vpop.f32.mrb[0].mxu0
        %v933 = vadd.f32 0.0, %v932
        %v934 = vpop.f32.mrb[0].mxu0
        %935 = vmatprep.mubr.f32.mxu0 0.0
        %936 = vmatmul.mubr.f32.gmra.mrb[0].mxu0 %v714
        %v937 = vpop.f32.mrb[0].mxu0
        %v938 = vadd.f32 0.0, %v937
        %v939 = vpop.f32.mrb[0].mxu0
        %940 = vmatprep.mubr.f32.mxu0 0.0
        %941 = vmatmul.mubr.f32.gmra.mrb[0].mxu0 %v716
        %v942 = vpop.f32.mrb[0].mxu0
        %v943 = vadd.f32 0.0, %v942
        %v944 = vpop.f32.mrb[0].mxu0
        %945 = vmatprep.mubr.f32.mxu0 0.0
        %946 = vmatmul.mubr.f32.gmra.mrb[0].mxu0 %v718
        %v947 = vpop.f32.mrb[0].mxu0
        %v948 = vadd.f32 0.0, %v947
        %v949 = vpop.f32.mrb[0].mxu0
        %950 = vmatprep.mubr.f32.mxu0 0.0
        %951 = vmatmul.mubr.f32.gmra.mrb[0].mxu0 %v720
        %v952 = vpop.f32.mrb[0].mxu0
        %v953 = vadd.f32 0.0, %v952
        %v954 = vpop.f32.mrb[0].mxu0
        %955 = vmatprep.mubr.f32.mxu0 0.0
        %956 = vmatmul.mubr.f32.gmra.mrb[0].mxu0 %v722
        %v957 = vpop.f32.mrb[0].mxu0
        %v958 = vadd.f32 0.0, %v957
        %v959 = vpop.f32.mrb[0].mxu0
        %960 = vmatprep.mubr.f32.mxu0 0.0
        %961 = vmatmul.mubr.f32.gmra.mrb[0].mxu0 %v724
        %v962 = vpop.f32.mrb[0].mxu0
        %v963 = vadd.f32 0.0, %v962
        %v964 = vpop.f32.mrb[0].mxu0
        %965 = vmatprep.mubr.f32.mxu0 0.0
        %966 = vmatmul.mubr.f32.gmra.mrb[0].mxu0 %v726
        %v967 = vpop.f32.mrb[0].mxu0
        %v968 = vadd.f32 0.0, %v967
        %v969 = vpop.f32.mrb[0].mxu0
        %970 = vmatprep.mubr.f32.mxu0 0.0
        %971 = vmatmul.mubr.f32.gmra.mrb[0].mxu0 %v728
        %v972 = vpop.f32.mrb[0].mxu0
        %v973 = vadd.f32 0.0, %v972
        %v974 = vpop.f32.mrb[0].mxu0
        %975 = vmatprep.mubr.f32.mxu0 0.0
        %976 = vmatmul.mubr.f32.gmra.mrb[0].mxu0 %v730
        %v977 = vpop.f32.mrb[0].mxu0
        %v978 = vadd.f32 0.0, %v977
        %v979 = vpop.f32.mrb[0].mxu0
        %980 = vdwg.mxu0
        %v981 = vsel %vm659, %v505, 0
        %v983 = vsel %vm659, %v506, 0
        %v985 = vsel %vm659, %v507, 0
        %v987 = vsel %vm659, %v508, 0
        %v989 = vsel %vm659, %v509, 0
        %v991 = vsel %vm659, %v510, 0
        %v993 = vsel %vm659, %v511, 0
        %v995 = vsel %vm659, %v512, 0
        %v997 = vsel %vm659, %v513, 0
        %v999 = vsel %vm659, %v514, 0
        %v1001 = vsel %vm659, %v515, 0
        %v1003 = vsel %vm659, %v516, 0
        %v1005 = vsel %vm659, %v517, 0
        %v1007 = vsel %vm659, %v518, 0
        %v1009 = vsel %vm659, %v519, 0
        %v1011 = vsel %vm659, %v520, 0
        %v1013 = vsel %vm659, %v521, 0
        %v1015 = vsel %vm659, %v522, 0
        %v1017 = vsel %vm659, %v523, 0
        %v1019 = vsel %vm659, %v524, 0
        %v1021 = vsel %vm659, %v525, 0
        %v1023 = vsel %vm659, %v526, 0
        %v1025 = vsel %vm659, %v527, 0
        %v1027 = vsel %vm659, %v528, 0
        %v1029 = vsel %vm659, %v529, 0
        %v1031 = vsel %vm659, %v530, 0
        %v1033 = vsel %vm659, %v531, 0
        %v1035 = vsel %vm659, %v532, 0
        %v1037 = vsel %vm659, %v533, 0
        %v1039 = vsel %vm659, %v534, 0
        %v1041 = vsel %vm659, %v535, 0
        %v1043 = vsel %vm659, %v536, 0
        %v1045 = vsel %vm659, %v537, 0
        %v1047 = vsel %vm659, %v538, 0
        %v1049 = vsel %vm659, %v539, 0
        %v1051 = vsel %vm659, %v540, 0
        %v1054 = vsel %vm732, %v547, 0
        %1056 = vmatprep.subr.mxu0 0.0
        %1057 = vmatpush1.msra.mxu0 %v1054
        %1058 = vmatprep.subr.mxu0 0.0
        %1059 = vmatpush1.msra.mxu0 0.0
        %1060 = vmatprep.subr.mxu0 0.0
        %1061 = vmatpush1.msra.mxu0 0.0
        %1062 = vmatprep.subr.mxu0 0.0
        %1063 = vmatpush1.msra.mxu0 0.0
        %1064 = vmatprep.subr.mxu0 0.0
        %1065 = vmatpush1.msra.mxu0 0.0
        %1066 = vmatprep.subr.mxu0 0.0
        %1067 = vmatpush1.msra.mxu0 0.0
        %1068 = vmatprep.subr.mxu0 0.0
        %1069 = vmatpush1.msra.mxu0 0.0
        %1070 = vmatprep.subr.mxu0 0.0
        %1071 = vmatpush1.msra.mxu0 0.0
        %1072 = vmatprep.subr.mxu0 0.0
        %1073 = vmatpush1.msra.mxu0 0.0
        %1074 = vmatprep.subr.mxu0 0.0
        %1075 = vmatpush1.msra.mxu0 0.0
        %1076 = vmatprep.subr.mxu0 0.0
        %1077 = vmatpush1.msra.mxu0 0.0
        %1078 = vmatprep.subr.mxu0 0.0
        %1079 = vmatpush1.msra.mxu0 0.0
        %1080 = vmatprep.subr.mxu0 0.0
        %1081 = vmatpush1.msra.mxu0 0.0
        %1082 = vmatprep.subr.mxu0 0.0
        %1083 = vmatpush1.msra.mxu0 0.0
        %1084 = vmatprep.subr.mxu0 0.0
        %1085 = vmatpush1.msra.mxu0 0.0
        %1086 = vmatprep.subr.mxu0 0.0
        %1087 = vmatpush1.msra.mxu0 0.0
        %1088 = vmatprep.subr.mxu0 0.0
        %1089 = vmatpush1.msra.mxu0 0.0
        %1090 = vmatprep.subr.mxu0 0.0
        %1091 = vmatpush1.msra.mxu0 0.0
        %1092 = vmatprep.subr.mxu0 0.0
        %1093 = vmatpush1.msra.mxu0 0.0
        %1094 = vmatprep.subr.mxu0 0.0
        %1095 = vmatpush1.msra.mxu0 0.0
        %1096 = vmatprep.subr.mxu0 0.0
        %1097 = vmatpush1.msra.mxu0 0.0
        %1098 = vmatprep.subr.mxu0 0.0
        %1099 = vmatpush1.msra.mxu0 0.0
        %1100 = vmatprep.subr.mxu0 0.0
        %1101 = vmatpush1.msra.mxu0 0.0
        %1102 = vmatprep.subr.mxu0 0.0
        %1103 = vmatpush1.msra.mxu0 0.0
        %1104 = vmatprep.subr.mxu0 0.0
        %1105 = vmatpush1.msra.mxu0 0.0
        %1106 = vmatprep.subr.mxu0 0.0
        %1107 = vmatpush1.msra.mxu0 0.0
        %1108 = vmatprep.subr.mxu0 0.0
        %1109 = vmatpush1.msra.mxu0 0.0
        %1110 = vmatprep.subr.mxu0 0.0
        %1111 = vmatpush1.msra.mxu0 0.0
        %1112 = vmatprep.subr.mxu0 0.0
        %1113 = vmatpush1.msra.mxu0 0.0
        %1114 = vmatprep.subr.mxu0 0.0
        %1115 = vmatpush1.msra.mxu0 0.0
        %1116 = vmatprep.subr.mxu0 0.0
        %1117 = vmatpush1.msra.mxu0 0.0
        %1118 = vmatprep.subr.mxu0 0.0
        %1119 = vmatpush1.msra.mxu0 0.0
        %1120 = vmatprep.mubr.f32.mxu0 0.0
        %1121 = vmatmul.mubr.f32.gmra.mrb[0].mxu0 %v981
        %v1122 = vpop.f32.mrb[0].mxu0
        %v1123 = vadd.f32 %v803, %v1122
        %v1124 = vpop.f32.mrb[0].mxu0
        %1125 = vmatprep.mubr.f32.mxu0 0.0
        %1126 = vmatmul.mubr.f32.gmra.mrb[0].mxu0 %v983
        %v1127 = vpop.f32.mrb[0].mxu0
        %v1128 = vadd.f32 %v808, %v1127
        %v1129 = vpop.f32.mrb[0].mxu0
        %1130 = vmatprep.mubr.f32.mxu0 0.0
        %1131 = vmatmul.mubr.f32.gmra.mrb[0].mxu0 %v985
        %v1132 = vpop.f32.mrb[0].mxu0
        %v1133 = vadd.f32 %v813, %v1132
        %v1134 = vpop.f32.mrb[0].mxu0
        %1135 = vmatprep.mubr.f32.mxu0 0.0
        %1136 = vmatmul.mubr.f32.gmra.mrb[0].mxu0 %v987
        %v1137 = vpop.f32.mrb[0].mxu0
        %v1138 = vadd.f32 %v818, %v1137
        %v1139 = vpop.f32.mrb[0].mxu0
        %1140 = vmatprep.mubr.f32.mxu0 0.0
        %1141 = vmatmul.mubr.f32.gmra.mrb[0].mxu0 %v989
        %v1142 = vpop.f32.mrb[0].mxu0
        %v1143 = vadd.f32 %v823, %v1142
        %v1144 = vpop.f32.mrb[0].mxu0
        %1145 = vmatprep.mubr.f32.mxu0 0.0
        %1146 = vmatmul.mubr.f32.gmra.mrb[0].mxu0 %v991
        %v1147 = vpop.f32.mrb[0].mxu0
        %v1148 = vadd.f32 %v828, %v1147
        %v1149 = vpop.f32.mrb[0].mxu0
        %1150 = vmatprep.mubr.f32.mxu0 0.0
        %1151 = vmatmul.mubr.f32.gmra.mrb[0].mxu0 %v993
        %v1152 = vpop.f32.mrb[0].mxu0
        %v1153 = vadd.f32 %v833, %v1152
        %v1154 = vpop.f32.mrb[0].mxu0
        %1155 = vmatprep.mubr.f32.mxu0 0.0
        %1156 = vmatmul.mubr.f32.gmra.mrb[0].mxu0 %v995
        %v1157 = vpop.f32.mrb[0].mxu0
        %v1158 = vadd.f32 %v838, %v1157
        %v1159 = vpop.f32.mrb[0].mxu0
        %1160 = vmatprep.mubr.f32.mxu0 0.0
        %1161 = vmatmul.mubr.f32.gmra.mrb[0].mxu0 %v997
        %v1162 = vpop.f32.mrb[0].mxu0
        %v1163 = vadd.f32 %v843, %v1162
        %v1164 = vpop.f32.mrb[0].mxu0
        %1165 = vmatprep.mubr.f32.mxu0 0.0
        %1166 = vmatmul.mubr.f32.gmra.mrb[0].mxu0 %v999
        %v1167 = vpop.f32.mrb[0].mxu0
        %v1168 = vadd.f32 %v848, %v1167
        %v1169 = vpop.f32.mrb[0].mxu0
        %1170 = vmatprep.mubr.f32.mxu0 0.0
        %1171 = vmatmul.mubr.f32.gmra.mrb[0].mxu0 %v1001
        %v1172 = vpop.f32.mrb[0].mxu0
        %v1173 = vadd.f32 %v853, %v1172
        %v1174 = vpop.f32.mrb[0].mxu0
        %1175 = vmatprep.mubr.f32.mxu0 0.0
        %1176 = vmatmul.mubr.f32.gmra.mrb[0].mxu0 %v1003
        %v1177 = vpop.f32.mrb[0].mxu0
        %v1178 = vadd.f32 %v858, %v1177
        %v1179 = vpop.f32.mrb[0].mxu0
        %1180 = vmatprep.mubr.f32.mxu0 0.0
        %1181 = vmatmul.mubr.f32.gmra.mrb[0].mxu0 %v1005
        %v1182 = vpop.f32.mrb[0].mxu0
        %v1183 = vadd.f32 %v863, %v1182
        %v1184 = vpop.f32.mrb[0].mxu0
        %1185 = vmatprep.mubr.f32.mxu0 0.0
        %1186 = vmatmul.mubr.f32.gmra.mrb[0].mxu0 %v1007
        %v1187 = vpop.f32.mrb[0].mxu0
        %v1188 = vadd.f32 %v868, %v1187
        %v1189 = vpop.f32.mrb[0].mxu0
        %1190 = vmatprep.mubr.f32.mxu0 0.0
        %1191 = vmatmul.mubr.f32.gmra.mrb[0].mxu0 %v1009
        %v1192 = vpop.f32.mrb[0].mxu0
        %v1193 = vadd.f32 %v873, %v1192
        %v1194 = vpop.f32.mrb[0].mxu0
        %1195 = vmatprep.mubr.f32.mxu0 0.0
        %1196 = vmatmul.mubr.f32.gmra.mrb[0].mxu0 %v1011
        %v1197 = vpop.f32.mrb[0].mxu0
        %v1198 = vadd.f32 %v878, %v1197
        %v1199 = vpop.f32.mrb[0].mxu0
        %1200 = vmatprep.mubr.f32.mxu0 0.0
        %1201 = vmatmul.mubr.f32.gmra.mrb[0].mxu0 %v1013
        %v1202 = vpop.f32.mrb[0].mxu0
        %v1203 = vadd.f32 %v883, %v1202
        %v1204 = vpop.f32.mrb[0].mxu0
        %1205 = vmatprep.mubr.f32.mxu0 0.0
        %1206 = vmatmul.mubr.f32.gmra.mrb[0].mxu0 %v1015
        %v1207 = vpop.f32.mrb[0].mxu0
        %v1208 = vadd.f32 %v888, %v1207
        %v1209 = vpop.f32.mrb[0].mxu0
        %1210 = vmatprep.mubr.f32.mxu0 0.0
        %1211 = vmatmul.mubr.f32.gmra.mrb[0].mxu0 %v1017
        %v1212 = vpop.f32.mrb[0].mxu0
        %v1213 = vadd.f32 %v893, %v1212
        %v1214 = vpop.f32.mrb[0].mxu0
        %1215 = vmatprep.mubr.f32.mxu0 0.0
        %1216 = vmatmul.mubr.f32.gmra.mrb[0].mxu0 %v1019
        %v1217 = vpop.f32.mrb[0].mxu0
        %v1218 = vadd.f32 %v898, %v1217
        %v1219 = vpop.f32.mrb[0].mxu0
        %1220 = vmatprep.mubr.f32.mxu0 0.0
        %1221 = vmatmul.mubr.f32.gmra.mrb[0].mxu0 %v1021
        %v1222 = vpop.f32.mrb[0].mxu0
        %v1223 = vadd.f32 %v903, %v1222
        %v1224 = vpop.f32.mrb[0].mxu0
        %1225 = vmatprep.mubr.f32.mxu0 0.0
        %1226 = vmatmul.mubr.f32.gmra.mrb[0].mxu0 %v1023
        %v1227 = vpop.f32.mrb[0].mxu0
        %v1228 = vadd.f32 %v908, %v1227
        %v1229 = vpop.f32.mrb[0].mxu0
        %1230 = vmatprep.mubr.f32.mxu0 0.0
        %1231 = vmatmul.mubr.f32.gmra.mrb[0].mxu0 %v1025
        %v1232 = vpop.f32.mrb[0].mxu0
        %v1233 = vadd.f32 %v913, %v1232
        %v1234 = vpop.f32.mrb[0].mxu0
        %1235 = vmatprep.mubr.f32.mxu0 0.0
        %1236 = vmatmul.mubr.f32.gmra.mrb[0].mxu0 %v1027
        %v1237 = vpop.f32.mrb[0].mxu0
        %v1238 = vadd.f32 %v918, %v1237
        %v1239 = vpop.f32.mrb[0].mxu0
        %1240 = vmatprep.mubr.f32.mxu0 0.0
        %1241 = vmatmul.mubr.f32.gmra.mrb[0].mxu0 %v1029
        %v1242 = vpop.f32.mrb[0].mxu0
        %v1243 = vadd.f32 %v923, %v1242
        %v1244 = vpop.f32.mrb[0].mxu0
        %1245 = vmatprep.mubr.f32.mxu0 0.0
        %1246 = vmatmul.mubr.f32.gmra.mrb[0].mxu0 %v1031
        %v1247 = vpop.f32.mrb[0].mxu0
        %v1248 = vadd.f32 %v928, %v1247
        %v1249 = vpop.f32.mrb[0].mxu0
        %1250 = vmatprep.mubr.f32.mxu0 0.0
        %1251 = vmatmul.mubr.f32.gmra.mrb[0].mxu0 %v1033
        %v1252 = vpop.f32.mrb[0].mxu0
        %v1253 = vadd.f32 %v933, %v1252
        %v1254 = vpop.f32.mrb[0].mxu0
        %1255 = vmatprep.mubr.f32.mxu0 0.0
        %1256 = vmatmul.mubr.f32.gmra.mrb[0].mxu0 %v1035
        %v1257 = vpop.f32.mrb[0].mxu0
        %v1258 = vadd.f32 %v938, %v1257
        %v1259 = vpop.f32.mrb[0].mxu0
        %1260 = vmatprep.mubr.f32.mxu0 0.0
        %1261 = vmatmul.mubr.f32.gmra.mrb[0].mxu0 %v1037
        %v1262 = vpop.f32.mrb[0].mxu0
        %v1263 = vadd.f32 %v943, %v1262
        %v1264 = vpop.f32.mrb[0].mxu0
        %1265 = vmatprep.mubr.f32.mxu0 0.0
        %1266 = vmatmul.mubr.f32.gmra.mrb[0].mxu0 %v1039
        %v1267 = vpop.f32.mrb[0].mxu0
        %v1268 = vadd.f32 %v948, %v1267
        %v1269 = vpop.f32.mrb[0].mxu0
        %1270 = vmatprep.mubr.f32.mxu0 0.0
        %1271 = vmatmul.mubr.f32.gmra.mrb[0].mxu0 %v1041
        %v1272 = vpop.f32.mrb[0].mxu0
        %v1273 = vadd.f32 %v953, %v1272
        %v1274 = vpop.f32.mrb[0].mxu0
        %1275 = vmatprep.mubr.f32.mxu0 0.0
        %1276 = vmatmul.mubr.f32.gmra.mrb[0].mxu0 %v1043
        %v1277 = vpop.f32.mrb[0].mxu0
        %v1278 = vadd.f32 %v958, %v1277
        %v1279 = vpop.f32.mrb[0].mxu0
        %1280 = vmatprep.mubr.f32.mxu0 0.0
        %1281 = vmatmul.mubr.f32.gmra.mrb[0].mxu0 %v1045
        %v1282 = vpop.f32.mrb[0].mxu0
        %v1283 = vadd.f32 %v963, %v1282
        %v1284 = vpop.f32.mrb[0].mxu0
        %1285 = vmatprep.mubr.f32.mxu0 0.0
        %1286 = vmatmul.mubr.f32.gmra.mrb[0].mxu0 %v1047
        %v1287 = vpop.f32.mrb[0].mxu0
        %v1288 = vadd.f32 %v968, %v1287
        %v1289 = vpop.f32.mrb[0].mxu0
        %1290 = vmatprep.mubr.f32.mxu0 0.0
        %1291 = vmatmul.mubr.f32.gmra.mrb[0].mxu0 %v1049
        %v1292 = vpop.f32.mrb[0].mxu0
        %v1293 = vadd.f32 %v973, %v1292
        %v1294 = vpop.f32.mrb[0].mxu0
        %1295 = vmatprep.mubr.f32.mxu0 0.0
        %1296 = vmatmul.mubr.f32.gmra.mrb[0].mxu0 %v1051
        %v1297 = vpop.f32.mrb[0].mxu0
        %v1298 = vadd.f32 %v978, %v1297
        %v1299 = vpop.f32.mrb[0].mxu0
        %1300 = vdwg.mxu0
        %s1301 = scalar_lea.vmem %s2, 4
        %v1302 = vld [vmem:[%s1301] sm:$0x3]
        %v1303 = vunpack.c.l.bf16 %v1302
        %vm1304 = vcmask 1045504
        %v1305 = vrot.slane %v505, 2
        %v1306 = vrot.slane %v506, 2
        %v1307 = vsel %vm1304, %v1305, %v1306
        %v1308 = vrot.slane %v507, 2
        %v1309 = vsel %vm1304, %v1306, %v1308
        %v1310 = vrot.slane %v508, 2
        %v1311 = vsel %vm1304, %v1308, %v1310
        %v1312 = vrot.slane %v509, 2
        %v1313 = vsel %vm1304, %v1310, %v1312
        %v1314 = vrot.slane %v510, 2
        %v1315 = vsel %vm1304, %v1312, %v1314
        %v1316 = vrot.slane %v511, 2
        %v1317 = vsel %vm1304, %v1314, %v1316
        %v1318 = vrot.slane %v512, 2
        %v1319 = vsel %vm1304, %v1316, %v1318
        %v1320 = vrot.slane %v513, 2
        %v1321 = vsel %vm1304, %v1318, %v1320
        %v1322 = vrot.slane %v514, 2
        %v1323 = vsel %vm1304, %v1320, %v1322
        %v1324 = vrot.slane %v515, 2
        %v1325 = vsel %vm1304, %v1322, %v1324
        %v1326 = vrot.slane %v516, 2
        %v1327 = vsel %vm1304, %v1324, %v1326
        %v1328 = vrot.slane %v517, 2
        %v1329 = vsel %vm1304, %v1326, %v1328
        %v1330 = vrot.slane %v518, 2
        %v1331 = vsel %vm1304, %v1328, %v1330
        %v1332 = vrot.slane %v519, 2
        %v1333 = vsel %vm1304, %v1330, %v1332
        %v1334 = vrot.slane %v520, 2
        %v1335 = vsel %vm1304, %v1332, %v1334
        %v1336 = vrot.slane %v521, 2
        %v1337 = vsel %vm1304, %v1334, %v1336
        %v1338 = vrot.slane %v522, 2
        %v1339 = vsel %vm1304, %v1336, %v1338
        %v1340 = vrot.slane %v523, 2
        %v1341 = vsel %vm1304, %v1338, %v1340
        %v1342 = vrot.slane %v524, 2
        %v1343 = vsel %vm1304, %v1340, %v1342
        %v1344 = vrot.slane %v525, 2
        %v1345 = vsel %vm1304, %v1342, %v1344
        %v1346 = vrot.slane %v526, 2
        %v1347 = vsel %vm1304, %v1344, %v1346
        %v1348 = vrot.slane %v527, 2
        %v1349 = vsel %vm1304, %v1346, %v1348
        %v1350 = vrot.slane %v528, 2
        %v1351 = vsel %vm1304, %v1348, %v1350
        %v1352 = vrot.slane %v529, 2
        %v1353 = vsel %vm1304, %v1350, %v1352
        %v1354 = vrot.slane %v530, 2
        %v1355 = vsel %vm1304, %v1352, %v1354
        %v1356 = vrot.slane %v531, 2
        %v1357 = vsel %vm1304, %v1354, %v1356
        %v1358 = vrot.slane %v532, 2
        %v1359 = vsel %vm1304, %v1356, %v1358
        %v1360 = vrot.slane %v533, 2
        %v1361 = vsel %vm1304, %v1358, %v1360
        %v1362 = vrot.slane %v534, 2
        %v1363 = vsel %vm1304, %v1360, %v1362
        %v1364 = vrot.slane %v535, 2
        %v1365 = vsel %vm1304, %v1362, %v1364
        %v1366 = vrot.slane %v536, 2
        %v1367 = vsel %vm1304, %v1364, %v1366
        %v1368 = vrot.slane %v537, 2
        %v1369 = vsel %vm1304, %v1366, %v1368
        %v1370 = vrot.slane %v538, 2
        %v1371 = vsel %vm1304, %v1368, %v1370
        %v1372 = vrot.slane %v539, 2
        %v1373 = vsel %vm1304, %v1370, %v1372
        %v1374 = vrot.slane %v540, 2
        %v1375 = vsel %vm1304, %v1372, %v1374
        %v1376 = vsel %vm659, %v1307, 0
        %v1378 = vsel %vm659, %v1309, 0
        %v1380 = vsel %vm659, %v1311, 0
        %v1382 = vsel %vm659, %v1313, 0
        %v1384 = vsel %vm659, %v1315, 0
        %v1386 = vsel %vm659, %v1317, 0
        %v1388 = vsel %vm659, %v1319, 0
        %v1390 = vsel %vm659, %v1321, 0
        %v1392 = vsel %vm659, %v1323, 0
        %v1394 = vsel %vm659, %v1325, 0
        %v1396 = vsel %vm659, %v1327, 0
        %v1398 = vsel %vm659, %v1329, 0
        %v1400 = vsel %vm659, %v1331, 0
        %v1402 = vsel %vm659, %v1333, 0
        %v1404 = vsel %vm659, %v1335, 0
        %v1406 = vsel %vm659, %v1337, 0
        %v1408 = vsel %vm659, %v1339, 0
        %v1410 = vsel %vm659, %v1341, 0
        %v1412 = vsel %vm659, %v1343, 0
        %v1414 = vsel %vm659, %v1345, 0
        %v1416 = vsel %vm659, %v1347, 0
        %v1418 = vsel %vm659, %v1349, 0
        %v1420 = vsel %vm659, %v1351, 0
        %v1422 = vsel %vm659, %v1353, 0
        %v1424 = vsel %vm659, %v1355, 0
        %v1426 = vsel %vm659, %v1357, 0
        %v1428 = vsel %vm659, %v1359, 0
        %v1430 = vsel %vm659, %v1361, 0
        %v1432 = vsel %vm659, %v1363, 0
        %v1434 = vsel %vm659, %v1365, 0
        %v1436 = vsel %vm659, %v1367, 0
        %v1438 = vsel %vm659, %v1369, 0
        %v1440 = vsel %vm659, %v1371, 0
        %v1442 = vsel %vm659, %v1373, 0
        %v1444 = vsel %vm659, %v1375, 0
        %v1446 = vsel %vm659, %v1374, 0
        %v1449 = vsel %vm732, %v1303, 0
        %1451 = vmatprep.subr.mxu0 0.0
        %1452 = vmatpush1.msra.mxu0 %v1449
        %1453 = vmatprep.subr.mxu0 0.0
        %1454 = vmatpush1.msra.mxu0 0.0
        %1455 = vmatprep.subr.mxu0 0.0
        %1456 = vmatpush1.msra.mxu0 0.0
        %1457 = vmatprep.subr.mxu0 0.0
        %1458 = vmatpush1.msra.mxu0 0.0
        %1459 = vmatprep.subr.mxu0 0.0
        %1460 = vmatpush1.msra.mxu0 0.0
        %1461 = vmatprep.subr.mxu0 0.0
        %1462 = vmatpush1.msra.mxu0 0.0
        %1463 = vmatprep.subr.mxu0 0.0
        %1464 = vmatpush1.msra.mxu0 0.0
        %1465 = vmatprep.subr.mxu0 0.0
        %1466 = vmatpush1.msra.mxu0 0.0
        %1467 = vmatprep.subr.mxu0 0.0
        %1468 = vmatpush1.msra.mxu0 0.0
        %1469 = vmatprep.subr.mxu0 0.0
        %1470 = vmatpush1.msra.mxu0 0.0
        %1471 = vmatprep.subr.mxu0 0.0
        %1472 = vmatpush1.msra.mxu0 0.0
        %1473 = vmatprep.subr.mxu0 0.0
        %1474 = vmatpush1.msra.mxu0 0.0
        %1475 = vmatprep.subr.mxu0 0.0
        %1476 = vmatpush1.msra.mxu0 0.0
        %1477 = vmatprep.subr.mxu0 0.0
        %1478 = vmatpush1.msra.mxu0 0.0
        %1479 = vmatprep.subr.mxu0 0.0
        %1480 = vmatpush1.msra.mxu0 0.0
        %1481 = vmatprep.subr.mxu0 0.0
        %1482 = vmatpush1.msra.mxu0 0.0
        %1483 = vmatprep.subr.mxu0 0.0
        %1484 = vmatpush1.msra.mxu0 0.0
        %1485 = vmatprep.subr.mxu0 0.0
        %1486 = vmatpush1.msra.mxu0 0.0
        %1487 = vmatprep.subr.mxu0 0.0
        %1488 = vmatpush1.msra.mxu0 0.0
        %1489 = vmatprep.subr.mxu0 0.0
        %1490 = vmatpush1.msra.mxu0 0.0
        %1491 = vmatprep.subr.mxu0 0.0
        %1492 = vmatpush1.msra.mxu0 0.0
        %1493 = vmatprep.subr.mxu0 0.0
        %1494 = vmatpush1.msra.mxu0 0.0
        %1495 = vmatprep.subr.mxu0 0.0
        %1496 = vmatpush1.msra.mxu0 0.0
        %1497 = vmatprep.subr.mxu0 0.0
        %1498 = vmatpush1.msra.mxu0 0.0
        %1499 = vmatprep.subr.mxu0 0.0
        %1500 = vmatpush1.msra.mxu0 0.0
        %1501 = vmatprep.subr.mxu0 0.0
        %1502 = vmatpush1.msra.mxu0 0.0
        %1503 = vmatprep.subr.mxu0 0.0
        %1504 = vmatpush1.msra.mxu0 0.0
        %1505 = vmatprep.subr.mxu0 0.0
        %1506 = vmatpush1.msra.mxu0 0.0
        %1507 = vmatprep.subr.mxu0 0.0
        %1508 = vmatpush1.msra.mxu0 0.0
        %1509 = vmatprep.subr.mxu0 0.0
        %1510 = vmatpush1.msra.mxu0 0.0
        %1511 = vmatprep.subr.mxu0 0.0
        %1512 = vmatpush1.msra.mxu0 0.0
        %1513 = vmatprep.subr.mxu0 0.0
        %1514 = vmatpush1.msra.mxu0 0.0
        %1515 = vmatprep.mubr.f32.mxu0 0.0
        %1516 = vmatmul.mubr.f32.gmra.mrb[0].mxu0 %v1376
        %v1517 = vpop.f32.mrb[0].mxu0
        %v1518 = vadd.f32 0.0, %v1517
        %v1519 = vpop.f32.mrb[0].mxu0
        %1520 = vmatprep.mubr.f32.mxu0 0.0
        %1521 = vmatmul.mubr.f32.gmra.mrb[0].mxu0 %v1378
        %v1522 = vpop.f32.mrb[0].mxu0
        %v1523 = vadd.f32 0.0, %v1522
        %v1524 = vpop.f32.mrb[0].mxu0
        %1525 = vmatprep.mubr.f32.mxu0 0.0
        %1526 = vmatmul.mubr.f32.gmra.mrb[0].mxu0 %v1380
        %v1527 = vpop.f32.mrb[0].mxu0
        %v1528 = vadd.f32 0.0, %v1527
        %v1529 = vpop.f32.mrb[0].mxu0
        %1530 = vmatprep.mubr.f32.mxu0 0.0
        %1531 = vmatmul.mubr.f32.gmra.mrb[0].mxu0 %v1382
        %v1532 = vpop.f32.mrb[0].mxu0
        %v1533 = vadd.f32 0.0, %v1532
        %v1534 = vpop.f32.mrb[0].mxu0
        %1535 = vmatprep.mubr.f32.mxu0 0.0
        %1536 = vmatmul.mubr.f32.gmra.mrb[0].mxu0 %v1384
        %v1537 = vpop.f32.mrb[0].mxu0
        %v1538 = vadd.f32 0.0, %v1537
        %v1539 = vpop.f32.mrb[0].mxu0
        %1540 = vmatprep.mubr.f32.mxu0 0.0
        %1541 = vmatmul.mubr.f32.gmra.mrb[0].mxu0 %v1386
        %v1542 = vpop.f32.mrb[0].mxu0
        %v1543 = vadd.f32 0.0, %v1542
        %v1544 = vpop.f32.mrb[0].mxu0
        %1545 = vmatprep.mubr.f32.mxu0 0.0
        %1546 = vmatmul.mubr.f32.gmra.mrb[0].mxu0 %v1388
        %v1547 = vpop.f32.mrb[0].mxu0
        %v1548 = vadd.f32 0.0, %v1547
        %v1549 = vpop.f32.mrb[0].mxu0
        %1550 = vmatprep.mubr.f32.mxu0 0.0
        %1551 = vmatmul.mubr.f32.gmra.mrb[0].mxu0 %v1390
        %v1552 = vpop.f32.mrb[0].mxu0
        %v1553 = vadd.f32 0.0, %v1552
        %v1554 = vpop.f32.mrb[0].mxu0
        %1555 = vmatprep.mubr.f32.mxu0 0.0
        %1556 = vmatmul.mubr.f32.gmra.mrb[0].mxu0 %v1392
        %v1557 = vpop.f32.mrb[0].mxu0
        %v1558 = vadd.f32 0.0, %v1557
        %v1559 = vpop.f32.mrb[0].mxu0
        %1560 = vmatprep.mubr.f32.mxu0 0.0
        %1561 = vmatmul.mubr.f32.gmra.mrb[0].mxu0 %v1394
        %v1562 = vpop.f32.mrb[0].mxu0
        %v1563 = vadd.f32 0.0, %v1562
        %v1564 = vpop.f32.mrb[0].mxu0
        %1565 = vmatprep.mubr.f32.mxu0 0.0
        %1566 = vmatmul.mubr.f32.gmra.mrb[0].mxu0 %v1396
        %v1567 = vpop.f32.mrb[0].mxu0
        %v1568 = vadd.f32 0.0, %v1567
        %v1569 = vpop.f32.mrb[0].mxu0
        %1570 = vmatprep.mubr.f32.mxu0 0.0
        %1571 = vmatmul.mubr.f32.gmra.mrb[0].mxu0 %v1398
        %v1572 = vpop.f32.mrb[0].mxu0
        %v1573 = vadd.f32 0.0, %v1572
        %v1574 = vpop.f32.mrb[0].mxu0
        %1575 = vmatprep.mubr.f32.mxu0 0.0
        %1576 = vmatmul.mubr.f32.gmra.mrb[0].mxu0 %v1400
        %v1577 = vpop.f32.mrb[0].mxu0
        %v1578 = vadd.f32 0.0, %v1577
        %v1579 = vpop.f32.mrb[0].mxu0
        %1580 = vmatprep.mubr.f32.mxu0 0.0
        %1581 = vmatmul.mubr.f32.gmra.mrb[0].mxu0 %v1402
        %v1582 = vpop.f32.mrb[0].mxu0
        %v1583 = vadd.f32 0.0, %v1582
        %v1584 = vpop.f32.mrb[0].mxu0
        %1585 = vmatprep.mubr.f32.mxu0 0.0
        %1586 = vmatmul.mubr.f32.gmra.mrb[0].mxu0 %v1404
        %v1587 = vpop.f32.mrb[0].mxu0
        %v1588 = vadd.f32 0.0, %v1587
        %v1589 = vpop.f32.mrb[0].mxu0
        %1590 = vmatprep.mubr.f32.mxu0 0.0
        %1591 = vmatmul.mubr.f32.gmra.mrb[0].mxu0 %v1406
        %v1592 = vpop.f32.mrb[0].mxu0
        %v1593 = vadd.f32 0.0, %v1592
        %v1594 = vpop.f32.mrb[0].mxu0
        %1595 = vmatprep.mubr.f32.mxu0 0.0
        %1596 = vmatmul.mubr.f32.gmra.mrb[0].mxu0 %v1408
        %v1597 = vpop.f32.mrb[0].mxu0
        %v1598 = vadd.f32 0.0, %v1597
        %v1599 = vpop.f32.mrb[0].mxu0
        %1600 = vmatprep.mubr.f32.mxu0 0.0
        %1601 = vmatmul.mubr.f32.gmra.mrb[0].mxu0 %v1410
        %v1602 = vpop.f32.mrb[0].mxu0
        %v1603 = vadd.f32 0.0, %v1602
        %v1604 = vpop.f32.mrb[0].mxu0
        %1605 = vmatprep.mubr.f32.mxu0 0.0
        %1606 = vmatmul.mubr.f32.gmra.mrb[0].mxu0 %v1412
        %v1607 = vpop.f32.mrb[0].mxu0
        %v1608 = vadd.f32 0.0, %v1607
        %v1609 = vpop.f32.mrb[0].mxu0
        %1610 = vmatprep.mubr.f32.mxu0 0.0
        %1611 = vmatmul.mubr.f32.gmra.mrb[0].mxu0 %v1414
        %v1612 = vpop.f32.mrb[0].mxu0
        %v1613 = vadd.f32 0.0, %v1612
        %v1614 = vpop.f32.mrb[0].mxu0
        %1615 = vmatprep.mubr.f32.mxu0 0.0
        %1616 = vmatmul.mubr.f32.gmra.mrb[0].mxu0 %v1416
        %v1617 = vpop.f32.mrb[0].mxu0
        %v1618 = vadd.f32 0.0, %v1617
        %v1619 = vpop.f32.mrb[0].mxu0
        %1620 = vmatprep.mubr.f32.mxu0 0.0
        %1621 = vmatmul.mubr.f32.gmra.mrb[0].mxu0 %v1418
        %v1622 = vpop.f32.mrb[0].mxu0
        %v1623 = vadd.f32 0.0, %v1622
        %v1624 = vpop.f32.mrb[0].mxu0
        %1625 = vmatprep.mubr.f32.mxu0 0.0
        %1626 = vmatmul.mubr.f32.gmra.mrb[0].mxu0 %v1420
        %v1627 = vpop.f32.mrb[0].mxu0
        %v1628 = vadd.f32 0.0, %v1627
        %v1629 = vpop.f32.mrb[0].mxu0
        %1630 = vmatprep.mubr.f32.mxu0 0.0
        %1631 = vmatmul.mubr.f32.gmra.mrb[0].mxu0 %v1422
        %v1632 = vpop.f32.mrb[0].mxu0
        %v1633 = vadd.f32 0.0, %v1632
        %v1634 = vpop.f32.mrb[0].mxu0
        %1635 = vmatprep.mubr.f32.mxu0 0.0
        %1636 = vmatmul.mubr.f32.gmra.mrb[0].mxu0 %v1424
        %v1637 = vpop.f32.mrb[0].mxu0
        %v1638 = vadd.f32 0.0, %v1637
        %v1639 = vpop.f32.mrb[0].mxu0
        %1640 = vmatprep.mubr.f32.mxu0 0.0
        %1641 = vmatmul.mubr.f32.gmra.mrb[0].mxu0 %v1426
        %v1642 = vpop.f32.mrb[0].mxu0
        %v1643 = vadd.f32 0.0, %v1642
        %v1644 = vpop.f32.mrb[0].mxu0
        %1645 = vmatprep.mubr.f32.mxu0 0.0
        %1646 = vmatmul.mubr.f32.gmra.mrb[0].mxu0 %v1428
        %v1647 = vpop.f32.mrb[0].mxu0
        %v1648 = vadd.f32 0.0, %v1647
        %v1649 = vpop.f32.mrb[0].mxu0
        %1650 = vmatprep.mubr.f32.mxu0 0.0
        %1651 = vmatmul.mubr.f32.gmra.mrb[0].mxu0 %v1430
        %v1652 = vpop.f32.mrb[0].mxu0
        %v1653 = vadd.f32 0.0, %v1652
        %v1654 = vpop.f32.mrb[0].mxu0
        %1655 = vmatprep.mubr.f32.mxu0 0.0
        %1656 = vmatmul.mubr.f32.gmra.mrb[0].mxu0 %v1432
        %v1657 = vpop.f32.mrb[0].mxu0
        %v1658 = vadd.f32 0.0, %v1657
        %v1659 = vpop.f32.mrb[0].mxu0
        %1660 = vmatprep.mubr.f32.mxu0 0.0
        %1661 = vmatmul.mubr.f32.gmra.mrb[0].mxu0 %v1434
        %v1662 = vpop.f32.mrb[0].mxu0
        %v1663 = vadd.f32 0.0, %v1662
        %v1664 = vpop.f32.mrb[0].mxu0
        %1665 = vmatprep.mubr.f32.mxu0 0.0
        %1666 = vmatmul.mubr.f32.gmra.mrb[0].mxu0 %v1436
        %v1667 = vpop.f32.mrb[0].mxu0
        %v1668 = vadd.f32 0.0, %v1667
        %v1669 = vpop.f32.mrb[0].mxu0
        %1670 = vmatprep.mubr.f32.mxu0 0.0
        %1671 = vmatmul.mubr.f32.gmra.mrb[0].mxu0 %v1438
        %v1672 = vpop.f32.mrb[0].mxu0
        %v1673 = vadd.f32 0.0, %v1672
        %v1674 = vpop.f32.mrb[0].mxu0
        %1675 = vmatprep.mubr.f32.mxu0 0.0
        %1676 = vmatmul.mubr.f32.gmra.mrb[0].mxu0 %v1440
        %v1677 = vpop.f32.mrb[0].mxu0
        %v1678 = vadd.f32 0.0, %v1677
        %v1679 = vpop.f32.mrb[0].mxu0
        %1680 = vmatprep.mubr.f32.mxu0 0.0
        %1681 = vmatmul.mubr.f32.gmra.mrb[0].mxu0 %v1442
        %v1682 = vpop.f32.mrb[0].mxu0
        %v1683 = vadd.f32 0.0, %v1682
        %v1684 = vpop.f32.mrb[0].mxu0
        %1685 = vmatprep.mubr.f32.mxu0 0.0
        %1686 = vmatmul.mubr.f32.gmra.mrb[0].mxu0 %v1444
        %v1687 = vpop.f32.mrb[0].mxu0
        %v1688 = vadd.f32 0.0, %v1687
        %v1689 = vpop.f32.mrb[0].mxu0
        %1690 = vmatprep.mubr.f32.mxu0 0.0
        %1691 = vmatmul.mubr.f32.gmra.mrb[0].mxu0 %v1446
        %v1692 = vpop.f32.mrb[0].mxu0
        %v1693 = vadd.f32 0.0, %v1692
        %v1694 = vpop.f32.mrb[0].mxu0
        %1695 = vdwg.mxu0
        %v1696 = vadd.f32 %v1123, %v1518
        %v1697 = vadd.f32 %v1128, %v1523
        %v1698 = vadd.f32 %v1133, %v1528
        %v1699 = vadd.f32 %v1138, %v1533
        %v1700 = vadd.f32 %v1143, %v1538
        %v1701 = vadd.f32 %v1148, %v1543
        %v1702 = vadd.f32 %v1153, %v1548
        %v1703 = vadd.f32 %v1158, %v1553
        %v1704 = vadd.f32 %v1163, %v1558
        %v1705 = vadd.f32 %v1168, %v1563
        %v1706 = vadd.f32 %v1173, %v1568
        %v1707 = vadd.f32 %v1178, %v1573
        %v1708 = vadd.f32 %v1183, %v1578
        %v1709 = vadd.f32 %v1188, %v1583
        %v1710 = vadd.f32 %v1193, %v1588
        %v1711 = vadd.f32 %v1198, %v1593
        %v1712 = vadd.f32 %v1203, %v1598
        %v1713 = vadd.f32 %v1208, %v1603
        %v1714 = vadd.f32 %v1213, %v1608
        %v1715 = vadd.f32 %v1218, %v1613
        %v1716 = vadd.f32 %v1223, %v1618
        %v1717 = vadd.f32 %v1228, %v1623
        %v1718 = vadd.f32 %v1233, %v1628
        %v1719 = vadd.f32 %v1238, %v1633
        %v1720 = vadd.f32 %v1243, %v1638
        %v1721 = vadd.f32 %v1248, %v1643
        %v1722 = vadd.f32 %v1253, %v1648
        %v1723 = vadd.f32 %v1258, %v1653
        %v1724 = vadd.f32 %v1263, %v1658
        %v1725 = vadd.f32 %v1268, %v1663
        %v1726 = vadd.f32 %v1273, %v1668
        %v1727 = vadd.f32 %v1278, %v1673
        %v1728 = vadd.f32 %v1283, %v1678
        %v1729 = vadd.f32 %v1288, %v1683
        %v1730 = vadd.f32 %v1293, %v1688
        %v1731 = vadd.f32 %v1298, %v1693
        %s1732 = scalar_lea.vmem %s2, 6
        %v1733 = vld [vmem:[%s1732] sm:$0x3]
        %v1734 = vunpack.c.l.bf16 %v1733
        %v1737 = vrot.slane %v541, 2
        %v1738 = vsel %vm1304, %v1374, %v1737
        %v1739 = vrot.slane %v542, 2
        %v1740 = vsel %vm1304, %v1737, %v1739
        %v1741 = vsel %vm659, %v1738, 0
        %v1743 = vsel %vm659, %v1740, 0
        %v1745 = vsel %vm659, %v1739, 0
        %v1748 = vsel %vm732, %v1734, 0
        %1750 = vmatprep.subr.mxu0 0.0
        %1751 = vmatpush1.msra.mxu0 %v1748
        %1752 = vmatprep.subr.mxu0 0.0
        %1753 = vmatpush1.msra.mxu0 0.0
        %1754 = vmatprep.subr.mxu0 0.0
        %1755 = vmatpush1.msra.mxu0 0.0
        %1756 = vmatprep.subr.mxu0 0.0
        %1757 = vmatpush1.msra.mxu0 0.0
        %1758 = vmatprep.subr.mxu0 0.0
        %1759 = vmatpush1.msra.mxu0 0.0
        %1760 = vmatprep.subr.mxu0 0.0
        %1761 = vmatpush1.msra.mxu0 0.0
        %1762 = vmatprep.subr.mxu0 0.0
        %1763 = vmatpush1.msra.mxu0 0.0
        %1764 = vmatprep.subr.mxu0 0.0
        %1765 = vmatpush1.msra.mxu0 0.0
        %1766 = vmatprep.subr.mxu0 0.0
        %1767 = vmatpush1.msra.mxu0 0.0
        %1768 = vmatprep.subr.mxu0 0.0
        %1769 = vmatpush1.msra.mxu0 0.0
        %1770 = vmatprep.subr.mxu0 0.0
        %1771 = vmatpush1.msra.mxu0 0.0
        %1772 = vmatprep.subr.mxu0 0.0
        %1773 = vmatpush1.msra.mxu0 0.0
        %1774 = vmatprep.subr.mxu0 0.0
        %1775 = vmatpush1.msra.mxu0 0.0
        %1776 = vmatprep.subr.mxu0 0.0
        %1777 = vmatpush1.msra.mxu0 0.0
        %1778 = vmatprep.subr.mxu0 0.0
        %1779 = vmatpush1.msra.mxu0 0.0
        %1780 = vmatprep.subr.mxu0 0.0
        %1781 = vmatpush1.msra.mxu0 0.0
        %1782 = vmatprep.subr.mxu0 0.0
        %1783 = vmatpush1.msra.mxu0 0.0
        %1784 = vmatprep.subr.mxu0 0.0
        %1785 = vmatpush1.msra.mxu0 0.0
        %1786 = vmatprep.subr.mxu0 0.0
        %1787 = vmatpush1.msra.mxu0 0.0
        %1788 = vmatprep.subr.mxu0 0.0
        %1789 = vmatpush1.msra.mxu0 0.0
        %1790 = vmatprep.subr.mxu0 0.0
        %1791 = vmatpush1.msra.mxu0 0.0
        %1792 = vmatprep.subr.mxu0 0.0
        %1793 = vmatpush1.msra.mxu0 0.0
        %1794 = vmatprep.subr.mxu0 0.0
        %1795 = vmatpush1.msra.mxu0 0.0
        %1796 = vmatprep.subr.mxu0 0.0
        %1797 = vmatpush1.msra.mxu0 0.0
        %1798 = vmatprep.subr.mxu0 0.0
        %1799 = vmatpush1.msra.mxu0 0.0
        %1800 = vmatprep.subr.mxu0 0.0
        %1801 = vmatpush1.msra.mxu0 0.0
        %1802 = vmatprep.subr.mxu0 0.0
        %1803 = vmatpush1.msra.mxu0 0.0
        %1804 = vmatprep.subr.mxu0 0.0
        %1805 = vmatpush1.msra.mxu0 0.0
        %1806 = vmatprep.subr.mxu0 0.0
        %1807 = vmatpush1.msra.mxu0 0.0
        %1808 = vmatprep.subr.mxu0 0.0
        %1809 = vmatpush1.msra.mxu0 0.0
        %1810 = vmatprep.subr.mxu0 0.0
        %1811 = vmatpush1.msra.mxu0 0.0
        %1812 = vmatprep.subr.mxu0 0.0
        %1813 = vmatpush1.msra.mxu0 0.0
        %1814 = vmatprep.mubr.f32.mxu0 0.0
        %1815 = vmatmul.mubr.f32.gmra.mrb[0].mxu0 %v1380
        %v1816 = vpop.f32.mrb[0].mxu0
        %v1817 = vadd.f32 0.0, %v1816
        %v1818 = vpop.f32.mrb[0].mxu0
        %1819 = vmatprep.mubr.f32.mxu0 0.0
        %1820 = vmatmul.mubr.f32.gmra.mrb[0].mxu0 %v1382
        %v1821 = vpop.f32.mrb[0].mxu0
        %v1822 = vadd.f32 0.0, %v1821
        %v1823 = vpop.f32.mrb[0].mxu0
        %1824 = vmatprep.mubr.f32.mxu0 0.0
        %1825 = vmatmul.mubr.f32.gmra.mrb[0].mxu0 %v1384
        %v1826 = vpop.f32.mrb[0].mxu0
        %v1827 = vadd.f32 0.0, %v1826
        %v1828 = vpop.f32.mrb[0].mxu0
        %1829 = vmatprep.mubr.f32.mxu0 0.0
        %1830 = vmatmul.mubr.f32.gmra.mrb[0].mxu0 %v1386
        %v1831 = vpop.f32.mrb[0].mxu0
        %v1832 = vadd.f32 0.0, %v1831
        %v1833 = vpop.f32.mrb[0].mxu0
        %1834 = vmatprep.mubr.f32.mxu0 0.0
        %1835 = vmatmul.mubr.f32.gmra.mrb[0].mxu0 %v1388
        %v1836 = vpop.f32.mrb[0].mxu0
        %v1837 = vadd.f32 0.0, %v1836
        %v1838 = vpop.f32.mrb[0].mxu0
        %1839 = vmatprep.mubr.f32.mxu0 0.0
        %1840 = vmatmul.mubr.f32.gmra.mrb[0].mxu0 %v1390
        %v1841 = vpop.f32.mrb[0].mxu0
        %v1842 = vadd.f32 0.0, %v1841
        %v1843 = vpop.f32.mrb[0].mxu0
        %1844 = vmatprep.mubr.f32.mxu0 0.0
        %1845 = vmatmul.mubr.f32.gmra.mrb[0].mxu0 %v1392
        %v1846 = vpop.f32.mrb[0].mxu0
        %v1847 = vadd.f32 0.0, %v1846
        %v1848 = vpop.f32.mrb[0].mxu0
        %1849 = vmatprep.mubr.f32.mxu0 0.0
        %1850 = vmatmul.mubr.f32.gmra.mrb[0].mxu0 %v1394
        %v1851 = vpop.f32.mrb[0].mxu0
        %v1852 = vadd.f32 0.0, %v1851
        %v1853 = vpop.f32.mrb[0].mxu0
        %1854 = vmatprep.mubr.f32.mxu0 0.0
        %1855 = vmatmul.mubr.f32.gmra.mrb[0].mxu0 %v1396
        %v1856 = vpop.f32.mrb[0].mxu0
        %v1857 = vadd.f32 0.0, %v1856
        %v1858 = vpop.f32.mrb[0].mxu0
        %1859 = vmatprep.mubr.f32.mxu0 0.0
        %1860 = vmatmul.mubr.f32.gmra.mrb[0].mxu0 %v1398
        %v1861 = vpop.f32.mrb[0].mxu0
        %v1862 = vadd.f32 0.0, %v1861
        %v1863 = vpop.f32.mrb[0].mxu0
        %1864 = vmatprep.mubr.f32.mxu0 0.0
        %1865 = vmatmul.mubr.f32.gmra.mrb[0].mxu0 %v1400
        %v1866 = vpop.f32.mrb[0].mxu0
        %v1867 = vadd.f32 0.0, %v1866
        %v1868 = vpop.f32.mrb[0].mxu0
        %1869 = vmatprep.mubr.f32.mxu0 0.0
        %1870 = vmatmul.mubr.f32.gmra.mrb[0].mxu0 %v1402
        %v1871 = vpop.f32.mrb[0].mxu0
        %v1872 = vadd.f32 0.0, %v1871
        %v1873 = vpop.f32.mrb[0].mxu0
        %1874 = vmatprep.mubr.f32.mxu0 0.0
        %1875 = vmatmul.mubr.f32.gmra.mrb[0].mxu0 %v1404
        %v1876 = vpop.f32.mrb[0].mxu0
        %v1877 = vadd.f32 0.0, %v1876
        %v1878 = vpop.f32.mrb[0].mxu0
        %1879 = vmatprep.mubr.f32.mxu0 0.0
        %1880 = vmatmul.mubr.f32.gmra.mrb[0].mxu0 %v1406
        %v1881 = vpop.f32.mrb[0].mxu0
        %v1882 = vadd.f32 0.0, %v1881
        %v1883 = vpop.f32.mrb[0].mxu0
        %1884 = vmatprep.mubr.f32.mxu0 0.0
        %1885 = vmatmul.mubr.f32.gmra.mrb[0].mxu0 %v1408
        %v1886 = vpop.f32.mrb[0].mxu0
        %v1887 = vadd.f32 0.0, %v1886
        %v1888 = vpop.f32.mrb[0].mxu0
        %1889 = vmatprep.mubr.f32.mxu0 0.0
        %1890 = vmatmul.mubr.f32.gmra.mrb[0].mxu0 %v1410
        %v1891 = vpop.f32.mrb[0].mxu0
        %v1892 = vadd.f32 0.0, %v1891
        %v1893 = vpop.f32.mrb[0].mxu0
        %1894 = vmatprep.mubr.f32.mxu0 0.0
        %1895 = vmatmul.mubr.f32.gmra.mrb[0].mxu0 %v1412
        %v1896 = vpop.f32.mrb[0].mxu0
        %v1897 = vadd.f32 0.0, %v1896
        %v1898 = vpop.f32.mrb[0].mxu0
        %1899 = vmatprep.mubr.f32.mxu0 0.0
        %1900 = vmatmul.mubr.f32.gmra.mrb[0].mxu0 %v1414
        %v1901 = vpop.f32.mrb[0].mxu0
        %v1902 = vadd.f32 0.0, %v1901
        %v1903 = vpop.f32.mrb[0].mxu0
        %1904 = vmatprep.mubr.f32.mxu0 0.0
        %1905 = vmatmul.mubr.f32.gmra.mrb[0].mxu0 %v1416
        %v1906 = vpop.f32.mrb[0].mxu0
        %v1907 = vadd.f32 0.0, %v1906
        %v1908 = vpop.f32.mrb[0].mxu0
        %1909 = vmatprep.mubr.f32.mxu0 0.0
        %1910 = vmatmul.mubr.f32.gmra.mrb[0].mxu0 %v1418
        %v1911 = vpop.f32.mrb[0].mxu0
        %v1912 = vadd.f32 0.0, %v1911
        %v1913 = vpop.f32.mrb[0].mxu0
        %1914 = vmatprep.mubr.f32.mxu0 0.0
        %1915 = vmatmul.mubr.f32.gmra.mrb[0].mxu0 %v1420
        %v1916 = vpop.f32.mrb[0].mxu0
        %v1917 = vadd.f32 0.0, %v1916
        %v1918 = vpop.f32.mrb[0].mxu0
        %1919 = vmatprep.mubr.f32.mxu0 0.0
        %1920 = vmatmul.mubr.f32.gmra.mrb[0].mxu0 %v1422
        %v1921 = vpop.f32.mrb[0].mxu0
        %v1922 = vadd.f32 0.0, %v1921
        %v1923 = vpop.f32.mrb[0].mxu0
        %1924 = vmatprep.mubr.f32.mxu0 0.0
        %1925 = vmatmul.mubr.f32.gmra.mrb[0].mxu0 %v1424
        %v1926 = vpop.f32.mrb[0].mxu0
        %v1927 = vadd.f32 0.0, %v1926
        %v1928 = vpop.f32.mrb[0].mxu0
        %1929 = vmatprep.mubr.f32.mxu0 0.0
        %1930 = vmatmul.mubr.f32.gmra.mrb[0].mxu0 %v1426
        %v1931 = vpop.f32.mrb[0].mxu0
        %v1932 = vadd.f32 0.0, %v1931
        %v1933 = vpop.f32.mrb[0].mxu0
        %1934 = vmatprep.mubr.f32.mxu0 0.0
        %1935 = vmatmul.mubr.f32.gmra.mrb[0].mxu0 %v1428
        %v1936 = vpop.f32.mrb[0].mxu0
        %v1937 = vadd.f32 0.0, %v1936
        %v1938 = vpop.f32.mrb[0].mxu0
        %1939 = vmatprep.mubr.f32.mxu0 0.0
        %1940 = vmatmul.mubr.f32.gmra.mrb[0].mxu0 %v1430
        %v1941 = vpop.f32.mrb[0].mxu0
        %v1942 = vadd.f32 0.0, %v1941
        %v1943 = vpop.f32.mrb[0].mxu0
        %1944 = vmatprep.mubr.f32.mxu0 0.0
        %1945 = vmatmul.mubr.f32.gmra.mrb[0].mxu0 %v1432
        %v1946 = vpop.f32.mrb[0].mxu0
        %v1947 = vadd.f32 0.0, %v1946
        %v1948 = vpop.f32.mrb[0].mxu0
        %1949 = vmatprep.mubr.f32.mxu0 0.0
        %1950 = vmatmul.mubr.f32.gmra.mrb[0].mxu0 %v1434
        %v1951 = vpop.f32.mrb[0].mxu0
        %v1952 = vadd.f32 0.0, %v1951
        %v1953 = vpop.f32.mrb[0].mxu0
        %1954 = vmatprep.mubr.f32.mxu0 0.0
        %1955 = vmatmul.mubr.f32.gmra.mrb[0].mxu0 %v1436
        %v1956 = vpop.f32.mrb[0].mxu0
        %v1957 = vadd.f32 0.0, %v1956
        %v1958 = vpop.f32.mrb[0].mxu0
        %1959 = vmatprep.mubr.f32.mxu0 0.0
        %1960 = vmatmul.mubr.f32.gmra.mrb[0].mxu0 %v1438
        %v1961 = vpop.f32.mrb[0].mxu0
        %v1962 = vadd.f32 0.0, %v1961
        %v1963 = vpop.f32.mrb[0].mxu0
        %1964 = vmatprep.mubr.f32.mxu0 0.0
        %1965 = vmatmul.mubr.f32.gmra.mrb[0].mxu0 %v1440
        %v1966 = vpop.f32.mrb[0].mxu0
        %v1967 = vadd.f32 0.0, %v1966
        %v1968 = vpop.f32.mrb[0].mxu0
        %1969 = vmatprep.mubr.f32.mxu0 0.0
        %1970 = vmatmul.mubr.f32.gmra.mrb[0].mxu0 %v1442
        %v1971 = vpop.f32.mrb[0].mxu0
        %v1972 = vadd.f32 0.0, %v1971
        %v1973 = vpop.f32.mrb[0].mxu0
        %1974 = vmatprep.mubr.f32.mxu0 0.0
        %1975 = vmatmul.mubr.f32.gmra.mrb[0].mxu0 %v1444
        %v1976 = vpop.f32.mrb[0].mxu0
        %v1977 = vadd.f32 0.0, %v1976
        %v1978 = vpop.f32.mrb[0].mxu0
        %1979 = vmatprep.mubr.f32.mxu0 0.0
        %1980 = vmatmul.mubr.f32.gmra.mrb[0].mxu0 %v1741
        %v1981 = vpop.f32.mrb[0].mxu0
        %v1982 = vadd.f32 0.0, %v1981
        %v1983 = vpop.f32.mrb[0].mxu0
        %1984 = vmatprep.mubr.f32.mxu0 0.0
        %1985 = vmatmul.mubr.f32.gmra.mrb[0].mxu0 %v1743
        %v1986 = vpop.f32.mrb[0].mxu0
        %v1987 = vadd.f32 0.0, %v1986
        %v1988 = vpop.f32.mrb[0].mxu0
        %1989 = vmatprep.mubr.f32.mxu0 0.0
        %1990 = vmatmul.mubr.f32.gmra.mrb[0].mxu0 %v1745
        %v1991 = vpop.f32.mrb[0].mxu0
        %v1992 = vadd.f32 0.0, %v1991
        %v1993 = vpop.f32.mrb[0].mxu0
        %1994 = vdwg.mxu0
        %v1995 = vadd.f32 %v1696, %v1817
        %v1996 = vadd.f32 %v1697, %v1822
        %v1997 = vadd.f32 %v1698, %v1827
        %v1998 = vadd.f32 %v1699, %v1832
        %v1999 = vadd.f32 %v1700, %v1837
        %v2000 = vadd.f32 %v1701, %v1842
        %v2001 = vadd.f32 %v1702, %v1847
        %v2002 = vadd.f32 %v1703, %v1852
        %v2003 = vadd.f32 %v1704, %v1857
        %v2004 = vadd.f32 %v1705, %v1862
        %v2005 = vadd.f32 %v1706, %v1867
        %v2006 = vadd.f32 %v1707, %v1872
        %v2007 = vadd.f32 %v1708, %v1877
        %v2008 = vadd.f32 %v1709, %v1882
        %v2009 = vadd.f32 %v1710, %v1887
        %v2010 = vadd.f32 %v1711, %v1892
        %v2011 = vadd.f32 %v1712, %v1897
        %v2012 = vadd.f32 %v1713, %v1902
        %v2013 = vadd.f32 %v1714, %v1907
        %v2014 = vadd.f32 %v1715, %v1912
        %v2015 = vadd.f32 %v1716, %v1917
        %v2016 = vadd.f32 %v1717, %v1922
        %v2017 = vadd.f32 %v1718, %v1927
        %v2018 = vadd.f32 %v1719, %v1932
        %v2019 = vadd.f32 %v1720, %v1937
        %v2020 = vadd.f32 %v1721, %v1942
        %v2021 = vadd.f32 %v1722, %v1947
        %v2022 = vadd.f32 %v1723, %v1952
        %v2023 = vadd.f32 %v1724, %v1957
        %v2024 = vadd.f32 %v1725, %v1962
        %v2025 = vadd.f32 %v1726, %v1967
        %v2026 = vadd.f32 %v1727, %v1972
        %v2027 = vadd.f32 %v1728, %v1977
        %v2028 = vadd.f32 %v1729, %v1982
        %v2029 = vadd.f32 %v1730, %v1987
        %v2030 = vadd.f32 %v1731, %v1992
        %s2031 = scalar_lea.vmem %s2, 8
        %v2032 = vld [vmem:[%s2031] sm:$0x3]
        %v2033 = vunpack.c.l.bf16 %v2032
        %vm2035 = vcmask 1044480
        %v2036 = vrot.slane %v507, 3
        %v2037 = vrot.slane %v508, 3
        %v2038 = vsel %vm2035, %v2036, %v2037
        %v2039 = vrot.slane %v509, 3
        %v2040 = vsel %vm2035, %v2037, %v2039
        %v2041 = vrot.slane %v510, 3
        %v2042 = vsel %vm2035, %v2039, %v2041
        %v2043 = vrot.slane %v511, 3
        %v2044 = vsel %vm2035, %v2041, %v2043
        %v2045 = vrot.slane %v512, 3
        %v2046 = vsel %vm2035, %v2043, %v2045
        %v2047 = vrot.slane %v513, 3
        %v2048 = vsel %vm2035, %v2045, %v2047
        %v2049 = vrot.slane %v514, 3
        %v2050 = vsel %vm2035, %v2047, %v2049
        %v2051 = vrot.slane %v515, 3
        %v2052 = vsel %vm2035, %v2049, %v2051
        %v2053 = vrot.slane %v516, 3
        %v2054 = vsel %vm2035, %v2051, %v2053
        %v2055 = vrot.slane %v517, 3
        %v2056 = vsel %vm2035, %v2053, %v2055
        %v2057 = vrot.slane %v518, 3
        %v2058 = vsel %vm2035, %v2055, %v2057
        %v2059 = vrot.slane %v519, 3
        %v2060 = vsel %vm2035, %v2057, %v2059
        %v2061 = vrot.slane %v520, 3
        %v2062 = vsel %vm2035, %v2059, %v2061
        %v2063 = vrot.slane %v521, 3
        %v2064 = vsel %vm2035, %v2061, %v2063
        %v2065 = vrot.slane %v522, 3
        %v2066 = vsel %vm2035, %v2063, %v2065
        %v2067 = vrot.slane %v523, 3
        %v2068 = vsel %vm2035, %v2065, %v2067
        %v2069 = vrot.slane %v524, 3
        %v2070 = vsel %vm2035, %v2067, %v2069
        %v2071 = vrot.slane %v525, 3
        %v2072 = vsel %vm2035, %v2069, %v2071
        %v2073 = vrot.slane %v526, 3
        %v2074 = vsel %vm2035, %v2071, %v2073
        %v2075 = vrot.slane %v527, 3
        %v2076 = vsel %vm2035, %v2073, %v2075
        %v2077 = vrot.slane %v528, 3
        %v2078 = vsel %vm2035, %v2075, %v2077
        %v2079 = vrot.slane %v529, 3
        %v2080 = vsel %vm2035, %v2077, %v2079
        %v2081 = vrot.slane %v530, 3
        %v2082 = vsel %vm2035, %v2079, %v2081
        %v2083 = vrot.slane %v531, 3
        %v2084 = vsel %vm2035, %v2081, %v2083
        %v2085 = vrot.slane %v532, 3
        %v2086 = vsel %vm2035, %v2083, %v2085
        %v2087 = vrot.slane %v533, 3
        %v2088 = vsel %vm2035, %v2085, %v2087
        %v2089 = vrot.slane %v534, 3
        %v2090 = vsel %vm2035, %v2087, %v2089
        %v2091 = vrot.slane %v535, 3
        %v2092 = vsel %vm2035, %v2089, %v2091
        %v2093 = vrot.slane %v536, 3
        %v2094 = vsel %vm2035, %v2091, %v2093
        %v2095 = vrot.slane %v537, 3
        %v2096 = vsel %vm2035, %v2093, %v2095
        %v2097 = vrot.slane %v538, 3
        %v2098 = vsel %vm2035, %v2095, %v2097
        %v2099 = vrot.slane %v539, 3
        %v2100 = vsel %vm2035, %v2097, %v2099
        %v2101 = vrot.slane %v540, 3
        %v2102 = vsel %vm2035, %v2099, %v2101
        %v2103 = vrot.slane %v541, 3
        %v2104 = vsel %vm2035, %v2101, %v2103
        %v2105 = vrot.slane %v542, 3
        %v2106 = vsel %vm2035, %v2103, %v2105
        %v2107 = vrot.slane %v543, 3
        %v2108 = vsel %vm2035, %v2105, %v2107
        %v2109 = vsel %vm659, %v2038, 0
        %v2111 = vsel %vm659, %v2040, 0
        %v2113 = vsel %vm659, %v2042, 0
        %v2115 = vsel %vm659, %v2044, 0
        %v2117 = vsel %vm659, %v2046, 0
        %v2119 = vsel %vm659, %v2048, 0
        %v2121 = vsel %vm659, %v2050, 0
        %v2123 = vsel %vm659, %v2052, 0
        %v2125 = vsel %vm659, %v2054, 0
        %v2127 = vsel %vm659, %v2056, 0
        %v2129 = vsel %vm659, %v2058, 0
        %v2131 = vsel %vm659, %v2060, 0
        %v2133 = vsel %vm659, %v2062, 0
        %v2135 = vsel %vm659, %v2064, 0
        %v2137 = vsel %vm659, %v2066, 0
        %v2139 = vsel %vm659, %v2068, 0
        %v2141 = vsel %vm659, %v2070, 0
        %v2143 = vsel %vm659, %v2072, 0
        %v2145 = vsel %vm659, %v2074, 0
        %v2147 = vsel %vm659, %v2076, 0
        %v2149 = vsel %vm659, %v2078, 0
        %v2151 = vsel %vm659, %v2080, 0
        %v2153 = vsel %vm659, %v2082, 0
        %v2155 = vsel %vm659, %v2084, 0
        %v2157 = vsel %vm659, %v2086, 0
        %v2159 = vsel %vm659, %v2088, 0
        %v2161 = vsel %vm659, %v2090, 0
        %v2163 = vsel %vm659, %v2092, 0
        %v2165 = vsel %vm659, %v2094, 0
        %v2167 = vsel %vm659, %v2096, 0
        %v2169 = vsel %vm659, %v2098, 0
        %v2171 = vsel %vm659, %v2100, 0
        %v2173 = vsel %vm659, %v2102, 0
        %v2175 = vsel %vm659, %v2104, 0
        %v2177 = vsel %vm659, %v2106, 0
        %v2179 = vsel %vm659, %v2108, 0
        %v2182 = vsel %vm732, %v2033, 0
        %2184 = vmatprep.subr.mxu0 0.0
        %2185 = vmatpush1.msra.mxu0 %v2182
        %2186 = vmatprep.subr.mxu0 0.0
        %2187 = vmatpush1.msra.mxu0 0.0
        %2188 = vmatprep.subr.mxu0 0.0
        %2189 = vmatpush1.msra.mxu0 0.0
        %2190 = vmatprep.subr.mxu0 0.0
        %2191 = vmatpush1.msra.mxu0 0.0
        %2192 = vmatprep.subr.mxu0 0.0
        %2193 = vmatpush1.msra.mxu0 0.0
        %2194 = vmatprep.subr.mxu0 0.0
        %2195 = vmatpush1.msra.mxu0 0.0
        %2196 = vmatprep.subr.mxu0 0.0
        %2197 = vmatpush1.msra.mxu0 0.0
        %2198 = vmatprep.subr.mxu0 0.0
        %2199 = vmatpush1.msra.mxu0 0.0
        %2200 = vmatprep.subr.mxu0 0.0
        %2201 = vmatpush1.msra.mxu0 0.0
        %2202 = vmatprep.subr.mxu0 0.0
        %2203 = vmatpush1.msra.mxu0 0.0
        %2204 = vmatprep.subr.mxu0 0.0
        %2205 = vmatpush1.msra.mxu0 0.0
        %2206 = vmatprep.subr.mxu0 0.0
        %2207 = vmatpush1.msra.mxu0 0.0
        %2208 = vmatprep.subr.mxu0 0.0
        %2209 = vmatpush1.msra.mxu0 0.0
        %2210 = vmatprep.subr.mxu0 0.0
        %2211 = vmatpush1.msra.mxu0 0.0
        %2212 = vmatprep.subr.mxu0 0.0
        %2213 = vmatpush1.msra.mxu0 0.0
        %2214 = vmatprep.subr.mxu0 0.0
        %2215 = vmatpush1.msra.mxu0 0.0
        %2216 = vmatprep.subr.mxu0 0.0
        %2217 = vmatpush1.msra.mxu0 0.0
        %2218 = vmatprep.subr.mxu0 0.0
        %2219 = vmatpush1.msra.mxu0 0.0
        %2220 = vmatprep.subr.mxu0 0.0
        %2221 = vmatpush1.msra.mxu0 0.0
        %2222 = vmatprep.subr.mxu0 0.0
        %2223 = vmatpush1.msra.mxu0 0.0
        %2224 = vmatprep.subr.mxu0 0.0
        %2225 = vmatpush1.msra.mxu0 0.0
        %2226 = vmatprep.subr.mxu0 0.0
        %2227 = vmatpush1.msra.mxu0 0.0
        %2228 = vmatprep.subr.mxu0 0.0
        %2229 = vmatpush1.msra.mxu0 0.0
        %2230 = vmatprep.subr.mxu0 0.0
        %2231 = vmatpush1.msra.mxu0 0.0
        %2232 = vmatprep.subr.mxu0 0.0
        %2233 = vmatpush1.msra.mxu0 0.0
        %2234 = vmatprep.subr.mxu0 0.0
        %2235 = vmatpush1.msra.mxu0 0.0
        %2236 = vmatprep.subr.mxu0 0.0
        %2237 = vmatpush1.msra.mxu0 0.0
        %2238 = vmatprep.subr.mxu0 0.0
        %2239 = vmatpush1.msra.mxu0 0.0
        %2240 = vmatprep.subr.mxu0 0.0
        %2241 = vmatpush1.msra.mxu0 0.0
        %2242 = vmatprep.subr.mxu0 0.0
        %2243 = vmatpush1.msra.mxu0 0.0
        %2244 = vmatprep.subr.mxu0 0.0
        %2245 = vmatpush1.msra.mxu0 0.0
        %2246 = vmatprep.subr.mxu0 0.0
        %2247 = vmatpush1.msra.mxu0 0.0
        %2248 = vmatprep.mubr.f32.mxu0 0.0
        %2249 = vmatmul.mubr.f32.gmra.mrb[0].mxu0 %v2109
        %v2250 = vpop.f32.mrb[0].mxu0
        %v2251 = vadd.f32 0.0, %v2250
        %v2252 = vpop.f32.mrb[0].mxu0
        %2253 = vmatprep.mubr.f32.mxu0 0.0
        %2254 = vmatmul.mubr.f32.gmra.mrb[0].mxu0 %v2111
        %v2255 = vpop.f32.mrb[0].mxu0
        %v2256 = vadd.f32 0.0, %v2255
        %v2257 = vpop.f32.mrb[0].mxu0
        %2258 = vmatprep.mubr.f32.mxu0 0.0
        %2259 = vmatmul.mubr.f32.gmra.mrb[0].mxu0 %v2113
        %v2260 = vpop.f32.mrb[0].mxu0
        %v2261 = vadd.f32 0.0, %v2260
        %v2262 = vpop.f32.mrb[0].mxu0
        %2263 = vmatprep.mubr.f32.mxu0 0.0
        %2264 = vmatmul.mubr.f32.gmra.mrb[0].mxu0 %v2115
        %v2265 = vpop.f32.mrb[0].mxu0
        %v2266 = vadd.f32 0.0, %v2265
        %v2267 = vpop.f32.mrb[0].mxu0
        %2268 = vmatprep.mubr.f32.mxu0 0.0
        %2269 = vmatmul.mubr.f32.gmra.mrb[0].mxu0 %v2117
        %v2270 = vpop.f32.mrb[0].mxu0
        %v2271 = vadd.f32 0.0, %v2270
        %v2272 = vpop.f32.mrb[0].mxu0
        %2273 = vmatprep.mubr.f32.mxu0 0.0
        %2274 = vmatmul.mubr.f32.gmra.mrb[0].mxu0 %v2119
        %v2275 = vpop.f32.mrb[0].mxu0
        %v2276 = vadd.f32 0.0, %v2275
        %v2277 = vpop.f32.mrb[0].mxu0
        %2278 = vmatprep.mubr.f32.mxu0 0.0
        %2279 = vmatmul.mubr.f32.gmra.mrb[0].mxu0 %v2121
        %v2280 = vpop.f32.mrb[0].mxu0
        %v2281 = vadd.f32 0.0, %v2280
        %v2282 = vpop.f32.mrb[0].mxu0
        %2283 = vmatprep.mubr.f32.mxu0 0.0
        %2284 = vmatmul.mubr.f32.gmra.mrb[0].mxu0 %v2123
        %v2285 = vpop.f32.mrb[0].mxu0
        %v2286 = vadd.f32 0.0, %v2285
        %v2287 = vpop.f32.mrb[0].mxu0
        %2288 = vmatprep.mubr.f32.mxu0 0.0
        %2289 = vmatmul.mubr.f32.gmra.mrb[0].mxu0 %v2125
        %v2290 = vpop.f32.mrb[0].mxu0
        %v2291 = vadd.f32 0.0, %v2290
        %v2292 = vpop.f32.mrb[0].mxu0
        %2293 = vmatprep.mubr.f32.mxu0 0.0
        %2294 = vmatmul.mubr.f32.gmra.mrb[0].mxu0 %v2127
        %v2295 = vpop.f32.mrb[0].mxu0
        %v2296 = vadd.f32 0.0, %v2295
        %v2297 = vpop.f32.mrb[0].mxu0
        %2298 = vmatprep.mubr.f32.mxu0 0.0
        %2299 = vmatmul.mubr.f32.gmra.mrb[0].mxu0 %v2129
        %v2300 = vpop.f32.mrb[0].mxu0
        %v2301 = vadd.f32 0.0, %v2300
        %v2302 = vpop.f32.mrb[0].mxu0
        %2303 = vmatprep.mubr.f32.mxu0 0.0
        %2304 = vmatmul.mubr.f32.gmra.mrb[0].mxu0 %v2131
        %v2305 = vpop.f32.mrb[0].mxu0
        %v2306 = vadd.f32 0.0, %v2305
        %v2307 = vpop.f32.mrb[0].mxu0
        %2308 = vmatprep.mubr.f32.mxu0 0.0
        %2309 = vmatmul.mubr.f32.gmra.mrb[0].mxu0 %v2133
        %v2310 = vpop.f32.mrb[0].mxu0
        %v2311 = vadd.f32 0.0, %v2310
        %v2312 = vpop.f32.mrb[0].mxu0
        %2313 = vmatprep.mubr.f32.mxu0 0.0
        %2314 = vmatmul.mubr.f32.gmra.mrb[0].mxu0 %v2135
        %v2315 = vpop.f32.mrb[0].mxu0
        %v2316 = vadd.f32 0.0, %v2315
        %v2317 = vpop.f32.mrb[0].mxu0
        %2318 = vmatprep.mubr.f32.mxu0 0.0
        %2319 = vmatmul.mubr.f32.gmra.mrb[0].mxu0 %v2137
        %v2320 = vpop.f32.mrb[0].mxu0
        %v2321 = vadd.f32 0.0, %v2320
        %v2322 = vpop.f32.mrb[0].mxu0
        %2323 = vmatprep.mubr.f32.mxu0 0.0
        %2324 = vmatmul.mubr.f32.gmra.mrb[0].mxu0 %v2139
        %v2325 = vpop.f32.mrb[0].mxu0
        %v2326 = vadd.f32 0.0, %v2325
        %v2327 = vpop.f32.mrb[0].mxu0
        %2328 = vmatprep.mubr.f32.mxu0 0.0
        %2329 = vmatmul.mubr.f32.gmra.mrb[0].mxu0 %v2141
        %v2330 = vpop.f32.mrb[0].mxu0
        %v2331 = vadd.f32 0.0, %v2330
        %v2332 = vpop.f32.mrb[0].mxu0
        %2333 = vmatprep.mubr.f32.mxu0 0.0
        %2334 = vmatmul.mubr.f32.gmra.mrb[0].mxu0 %v2143
        %v2335 = vpop.f32.mrb[0].mxu0
        %v2336 = vadd.f32 0.0, %v2335
        %v2337 = vpop.f32.mrb[0].mxu0
        %2338 = vmatprep.mubr.f32.mxu0 0.0
        %2339 = vmatmul.mubr.f32.gmra.mrb[0].mxu0 %v2145
        %v2340 = vpop.f32.mrb[0].mxu0
        %v2341 = vadd.f32 0.0, %v2340
        %v2342 = vpop.f32.mrb[0].mxu0
        %2343 = vmatprep.mubr.f32.mxu0 0.0
        %2344 = vmatmul.mubr.f32.gmra.mrb[0].mxu0 %v2147
        %v2345 = vpop.f32.mrb[0].mxu0
        %v2346 = vadd.f32 0.0, %v2345
        %v2347 = vpop.f32.mrb[0].mxu0
        %2348 = vmatprep.mubr.f32.mxu0 0.0
        %2349 = vmatmul.mubr.f32.gmra.mrb[0].mxu0 %v2149
        %v2350 = vpop.f32.mrb[0].mxu0
        %v2351 = vadd.f32 0.0, %v2350
        %v2352 = vpop.f32.mrb[0].mxu0
        %2353 = vmatprep.mubr.f32.mxu0 0.0
        %2354 = vmatmul.mubr.f32.gmra.mrb[0].mxu0 %v2151
        %v2355 = vpop.f32.mrb[0].mxu0
        %v2356 = vadd.f32 0.0, %v2355
        %v2357 = vpop.f32.mrb[0].mxu0
        %2358 = vmatprep.mubr.f32.mxu0 0.0
        %2359 = vmatmul.mubr.f32.gmra.mrb[0].mxu0 %v2153
        %v2360 = vpop.f32.mrb[0].mxu0
        %v2361 = vadd.f32 0.0, %v2360
        %v2362 = vpop.f32.mrb[0].mxu0
        %2363 = vmatprep.mubr.f32.mxu0 0.0
        %2364 = vmatmul.mubr.f32.gmra.mrb[0].mxu0 %v2155
        %v2365 = vpop.f32.mrb[0].mxu0
        %v2366 = vadd.f32 0.0, %v2365
        %v2367 = vpop.f32.mrb[0].mxu0
        %2368 = vmatprep.mubr.f32.mxu0 0.0
        %2369 = vmatmul.mubr.f32.gmra.mrb[0].mxu0 %v2157
        %v2370 = vpop.f32.mrb[0].mxu0
        %v2371 = vadd.f32 0.0, %v2370
        %v2372 = vpop.f32.mrb[0].mxu0
        %2373 = vmatprep.mubr.f32.mxu0 0.0
        %2374 = vmatmul.mubr.f32.gmra.mrb[0].mxu0 %v2159
        %v2375 = vpop.f32.mrb[0].mxu0
        %v2376 = vadd.f32 0.0, %v2375
        %v2377 = vpop.f32.mrb[0].mxu0
        %2378 = vmatprep.mubr.f32.mxu0 0.0
        %2379 = vmatmul.mubr.f32.gmra.mrb[0].mxu0 %v2161
        %v2380 = vpop.f32.mrb[0].mxu0
        %v2381 = vadd.f32 0.0, %v2380
        %v2382 = vpop.f32.mrb[0].mxu0
        %2383 = vmatprep.mubr.f32.mxu0 0.0
        %2384 = vmatmul.mubr.f32.gmra.mrb[0].mxu0 %v2163
        %v2385 = vpop.f32.mrb[0].mxu0
        %v2386 = vadd.f32 0.0, %v2385
        %v2387 = vpop.f32.mrb[0].mxu0
        %2388 = vmatprep.mubr.f32.mxu0 0.0
        %2389 = vmatmul.mubr.f32.gmra.mrb[0].mxu0 %v2165
        %v2390 = vpop.f32.mrb[0].mxu0
        %v2391 = vadd.f32 0.0, %v2390
        %v2392 = vpop.f32.mrb[0].mxu0
        %2393 = vmatprep.mubr.f32.mxu0 0.0
        %2394 = vmatmul.mubr.f32.gmra.mrb[0].mxu0 %v2167
        %v2395 = vpop.f32.mrb[0].mxu0
        %v2396 = vadd.f32 0.0, %v2395
        %v2397 = vpop.f32.mrb[0].mxu0
        %2398 = vmatprep.mubr.f32.mxu0 0.0
        %2399 = vmatmul.mubr.f32.gmra.mrb[0].mxu0 %v2169
        %v2400 = vpop.f32.mrb[0].mxu0
        %v2401 = vadd.f32 0.0, %v2400
        %v2402 = vpop.f32.mrb[0].mxu0
        %2403 = vmatprep.mubr.f32.mxu0 0.0
        %2404 = vmatmul.mubr.f32.gmra.mrb[0].mxu0 %v2171
        %v2405 = vpop.f32.mrb[0].mxu0
        %v2406 = vadd.f32 0.0, %v2405
        %v2407 = vpop.f32.mrb[0].mxu0
        %2408 = vmatprep.mubr.f32.mxu0 0.0
        %2409 = vmatmul.mubr.f32.gmra.mrb[0].mxu0 %v2173
        %v2410 = vpop.f32.mrb[0].mxu0
        %v2411 = vadd.f32 0.0, %v2410
        %v2412 = vpop.f32.mrb[0].mxu0
        %2413 = vmatprep.mubr.f32.mxu0 0.0
        %2414 = vmatmul.mubr.f32.gmra.mrb[0].mxu0 %v2175
        %v2415 = vpop.f32.mrb[0].mxu0
        %v2416 = vadd.f32 0.0, %v2415
        %v2417 = vpop.f32.mrb[0].mxu0
        %2418 = vmatprep.mubr.f32.mxu0 0.0
        %2419 = vmatmul.mubr.f32.gmra.mrb[0].mxu0 %v2177
        %v2420 = vpop.f32.mrb[0].mxu0
        %v2421 = vadd.f32 0.0, %v2420
        %v2422 = vpop.f32.mrb[0].mxu0
        %2423 = vmatprep.mubr.f32.mxu0 0.0
        %2424 = vmatmul.mubr.f32.gmra.mrb[0].mxu0 %v2179
        %v2425 = vpop.f32.mrb[0].mxu0
        %v2426 = vadd.f32 0.0, %v2425
        %v2427 = vpop.f32.mrb[0].mxu0
        %2428 = vdwg.mxu0
        %v2429 = vadd.f32 %v1995, %v2251
        %v2430 = vadd.f32 %v1996, %v2256
        %v2431 = vadd.f32 %v1997, %v2261
        %v2432 = vadd.f32 %v1998, %v2266
        %v2433 = vadd.f32 %v1999, %v2271
        %v2434 = vadd.f32 %v2000, %v2276
        %v2435 = vadd.f32 %v2001, %v2281
        %v2436 = vadd.f32 %v2002, %v2286
        %v2437 = vadd.f32 %v2003, %v2291
        %v2438 = vadd.f32 %v2004, %v2296
        %v2439 = vadd.f32 %v2005, %v2301
        %v2440 = vadd.f32 %v2006, %v2306
        %v2441 = vadd.f32 %v2007, %v2311
        %v2442 = vadd.f32 %v2008, %v2316
        %v2443 = vadd.f32 %v2009, %v2321
        %v2444 = vadd.f32 %v2010, %v2326
        %v2445 = vadd.f32 %v2011, %v2331
        %v2446 = vadd.f32 %v2012, %v2336
        %v2447 = vadd.f32 %v2013, %v2341
        %v2448 = vadd.f32 %v2014, %v2346
        %v2449 = vadd.f32 %v2015, %v2351
        %v2450 = vadd.f32 %v2016, %v2356
        %v2451 = vadd.f32 %v2017, %v2361
        %v2452 = vadd.f32 %v2018, %v2366
        %v2453 = vadd.f32 %v2019, %v2371
        %v2454 = vadd.f32 %v2020, %v2376
        %v2455 = vadd.f32 %v2021, %v2381
        %v2456 = vadd.f32 %v2022, %v2386
        %v2457 = vadd.f32 %v2023, %v2391
        %v2458 = vadd.f32 %v2024, %v2396
        %v2459 = vadd.f32 %v2025, %v2401
        %v2460 = vadd.f32 %v2026, %v2406
        %v2461 = vadd.f32 %v2027, %v2411
        %v2462 = vadd.f32 %v2028, %v2416
        %v2463 = vadd.f32 %v2029, %v2421
        %v2464 = vadd.f32 %v2030, %v2426
        %s2465 = scalar_lea.vmem %s2, 10
        %v2466 = vld [vmem:[%s2465] sm:$0x3]
        %v2467 = vunpack.c.l.bf16 %v2466
        %v2468 = vrot.slane %v507, 4
        %v2469 = vrot.slane %v508, 4
        %v2470 = vsel %vm732, %v2468, %v2469
        %v2471 = vrot.slane %v509, 4
        %v2472 = vsel %vm732, %v2469, %v2471
        %v2473 = vrot.slane %v510, 4
        %v2474 = vsel %vm732, %v2471, %v2473
        %v2475 = vrot.slane %v511, 4
        %v2476 = vsel %vm732, %v2473, %v2475
        %v2477 = vrot.slane %v512, 4
        %v2478 = vsel %vm732, %v2475, %v2477
        %v2479 = vrot.slane %v513, 4
        %v2480 = vsel %vm732, %v2477, %v2479
        %v2481 = vrot.slane %v514, 4
        %v2482 = vsel %vm732, %v2479, %v2481
        %v2483 = vrot.slane %v515, 4
        %v2484 = vsel %vm732, %v2481, %v2483
        %v2485 = vrot.slane %v516, 4
        %v2486 = vsel %vm732, %v2483, %v2485
        %v2487 = vrot.slane %v517, 4
        %v2488 = vsel %vm732, %v2485, %v2487
        %v2489 = vrot.slane %v518, 4
        %v2490 = vsel %vm732, %v2487, %v2489
        %v2491 = vrot.slane %v519, 4
        %v2492 = vsel %vm732, %v2489, %v2491
        %v2493 = vrot.slane %v520, 4
        %v2494 = vsel %vm732, %v2491, %v2493
        %v2495 = vrot.slane %v521, 4
        %v2496 = vsel %vm732, %v2493, %v2495
        %v2497 = vrot.slane %v522, 4
        %v2498 = vsel %vm732, %v2495, %v2497
        %v2499 = vrot.slane %v523, 4
        %v2500 = vsel %vm732, %v2497, %v2499
        %v2501 = vrot.slane %v524, 4
        %v2502 = vsel %vm732, %v2499, %v2501
        %v2503 = vrot.slane %v525, 4
        %v2504 = vsel %vm732, %v2501, %v2503
        %v2505 = vrot.slane %v526, 4
        %v2506 = vsel %vm732, %v2503, %v2505
        %v2507 = vrot.slane %v527, 4
        %v2508 = vsel %vm732, %v2505, %v2507
        %v2509 = vrot.slane %v528, 4
        %v2510 = vsel %vm732, %v2507, %v2509
        %v2511 = vrot.slane %v529, 4
        %v2512 = vsel %vm732, %v2509, %v2511
        %v2513 = vrot.slane %v530, 4
        %v2514 = vsel %vm732, %v2511, %v2513
        %v2515 = vrot.slane %v531, 4
        %v2516 = vsel %vm732, %v2513, %v2515
        %v2517 = vrot.slane %v532, 4
        %v2518 = vsel %vm732, %v2515, %v2517
        %v2519 = vrot.slane %v533, 4
        %v2520 = vsel %vm732, %v2517, %v2519
        %v2521 = vrot.slane %v534, 4
        %v2522 = vsel %vm732, %v2519, %v2521
        %v2523 = vrot.slane %v535, 4
        %v2524 = vsel %vm732, %v2521, %v2523
        %v2525 = vrot.slane %v536, 4
        %v2526 = vsel %vm732, %v2523, %v2525
        %v2527 = vrot.slane %v537, 4
        %v2528 = vsel %vm732, %v2525, %v2527
        %v2529 = vrot.slane %v538, 4
        %v2530 = vsel %vm732, %v2527, %v2529
        %v2531 = vrot.slane %v539, 4
        %v2532 = vsel %vm732, %v2529, %v2531
        %v2533 = vrot.slane %v540, 4
        %v2534 = vsel %vm732, %v2531, %v2533
        %v2535 = vrot.slane %v541, 4
        %v2536 = vsel %vm732, %v2533, %v2535
        %v2537 = vrot.slane %v542, 4
        %v2538 = vsel %vm732, %v2535, %v2537
        %v2539 = vrot.slane %v543, 4
        %v2540 = vsel %vm732, %v2537, %v2539
        %v2541 = vsel %vm659, %v2470, 0
        %v2543 = vsel %vm659, %v2472, 0
        %v2545 = vsel %vm659, %v2474, 0
        %v2547 = vsel %vm659, %v2476, 0
        %v2549 = vsel %vm659, %v2478, 0
        %v2551 = vsel %vm659, %v2480, 0
        %v2553 = vsel %vm659, %v2482, 0
        %v2555 = vsel %vm659, %v2484, 0
        %v2557 = vsel %vm659, %v2486, 0
        %v2559 = vsel %vm659, %v2488, 0
        %v2561 = vsel %vm659, %v2490, 0
        %v2563 = vsel %vm659, %v2492, 0
        %v2565 = vsel %vm659, %v2494, 0
        %v2567 = vsel %vm659, %v2496, 0
        %v2569 = vsel %vm659, %v2498, 0
        %v2571 = vsel %vm659, %v2500, 0
        %v2573 = vsel %vm659, %v2502, 0
        %v2575 = vsel %vm659, %v2504, 0
        %v2577 = vsel %vm659, %v2506, 0
        %v2579 = vsel %vm659, %v2508, 0
        %v2581 = vsel %vm659, %v2510, 0
        %v2583 = vsel %vm659, %v2512, 0
        %v2585 = vsel %vm659, %v2514, 0
        %v2587 = vsel %vm659, %v2516, 0
        %v2589 = vsel %vm659, %v2518, 0
        %v2591 = vsel %vm659, %v2520, 0
        %v2593 = vsel %vm659, %v2522, 0
        %v2595 = vsel %vm659, %v2524, 0
        %v2597 = vsel %vm659, %v2526, 0
        %v2599 = vsel %vm659, %v2528, 0
        %v2601 = vsel %vm659, %v2530, 0
        %v2603 = vsel %vm659, %v2532, 0
        %v2605 = vsel %vm659, %v2534, 0
        %v2607 = vsel %vm659, %v2536, 0
        %v2609 = vsel %vm659, %v2538, 0
        %v2611 = vsel %vm659, %v2540, 0
        %v2614 = vsel %vm732, %v2467, 0
        %2616 = vmatprep.subr.mxu0 0.0
        %2617 = vmatpush1.msra.mxu0 %v2614
        %2618 = vmatprep.subr.mxu0 0.0
        %2619 = vmatpush1.msra.mxu0 0.0
        %2620 = vmatprep.subr.mxu0 0.0
        %2621 = vmatpush1.msra.mxu0 0.0
        %2622 = vmatprep.subr.mxu0 0.0
        %2623 = vmatpush1.msra.mxu0 0.0
        %2624 = vmatprep.subr.mxu0 0.0
        %2625 = vmatpush1.msra.mxu0 0.0
        %2626 = vmatprep.subr.mxu0 0.0
        %2627 = vmatpush1.msra.mxu0 0.0
        %2628 = vmatprep.subr.mxu0 0.0
        %2629 = vmatpush1.msra.mxu0 0.0
        %2630 = vmatprep.subr.mxu0 0.0
        %2631 = vmatpush1.msra.mxu0 0.0
        %2632 = vmatprep.subr.mxu0 0.0
        %2633 = vmatpush1.msra.mxu0 0.0
        %2634 = vmatprep.subr.mxu0 0.0
        %2635 = vmatpush1.msra.mxu0 0.0
        %2636 = vmatprep.subr.mxu0 0.0
        %2637 = vmatpush1.msra.mxu0 0.0
        %2638 = vmatprep.subr.mxu0 0.0
        %2639 = vmatpush1.msra.mxu0 0.0
        %2640 = vmatprep.subr.mxu0 0.0
        %2641 = vmatpush1.msra.mxu0 0.0
        %2642 = vmatprep.subr.mxu0 0.0
        %2643 = vmatpush1.msra.mxu0 0.0
        %2644 = vmatprep.subr.mxu0 0.0
        %2645 = vmatpush1.msra.mxu0 0.0
        %2646 = vmatprep.subr.mxu0 0.0
        %2647 = vmatpush1.msra.mxu0 0.0
        %2648 = vmatprep.subr.mxu0 0.0
        %2649 = vmatpush1.msra.mxu0 0.0
        %2650 = vmatprep.subr.mxu0 0.0
        %2651 = vmatpush1.msra.mxu0 0.0
        %2652 = vmatprep.subr.mxu0 0.0
        %2653 = vmatpush1.msra.mxu0 0.0
        %2654 = vmatprep.subr.mxu0 0.0
        %2655 = vmatpush1.msra.mxu0 0.0
        %2656 = vmatprep.subr.mxu0 0.0
        %2657 = vmatpush1.msra.mxu0 0.0
        %2658 = vmatprep.subr.mxu0 0.0
        %2659 = vmatpush1.msra.mxu0 0.0
        %2660 = vmatprep.subr.mxu0 0.0
        %2661 = vmatpush1.msra.mxu0 0.0
        %2662 = vmatprep.subr.mxu0 0.0
        %2663 = vmatpush1.msra.mxu0 0.0
        %2664 = vmatprep.subr.mxu0 0.0
        %2665 = vmatpush1.msra.mxu0 0.0
        %2666 = vmatprep.subr.mxu0 0.0
        %2667 = vmatpush1.msra.mxu0 0.0
        %2668 = vmatprep.subr.mxu0 0.0
        %2669 = vmatpush1.msra.mxu0 0.0
        %2670 = vmatprep.subr.mxu0 0.0
        %2671 = vmatpush1.msra.mxu0 0.0
        %2672 = vmatprep.subr.mxu0 0.0
        %2673 = vmatpush1.msra.mxu0 0.0
        %2674 = vmatprep.subr.mxu0 0.0
        %2675 = vmatpush1.msra.mxu0 0.0
        %2676 = vmatprep.subr.mxu0 0.0
        %2677 = vmatpush1.msra.mxu0 0.0
        %2678 = vmatprep.subr.mxu0 0.0
        %2679 = vmatpush1.msra.mxu0 0.0
        %2680 = vmatprep.mubr.f32.mxu0 0.0
        %2681 = vmatmul.mubr.f32.gmra.mrb[0].mxu0 %v2541
        %v2682 = vpop.f32.mrb[0].mxu0
        %v2683 = vadd.f32 0.0, %v2682
        %v2684 = vpop.f32.mrb[0].mxu0
        %2685 = vmatprep.mubr.f32.mxu0 0.0
        %2686 = vmatmul.mubr.f32.gmra.mrb[0].mxu0 %v2543
        %v2687 = vpop.f32.mrb[0].mxu0
        %v2688 = vadd.f32 0.0, %v2687
        %v2689 = vpop.f32.mrb[0].mxu0
        %2690 = vmatprep.mubr.f32.mxu0 0.0
        %2691 = vmatmul.mubr.f32.gmra.mrb[0].mxu0 %v2545
        %v2692 = vpop.f32.mrb[0].mxu0
        %v2693 = vadd.f32 0.0, %v2692
        %v2694 = vpop.f32.mrb[0].mxu0
        %2695 = vmatprep.mubr.f32.mxu0 0.0
        %2696 = vmatmul.mubr.f32.gmra.mrb[0].mxu0 %v2547
        %v2697 = vpop.f32.mrb[0].mxu0
        %v2698 = vadd.f32 0.0, %v2697
        %v2699 = vpop.f32.mrb[0].mxu0
        %2700 = vmatprep.mubr.f32.mxu0 0.0
        %2701 = vmatmul.mubr.f32.gmra.mrb[0].mxu0 %v2549
        %v2702 = vpop.f32.mrb[0].mxu0
        %v2703 = vadd.f32 0.0, %v2702
        %v2704 = vpop.f32.mrb[0].mxu0
        %2705 = vmatprep.mubr.f32.mxu0 0.0
        %2706 = vmatmul.mubr.f32.gmra.mrb[0].mxu0 %v2551
        %v2707 = vpop.f32.mrb[0].mxu0
        %v2708 = vadd.f32 0.0, %v2707
        %v2709 = vpop.f32.mrb[0].mxu0
        %2710 = vmatprep.mubr.f32.mxu0 0.0
        %2711 = vmatmul.mubr.f32.gmra.mrb[0].mxu0 %v2553
        %v2712 = vpop.f32.mrb[0].mxu0
        %v2713 = vadd.f32 0.0, %v2712
        %v2714 = vpop.f32.mrb[0].mxu0
        %2715 = vmatprep.mubr.f32.mxu0 0.0
        %2716 = vmatmul.mubr.f32.gmra.mrb[0].mxu0 %v2555
        %v2717 = vpop.f32.mrb[0].mxu0
        %v2718 = vadd.f32 0.0, %v2717
        %v2719 = vpop.f32.mrb[0].mxu0
        %2720 = vmatprep.mubr.f32.mxu0 0.0
        %2721 = vmatmul.mubr.f32.gmra.mrb[0].mxu0 %v2557
        %v2722 = vpop.f32.mrb[0].mxu0
        %v2723 = vadd.f32 0.0, %v2722
        %v2724 = vpop.f32.mrb[0].mxu0
        %2725 = vmatprep.mubr.f32.mxu0 0.0
        %2726 = vmatmul.mubr.f32.gmra.mrb[0].mxu0 %v2559
        %v2727 = vpop.f32.mrb[0].mxu0
        %v2728 = vadd.f32 0.0, %v2727
        %v2729 = vpop.f32.mrb[0].mxu0
        %2730 = vmatprep.mubr.f32.mxu0 0.0
        %2731 = vmatmul.mubr.f32.gmra.mrb[0].mxu0 %v2561
        %v2732 = vpop.f32.mrb[0].mxu0
        %v2733 = vadd.f32 0.0, %v2732
        %v2734 = vpop.f32.mrb[0].mxu0
        %2735 = vmatprep.mubr.f32.mxu0 0.0
        %2736 = vmatmul.mubr.f32.gmra.mrb[0].mxu0 %v2563
        %v2737 = vpop.f32.mrb[0].mxu0
        %v2738 = vadd.f32 0.0, %v2737
        %v2739 = vpop.f32.mrb[0].mxu0
        %2740 = vmatprep.mubr.f32.mxu0 0.0
        %2741 = vmatmul.mubr.f32.gmra.mrb[0].mxu0 %v2565
        %v2742 = vpop.f32.mrb[0].mxu0
        %v2743 = vadd.f32 0.0, %v2742
        %v2744 = vpop.f32.mrb[0].mxu0
        %2745 = vmatprep.mubr.f32.mxu0 0.0
        %2746 = vmatmul.mubr.f32.gmra.mrb[0].mxu0 %v2567
        %v2747 = vpop.f32.mrb[0].mxu0
        %v2748 = vadd.f32 0.0, %v2747
        %v2749 = vpop.f32.mrb[0].mxu0
        %2750 = vmatprep.mubr.f32.mxu0 0.0
        %2751 = vmatmul.mubr.f32.gmra.mrb[0].mxu0 %v2569
        %v2752 = vpop.f32.mrb[0].mxu0
        %v2753 = vadd.f32 0.0, %v2752
        %v2754 = vpop.f32.mrb[0].mxu0
        %2755 = vmatprep.mubr.f32.mxu0 0.0
        %2756 = vmatmul.mubr.f32.gmra.mrb[0].mxu0 %v2571
        %v2757 = vpop.f32.mrb[0].mxu0
        %v2758 = vadd.f32 0.0, %v2757
        %v2759 = vpop.f32.mrb[0].mxu0
        %2760 = vmatprep.mubr.f32.mxu0 0.0
        %2761 = vmatmul.mubr.f32.gmra.mrb[0].mxu0 %v2573
        %v2762 = vpop.f32.mrb[0].mxu0
        %v2763 = vadd.f32 0.0, %v2762
        %v2764 = vpop.f32.mrb[0].mxu0
        %2765 = vmatprep.mubr.f32.mxu0 0.0
        %2766 = vmatmul.mubr.f32.gmra.mrb[0].mxu0 %v2575
        %v2767 = vpop.f32.mrb[0].mxu0
        %v2768 = vadd.f32 0.0, %v2767
        %v2769 = vpop.f32.mrb[0].mxu0
        %2770 = vmatprep.mubr.f32.mxu0 0.0
        %2771 = vmatmul.mubr.f32.gmra.mrb[0].mxu0 %v2577
        %v2772 = vpop.f32.mrb[0].mxu0
        %v2773 = vadd.f32 0.0, %v2772
        %v2774 = vpop.f32.mrb[0].mxu0
        %2775 = vmatprep.mubr.f32.mxu0 0.0
        %2776 = vmatmul.mubr.f32.gmra.mrb[0].mxu0 %v2579
        %v2777 = vpop.f32.mrb[0].mxu0
        %v2778 = vadd.f32 0.0, %v2777
        %v2779 = vpop.f32.mrb[0].mxu0
        %2780 = vmatprep.mubr.f32.mxu0 0.0
        %2781 = vmatmul.mubr.f32.gmra.mrb[0].mxu0 %v2581
        %v2782 = vpop.f32.mrb[0].mxu0
        %v2783 = vadd.f32 0.0, %v2782
        %v2784 = vpop.f32.mrb[0].mxu0
        %2785 = vmatprep.mubr.f32.mxu0 0.0
        %2786 = vmatmul.mubr.f32.gmra.mrb[0].mxu0 %v2583
        %v2787 = vpop.f32.mrb[0].mxu0
        %v2788 = vadd.f32 0.0, %v2787
        %v2789 = vpop.f32.mrb[0].mxu0
        %2790 = vmatprep.mubr.f32.mxu0 0.0
        %2791 = vmatmul.mubr.f32.gmra.mrb[0].mxu0 %v2585
        %v2792 = vpop.f32.mrb[0].mxu0
        %v2793 = vadd.f32 0.0, %v2792
        %v2794 = vpop.f32.mrb[0].mxu0
        %2795 = vmatprep.mubr.f32.mxu0 0.0
        %2796 = vmatmul.mubr.f32.gmra.mrb[0].mxu0 %v2587
        %v2797 = vpop.f32.mrb[0].mxu0
        %v2798 = vadd.f32 0.0, %v2797
        %v2799 = vpop.f32.mrb[0].mxu0
        %2800 = vmatprep.mubr.f32.mxu0 0.0
        %2801 = vmatmul.mubr.f32.gmra.mrb[0].mxu0 %v2589
        %v2802 = vpop.f32.mrb[0].mxu0
        %v2803 = vadd.f32 0.0, %v2802
        %v2804 = vpop.f32.mrb[0].mxu0
        %2805 = vmatprep.mubr.f32.mxu0 0.0
        %2806 = vmatmul.mubr.f32.gmra.mrb[0].mxu0 %v2591
        %v2807 = vpop.f32.mrb[0].mxu0
        %v2808 = vadd.f32 0.0, %v2807
        %v2809 = vpop.f32.mrb[0].mxu0
        %2810 = vmatprep.mubr.f32.mxu0 0.0
        %2811 = vmatmul.mubr.f32.gmra.mrb[0].mxu0 %v2593
        %v2812 = vpop.f32.mrb[0].mxu0
        %v2813 = vadd.f32 0.0, %v2812
        %v2814 = vpop.f32.mrb[0].mxu0
        %2815 = vmatprep.mubr.f32.mxu0 0.0
        %2816 = vmatmul.mubr.f32.gmra.mrb[0].mxu0 %v2595
        %v2817 = vpop.f32.mrb[0].mxu0
        %v2818 = vadd.f32 0.0, %v2817
        %v2819 = vpop.f32.mrb[0].mxu0
        %2820 = vmatprep.mubr.f32.mxu0 0.0
        %2821 = vmatmul.mubr.f32.gmra.mrb[0].mxu0 %v2597
        %v2822 = vpop.f32.mrb[0].mxu0
        %v2823 = vadd.f32 0.0, %v2822
        %v2824 = vpop.f32.mrb[0].mxu0
        %2825 = vmatprep.mubr.f32.mxu0 0.0
        %2826 = vmatmul.mubr.f32.gmra.mrb[0].mxu0 %v2599
        %v2827 = vpop.f32.mrb[0].mxu0
        %v2828 = vadd.f32 0.0, %v2827
        %v2829 = vpop.f32.mrb[0].mxu0
        %2830 = vmatprep.mubr.f32.mxu0 0.0
        %2831 = vmatmul.mubr.f32.gmra.mrb[0].mxu0 %v2601
        %v2832 = vpop.f32.mrb[0].mxu0
        %v2833 = vadd.f32 0.0, %v2832
        %v2834 = vpop.f32.mrb[0].mxu0
        %2835 = vmatprep.mubr.f32.mxu0 0.0
        %2836 = vmatmul.mubr.f32.gmra.mrb[0].mxu0 %v2603
        %v2837 = vpop.f32.mrb[0].mxu0
        %v2838 = vadd.f32 0.0, %v2837
        %v2839 = vpop.f32.mrb[0].mxu0
        %2840 = vmatprep.mubr.f32.mxu0 0.0
        %2841 = vmatmul.mubr.f32.gmra.mrb[0].mxu0 %v2605
        %v2842 = vpop.f32.mrb[0].mxu0
        %v2843 = vadd.f32 0.0, %v2842
        %v2844 = vpop.f32.mrb[0].mxu0
        %2845 = vmatprep.mubr.f32.mxu0 0.0
        %2846 = vmatmul.mubr.f32.gmra.mrb[0].mxu0 %v2607
        %v2847 = vpop.f32.mrb[0].mxu0
        %v2848 = vadd.f32 0.0, %v2847
        %v2849 = vpop.f32.mrb[0].mxu0
        %2850 = vmatprep.mubr.f32.mxu0 0.0
        %2851 = vmatmul.mubr.f32.gmra.mrb[0].mxu0 %v2609
        %v2852 = vpop.f32.mrb[0].mxu0
        %v2853 = vadd.f32 0.0, %v2852
        %v2854 = vpop.f32.mrb[0].mxu0
        %2855 = vmatprep.mubr.f32.mxu0 0.0
        %2856 = vmatmul.mubr.f32.gmra.mrb[0].mxu0 %v2611
        %v2857 = vpop.f32.mrb[0].mxu0
        %v2858 = vadd.f32 0.0, %v2857
        %v2859 = vpop.f32.mrb[0].mxu0
        %2860 = vdwg.mxu0
        %v2861 = vadd.f32 %v2429, %v2683
        %v2862 = vadd.f32 %v2430, %v2688
        %v2863 = vadd.f32 %v2431, %v2693
        %v2864 = vadd.f32 %v2432, %v2698
        %v2865 = vadd.f32 %v2433, %v2703
        %v2866 = vadd.f32 %v2434, %v2708
        %v2867 = vadd.f32 %v2435, %v2713
        %v2868 = vadd.f32 %v2436, %v2718
        %v2869 = vadd.f32 %v2437, %v2723
        %v2870 = vadd.f32 %v2438, %v2728
        %v2871 = vadd.f32 %v2439, %v2733
        %v2872 = vadd.f32 %v2440, %v2738
        %v2873 = vadd.f32 %v2441, %v2743
        %v2874 = vadd.f32 %v2442, %v2748
        %v2875 = vadd.f32 %v2443, %v2753
        %v2876 = vadd.f32 %v2444, %v2758
        %v2877 = vadd.f32 %v2445, %v2763
        %v2878 = vadd.f32 %v2446, %v2768
        %v2879 = vadd.f32 %v2447, %v2773
        %v2880 = vadd.f32 %v2448, %v2778
        %v2881 = vadd.f32 %v2449, %v2783
        %v2882 = vadd.f32 %v2450, %v2788
        %v2883 = vadd.f32 %v2451, %v2793
        %v2884 = vadd.f32 %v2452, %v2798
        %v2885 = vadd.f32 %v2453, %v2803
        %v2886 = vadd.f32 %v2454, %v2808
        %v2887 = vadd.f32 %v2455, %v2813
        %v2888 = vadd.f32 %v2456, %v2818
        %v2889 = vadd.f32 %v2457, %v2823
        %v2890 = vadd.f32 %v2458, %v2828
        %v2891 = vadd.f32 %v2459, %v2833
        %v2892 = vadd.f32 %v2460, %v2838
        %v2893 = vadd.f32 %v2461, %v2843
        %v2894 = vadd.f32 %v2462, %v2848
        %v2895 = vadd.f32 %v2463, %v2853
        %v2896 = vadd.f32 %v2464, %v2858
        %s2897 = scalar_lea.vmem %s2, 12
        %v2898 = vld [vmem:[%s2897] sm:$0x3]
        %v2899 = vunpack.c.l.bf16 %v2898
        %v2902 = vrot.slane %v544, 4
        %v2903 = vsel %vm732, %v2539, %v2902
        %v2904 = vrot.slane %v545, 4
        %v2905 = vsel %vm732, %v2902, %v2904
        %v2906 = vsel %vm659, %v2903, 0
        %v2908 = vsel %vm659, %v2905, 0
        %v2911 = vsel %vm732, %v2899, 0
        %2913 = vmatprep.subr.mxu0 0.0
        %2914 = vmatpush1.msra.mxu0 %v2911
        %2915 = vmatprep.subr.mxu0 0.0
        %2916 = vmatpush1.msra.mxu0 0.0
        %2917 = vmatprep.subr.mxu0 0.0
        %2918 = vmatpush1.msra.mxu0 0.0
        %2919 = vmatprep.subr.mxu0 0.0
        %2920 = vmatpush1.msra.mxu0 0.0
        %2921 = vmatprep.subr.mxu0 0.0
        %2922 = vmatpush1.msra.mxu0 0.0
        %2923 = vmatprep.subr.mxu0 0.0
        %2924 = vmatpush1.msra.mxu0 0.0
        %2925 = vmatprep.subr.mxu0 0.0
        %2926 = vmatpush1.msra.mxu0 0.0
        %2927 = vmatprep.subr.mxu0 0.0
        %2928 = vmatpush1.msra.mxu0 0.0
        %2929 = vmatprep.subr.mxu0 0.0
        %2930 = vmatpush1.msra.mxu0 0.0
        %2931 = vmatprep.subr.mxu0 0.0
        %2932 = vmatpush1.msra.mxu0 0.0
        %2933 = vmatprep.subr.mxu0 0.0
        %2934 = vmatpush1.msra.mxu0 0.0
        %2935 = vmatprep.subr.mxu0 0.0
        %2936 = vmatpush1.msra.mxu0 0.0
        %2937 = vmatprep.subr.mxu0 0.0
        %2938 = vmatpush1.msra.mxu0 0.0
        %2939 = vmatprep.subr.mxu0 0.0
        %2940 = vmatpush1.msra.mxu0 0.0
        %2941 = vmatprep.subr.mxu0 0.0
        %2942 = vmatpush1.msra.mxu0 0.0
        %2943 = vmatprep.subr.mxu0 0.0
        %2944 = vmatpush1.msra.mxu0 0.0
        %2945 = vmatprep.subr.mxu0 0.0
        %2946 = vmatpush1.msra.mxu0 0.0
        %2947 = vmatprep.subr.mxu0 0.0
        %2948 = vmatpush1.msra.mxu0 0.0
        %2949 = vmatprep.subr.mxu0 0.0
        %2950 = vmatpush1.msra.mxu0 0.0
        %2951 = vmatprep.subr.mxu0 0.0
        %2952 = vmatpush1.msra.mxu0 0.0
        %2953 = vmatprep.subr.mxu0 0.0
        %2954 = vmatpush1.msra.mxu0 0.0
        %2955 = vmatprep.subr.mxu0 0.0
        %2956 = vmatpush1.msra.mxu0 0.0
        %2957 = vmatprep.subr.mxu0 0.0
        %2958 = vmatpush1.msra.mxu0 0.0
        %2959 = vmatprep.subr.mxu0 0.0
        %2960 = vmatpush1.msra.mxu0 0.0
        %2961 = vmatprep.subr.mxu0 0.0
        %2962 = vmatpush1.msra.mxu0 0.0
        %2963 = vmatprep.subr.mxu0 0.0
        %2964 = vmatpush1.msra.mxu0 0.0
        %2965 = vmatprep.subr.mxu0 0.0
        %2966 = vmatpush1.msra.mxu0 0.0
        %2967 = vmatprep.subr.mxu0 0.0
        %2968 = vmatpush1.msra.mxu0 0.0
        %2969 = vmatprep.subr.mxu0 0.0
        %2970 = vmatpush1.msra.mxu0 0.0
        %2971 = vmatprep.subr.mxu0 0.0
        %2972 = vmatpush1.msra.mxu0 0.0
        %2973 = vmatprep.subr.mxu0 0.0
        %2974 = vmatpush1.msra.mxu0 0.0
        %2975 = vmatprep.subr.mxu0 0.0
        %2976 = vmatpush1.msra.mxu0 0.0
        %2977 = vmatprep.mubr.f32.mxu0 0.0
        %2978 = vmatmul.mubr.f32.gmra.mrb[0].mxu0 %v2545
        %v2979 = vpop.f32.mrb[0].mxu0
        %v2980 = vadd.f32 0.0, %v2979
        %v2981 = vpop.f32.mrb[0].mxu0
        %2982 = vmatprep.mubr.f32.mxu0 0.0
        %2983 = vmatmul.mubr.f32.gmra.mrb[0].mxu0 %v2547
        %v2984 = vpop.f32.mrb[0].mxu0
        %v2985 = vadd.f32 0.0, %v2984
        %v2986 = vpop.f32.mrb[0].mxu0
        %2987 = vmatprep.mubr.f32.mxu0 0.0
        %2988 = vmatmul.mubr.f32.gmra.mrb[0].mxu0 %v2549
        %v2989 = vpop.f32.mrb[0].mxu0
        %v2990 = vadd.f32 0.0, %v2989
        %v2991 = vpop.f32.mrb[0].mxu0
        %2992 = vmatprep.mubr.f32.mxu0 0.0
        %2993 = vmatmul.mubr.f32.gmra.mrb[0].mxu0 %v2551
        %v2994 = vpop.f32.mrb[0].mxu0
        %v2995 = vadd.f32 0.0, %v2994
        %v2996 = vpop.f32.mrb[0].mxu0
        %2997 = vmatprep.mubr.f32.mxu0 0.0
        %2998 = vmatmul.mubr.f32.gmra.mrb[0].mxu0 %v2553
        %v2999 = vpop.f32.mrb[0].mxu0
        %v3000 = vadd.f32 0.0, %v2999
        %v3001 = vpop.f32.mrb[0].mxu0
        %3002 = vmatprep.mubr.f32.mxu0 0.0
        %3003 = vmatmul.mubr.f32.gmra.mrb[0].mxu0 %v2555
        %v3004 = vpop.f32.mrb[0].mxu0
        %v3005 = vadd.f32 0.0, %v3004
        %v3006 = vpop.f32.mrb[0].mxu0
        %3007 = vmatprep.mubr.f32.mxu0 0.0
        %3008 = vmatmul.mubr.f32.gmra.mrb[0].mxu0 %v2557
        %v3009 = vpop.f32.mrb[0].mxu0
        %v3010 = vadd.f32 0.0, %v3009
        %v3011 = vpop.f32.mrb[0].mxu0
        %3012 = vmatprep.mubr.f32.mxu0 0.0
        %3013 = vmatmul.mubr.f32.gmra.mrb[0].mxu0 %v2559
        %v3014 = vpop.f32.mrb[0].mxu0
        %v3015 = vadd.f32 0.0, %v3014
        %v3016 = vpop.f32.mrb[0].mxu0
        %3017 = vmatprep.mubr.f32.mxu0 0.0
        %3018 = vmatmul.mubr.f32.gmra.mrb[0].mxu0 %v2561
        %v3019 = vpop.f32.mrb[0].mxu0
        %v3020 = vadd.f32 0.0, %v3019
        %v3021 = vpop.f32.mrb[0].mxu0
        %3022 = vmatprep.mubr.f32.mxu0 0.0
        %3023 = vmatmul.mubr.f32.gmra.mrb[0].mxu0 %v2563
        %v3024 = vpop.f32.mrb[0].mxu0
        %v3025 = vadd.f32 0.0, %v3024
        %v3026 = vpop.f32.mrb[0].mxu0
        %3027 = vmatprep.mubr.f32.mxu0 0.0
        %3028 = vmatmul.mubr.f32.gmra.mrb[0].mxu0 %v2565
        %v3029 = vpop.f32.mrb[0].mxu0
        %v3030 = vadd.f32 0.0, %v3029
        %v3031 = vpop.f32.mrb[0].mxu0
        %3032 = vmatprep.mubr.f32.mxu0 0.0
        %3033 = vmatmul.mubr.f32.gmra.mrb[0].mxu0 %v2567
        %v3034 = vpop.f32.mrb[0].mxu0
        %v3035 = vadd.f32 0.0, %v3034
        %v3036 = vpop.f32.mrb[0].mxu0
        %3037 = vmatprep.mubr.f32.mxu0 0.0
        %3038 = vmatmul.mubr.f32.gmra.mrb[0].mxu0 %v2569
        %v3039 = vpop.f32.mrb[0].mxu0
        %v3040 = vadd.f32 0.0, %v3039
        %v3041 = vpop.f32.mrb[0].mxu0
        %3042 = vmatprep.mubr.f32.mxu0 0.0
        %3043 = vmatmul.mubr.f32.gmra.mrb[0].mxu0 %v2571
        %v3044 = vpop.f32.mrb[0].mxu0
        %v3045 = vadd.f32 0.0, %v3044
        %v3046 = vpop.f32.mrb[0].mxu0
        %3047 = vmatprep.mubr.f32.mxu0 0.0
        %3048 = vmatmul.mubr.f32.gmra.mrb[0].mxu0 %v2573
        %v3049 = vpop.f32.mrb[0].mxu0
        %v3050 = vadd.f32 0.0, %v3049
        %v3051 = vpop.f32.mrb[0].mxu0
        %3052 = vmatprep.mubr.f32.mxu0 0.0
        %3053 = vmatmul.mubr.f32.gmra.mrb[0].mxu0 %v2575
        %v3054 = vpop.f32.mrb[0].mxu0
        %v3055 = vadd.f32 0.0, %v3054
        %v3056 = vpop.f32.mrb[0].mxu0
        %3057 = vmatprep.mubr.f32.mxu0 0.0
        %3058 = vmatmul.mubr.f32.gmra.mrb[0].mxu0 %v2577
        %v3059 = vpop.f32.mrb[0].mxu0
        %v3060 = vadd.f32 0.0, %v3059
        %v3061 = vpop.f32.mrb[0].mxu0
        %3062 = vmatprep.mubr.f32.mxu0 0.0
        %3063 = vmatmul.mubr.f32.gmra.mrb[0].mxu0 %v2579
        %v3064 = vpop.f32.mrb[0].mxu0
        %v3065 = vadd.f32 0.0, %v3064
        %v3066 = vpop.f32.mrb[0].mxu0
        %3067 = vmatprep.mubr.f32.mxu0 0.0
        %3068 = vmatmul.mubr.f32.gmra.mrb[0].mxu0 %v2581
        %v3069 = vpop.f32.mrb[0].mxu0
        %v3070 = vadd.f32 0.0, %v3069
        %v3071 = vpop.f32.mrb[0].mxu0
        %3072 = vmatprep.mubr.f32.mxu0 0.0
        %3073 = vmatmul.mubr.f32.gmra.mrb[0].mxu0 %v2583
        %v3074 = vpop.f32.mrb[0].mxu0
        %v3075 = vadd.f32 0.0, %v3074
        %v3076 = vpop.f32.mrb[0].mxu0
        %3077 = vmatprep.mubr.f32.mxu0 0.0
        %3078 = vmatmul.mubr.f32.gmra.mrb[0].mxu0 %v2585
        %v3079 = vpop.f32.mrb[0].mxu0
        %v3080 = vadd.f32 0.0, %v3079
        %v3081 = vpop.f32.mrb[0].mxu0
        %3082 = vmatprep.mubr.f32.mxu0 0.0
        %3083 = vmatmul.mubr.f32.gmra.mrb[0].mxu0 %v2587
        %v3084 = vpop.f32.mrb[0].mxu0
        %v3085 = vadd.f32 0.0, %v3084
        %v3086 = vpop.f32.mrb[0].mxu0
        %3087 = vmatprep.mubr.f32.mxu0 0.0
        %3088 = vmatmul.mubr.f32.gmra.mrb[0].mxu0 %v2589
        %v3089 = vpop.f32.mrb[0].mxu0
        %v3090 = vadd.f32 0.0, %v3089
        %v3091 = vpop.f32.mrb[0].mxu0
        %3092 = vmatprep.mubr.f32.mxu0 0.0
        %3093 = vmatmul.mubr.f32.gmra.mrb[0].mxu0 %v2591
        %v3094 = vpop.f32.mrb[0].mxu0
        %v3095 = vadd.f32 0.0, %v3094
        %v3096 = vpop.f32.mrb[0].mxu0
        %3097 = vmatprep.mubr.f32.mxu0 0.0
        %3098 = vmatmul.mubr.f32.gmra.mrb[0].mxu0 %v2593
        %v3099 = vpop.f32.mrb[0].mxu0
        %v3100 = vadd.f32 0.0, %v3099
        %v3101 = vpop.f32.mrb[0].mxu0
        %3102 = vmatprep.mubr.f32.mxu0 0.0
        %3103 = vmatmul.mubr.f32.gmra.mrb[0].mxu0 %v2595
        %v3104 = vpop.f32.mrb[0].mxu0
        %v3105 = vadd.f32 0.0, %v3104
        %v3106 = vpop.f32.mrb[0].mxu0
        %3107 = vmatprep.mubr.f32.mxu0 0.0
        %3108 = vmatmul.mubr.f32.gmra.mrb[0].mxu0 %v2597
        %v3109 = vpop.f32.mrb[0].mxu0
        %v3110 = vadd.f32 0.0, %v3109
        %v3111 = vpop.f32.mrb[0].mxu0
        %3112 = vmatprep.mubr.f32.mxu0 0.0
        %3113 = vmatmul.mubr.f32.gmra.mrb[0].mxu0 %v2599
        %v3114 = vpop.f32.mrb[0].mxu0
        %v3115 = vadd.f32 0.0, %v3114
        %v3116 = vpop.f32.mrb[0].mxu0
        %3117 = vmatprep.mubr.f32.mxu0 0.0
        %3118 = vmatmul.mubr.f32.gmra.mrb[0].mxu0 %v2601
        %v3119 = vpop.f32.mrb[0].mxu0
        %v3120 = vadd.f32 0.0, %v3119
        %v3121 = vpop.f32.mrb[0].mxu0
        %3122 = vmatprep.mubr.f32.mxu0 0.0
        %3123 = vmatmul.mubr.f32.gmra.mrb[0].mxu0 %v2603
        %v3124 = vpop.f32.mrb[0].mxu0
        %v3125 = vadd.f32 0.0, %v3124
        %v3126 = vpop.f32.mrb[0].mxu0
        %3127 = vmatprep.mubr.f32.mxu0 0.0
        %3128 = vmatmul.mubr.f32.gmra.mrb[0].mxu0 %v2605
        %v3129 = vpop.f32.mrb[0].mxu0
        %v3130 = vadd.f32 0.0, %v3129
        %v3131 = vpop.f32.mrb[0].mxu0
        %3132 = vmatprep.mubr.f32.mxu0 0.0
        %3133 = vmatmul.mubr.f32.gmra.mrb[0].mxu0 %v2607
        %v3134 = vpop.f32.mrb[0].mxu0
        %v3135 = vadd.f32 0.0, %v3134
        %v3136 = vpop.f32.mrb[0].mxu0
        %3137 = vmatprep.mubr.f32.mxu0 0.0
        %3138 = vmatmul.mubr.f32.gmra.mrb[0].mxu0 %v2609
        %v3139 = vpop.f32.mrb[0].mxu0
        %v3140 = vadd.f32 0.0, %v3139
        %v3141 = vpop.f32.mrb[0].mxu0
        %3142 = vmatprep.mubr.f32.mxu0 0.0
        %3143 = vmatmul.mubr.f32.gmra.mrb[0].mxu0 %v2611
        %v3144 = vpop.f32.mrb[0].mxu0
        %v3145 = vadd.f32 0.0, %v3144
        %v3146 = vpop.f32.mrb[0].mxu0
        %3147 = vmatprep.mubr.f32.mxu0 0.0
        %3148 = vmatmul.mubr.f32.gmra.mrb[0].mxu0 %v2906
        %v3149 = vpop.f32.mrb[0].mxu0
        %v3150 = vadd.f32 0.0, %v3149
        %v3151 = vpop.f32.mrb[0].mxu0
        %3152 = vmatprep.mubr.f32.mxu0 0.0
        %3153 = vmatmul.mubr.f32.gmra.mrb[0].mxu0 %v2908
        %v3154 = vpop.f32.mrb[0].mxu0
        %v3155 = vadd.f32 0.0, %v3154
        %v3156 = vpop.f32.mrb[0].mxu0
        %3157 = vdwg.mxu0
        %v3158 = vadd.f32 %v2861, %v2980
        %v3159 = vadd.f32 %v2862, %v2985
        %v3160 = vadd.f32 %v2863, %v2990
        %v3161 = vadd.f32 %v2864, %v2995
        %v3162 = vadd.f32 %v2865, %v3000
        %v3163 = vadd.f32 %v2866, %v3005
        %v3164 = vadd.f32 %v2867, %v3010
        %v3165 = vadd.f32 %v2868, %v3015
        %v3166 = vadd.f32 %v2869, %v3020
        %v3167 = vadd.f32 %v2870, %v3025
        %v3168 = vadd.f32 %v2871, %v3030
        %v3169 = vadd.f32 %v2872, %v3035
        %v3170 = vadd.f32 %v2873, %v3040
        %v3171 = vadd.f32 %v2874, %v3045
        %v3172 = vadd.f32 %v2875, %v3050
        %v3173 = vadd.f32 %v2876, %v3055
        %v3174 = vadd.f32 %v2877, %v3060
        %v3175 = vadd.f32 %v2878, %v3065
        %v3176 = vadd.f32 %v2879, %v3070
        %v3177 = vadd.f32 %v2880, %v3075
        %v3178 = vadd.f32 %v2881, %v3080
        %v3179 = vadd.f32 %v2882, %v3085
        %v3180 = vadd.f32 %v2883, %v3090
        %v3181 = vadd.f32 %v2884, %v3095
        %v3182 = vadd.f32 %v2885, %v3100
        %v3183 = vadd.f32 %v2886, %v3105
        %v3184 = vadd.f32 %v2887, %v3110
        %v3185 = vadd.f32 %v2888, %v3115
        %v3186 = vadd.f32 %v2889, %v3120
        %v3187 = vadd.f32 %v2890, %v3125
        %v3188 = vadd.f32 %v2891, %v3130
        %v3189 = vadd.f32 %v2892, %v3135
        %v3190 = vadd.f32 %v2893, %v3140
        %v3191 = vadd.f32 %v2894, %v3145
        %v3192 = vadd.f32 %v2895, %v3150
        %v3193 = vadd.f32 %v2896, %v3155
        %s3194 = scalar_lea.vmem %s2, 14
        %v3195 = vld [vmem:[%s3194] sm:$0x3]
        %v3196 = vunpack.c.l.bf16 %v3195
        %vm3197 = vcmask 1042432
        %v3198 = vrot.slane %v509, 5
        %v3199 = vrot.slane %v510, 5
        %v3200 = vsel %vm3197, %v3198, %v3199
        %v3201 = vrot.slane %v511, 5
        %v3202 = vsel %vm3197, %v3199, %v3201
        %v3203 = vrot.slane %v512, 5
        %v3204 = vsel %vm3197, %v3201, %v3203
        %v3205 = vrot.slane %v513, 5
        %v3206 = vsel %vm3197, %v3203, %v3205
        %v3207 = vrot.slane %v514, 5
        %v3208 = vsel %vm3197, %v3205, %v3207
        %v3209 = vrot.slane %v515, 5
        %v3210 = vsel %vm3197, %v3207, %v3209
        %v3211 = vrot.slane %v516, 5
        %v3212 = vsel %vm3197, %v3209, %v3211
        %v3213 = vrot.slane %v517, 5
        %v3214 = vsel %vm3197, %v3211, %v3213
        %v3215 = vrot.slane %v518, 5
        %v3216 = vsel %vm3197, %v3213, %v3215
        %v3217 = vrot.slane %v519, 5
        %v3218 = vsel %vm3197, %v3215, %v3217
        %v3219 = vrot.slane %v520, 5
        %v3220 = vsel %vm3197, %v3217, %v3219
        %v3221 = vrot.slane %v521, 5
        %v3222 = vsel %vm3197, %v3219, %v3221
        %v3223 = vrot.slane %v522, 5
        %v3224 = vsel %vm3197, %v3221, %v3223
        %v3225 = vrot.slane %v523, 5
        %v3226 = vsel %vm3197, %v3223, %v3225
        %v3227 = vrot.slane %v524, 5
        %v3228 = vsel %vm3197, %v3225, %v3227
        %v3229 = vrot.slane %v525, 5
        %v3230 = vsel %vm3197, %v3227, %v3229
        %v3231 = vrot.slane %v526, 5
        %v3232 = vsel %vm3197, %v3229, %v3231
        %v3233 = vrot.slane %v527, 5
        %v3234 = vsel %vm3197, %v3231, %v3233
        %v3235 = vrot.slane %v528, 5
        %v3236 = vsel %vm3197, %v3233, %v3235
        %v3237 = vrot.slane %v529, 5
        %v3238 = vsel %vm3197, %v3235, %v3237
        %v3239 = vrot.slane %v530, 5
        %v3240 = vsel %vm3197, %v3237, %v3239
        %v3241 = vrot.slane %v531, 5
        %v3242 = vsel %vm3197, %v3239, %v3241
        %v3243 = vrot.slane %v532, 5
        %v3244 = vsel %vm3197, %v3241, %v3243
        %v3245 = vrot.slane %v533, 5
        %v3246 = vsel %vm3197, %v3243, %v3245
        %v3247 = vrot.slane %v534, 5
        %v3248 = vsel %vm3197, %v3245, %v3247
        %v3249 = vrot.slane %v535, 5
        %v3250 = vsel %vm3197, %v3247, %v3249
        %v3251 = vrot.slane %v536, 5
        %v3252 = vsel %vm3197, %v3249, %v3251
        %v3253 = vrot.slane %v537, 5
        %v3254 = vsel %vm3197, %v3251, %v3253
        %v3255 = vrot.slane %v538, 5
        %v3256 = vsel %vm3197, %v3253, %v3255
        %v3257 = vrot.slane %v539, 5
        %v3258 = vsel %vm3197, %v3255, %v3257
        %v3259 = vrot.slane %v540, 5
        %v3260 = vsel %vm3197, %v3257, %v3259
        %v3261 = vrot.slane %v541, 5
        %v3262 = vsel %vm3197, %v3259, %v3261
        %v3263 = vrot.slane %v542, 5
        %v3264 = vsel %vm3197, %v3261, %v3263
        %v3265 = vrot.slane %v543, 5
        %v3266 = vsel %vm3197, %v3263, %v3265
        %v3267 = vrot.slane %v544, 5
        %v3268 = vsel %vm3197, %v3265, %v3267
        %v3269 = vrot.slane %v545, 5
        %v3270 = vsel %vm3197, %v3267, %v3269
        %v3271 = vsel %vm659, %v3200, 0
        %v3273 = vsel %vm659, %v3202, 0
        %v3275 = vsel %vm659, %v3204, 0
        %v3277 = vsel %vm659, %v3206, 0
        %v3279 = vsel %vm659, %v3208, 0
        %v3281 = vsel %vm659, %v3210, 0
        %v3283 = vsel %vm659, %v3212, 0
        %v3285 = vsel %vm659, %v3214, 0
        %v3287 = vsel %vm659, %v3216, 0
        %v3289 = vsel %vm659, %v3218, 0
        %v3291 = vsel %vm659, %v3220, 0
        %v3293 = vsel %vm659, %v3222, 0
        %v3295 = vsel %vm659, %v3224, 0
        %v3297 = vsel %vm659, %v3226, 0
        %v3299 = vsel %vm659, %v3228, 0
        %v3301 = vsel %vm659, %v3230, 0
        %v3303 = vsel %vm659, %v3232, 0
        %v3305 = vsel %vm659, %v3234, 0
        %v3307 = vsel %vm659, %v3236, 0
        %v3309 = vsel %vm659, %v3238, 0
        %v3311 = vsel %vm659, %v3240, 0
        %v3313 = vsel %vm659, %v3242, 0
        %v3315 = vsel %vm659, %v3244, 0
        %v3317 = vsel %vm659, %v3246, 0
        %v3319 = vsel %vm659, %v3248, 0
        %v3321 = vsel %vm659, %v3250, 0
        %v3323 = vsel %vm659, %v3252, 0
        %v3325 = vsel %vm659, %v3254, 0
        %v3327 = vsel %vm659, %v3256, 0
        %v3329 = vsel %vm659, %v3258, 0
        %v3331 = vsel %vm659, %v3260, 0
        %v3333 = vsel %vm659, %v3262, 0
        %v3335 = vsel %vm659, %v3264, 0
        %v3337 = vsel %vm659, %v3266, 0
        %v3339 = vsel %vm659, %v3268, 0
        %v3341 = vsel %vm659, %v3270, 0
        %v3344 = vsel %vm732, %v3196, 0
        %3346 = vmatprep.subr.mxu0 0.0
        %3347 = vmatpush1.msra.mxu0 %v3344
        %3348 = vmatprep.subr.mxu0 0.0
        %3349 = vmatpush1.msra.mxu0 0.0
        %3350 = vmatprep.subr.mxu0 0.0
        %3351 = vmatpush1.msra.mxu0 0.0
        %3352 = vmatprep.subr.mxu0 0.0
        %3353 = vmatpush1.msra.mxu0 0.0
        %3354 = vmatprep.subr.mxu0 0.0
        %3355 = vmatpush1.msra.mxu0 0.0
        %3356 = vmatprep.subr.mxu0 0.0
        %3357 = vmatpush1.msra.mxu0 0.0
        %3358 = vmatprep.subr.mxu0 0.0
        %3359 = vmatpush1.msra.mxu0 0.0
        %3360 = vmatprep.subr.mxu0 0.0
        %3361 = vmatpush1.msra.mxu0 0.0
        %3362 = vmatprep.subr.mxu0 0.0
        %3363 = vmatpush1.msra.mxu0 0.0
        %3364 = vmatprep.subr.mxu0 0.0
        %3365 = vmatpush1.msra.mxu0 0.0
        %3366 = vmatprep.subr.mxu0 0.0
        %3367 = vmatpush1.msra.mxu0 0.0
        %3368 = vmatprep.subr.mxu0 0.0
        %3369 = vmatpush1.msra.mxu0 0.0
        %3370 = vmatprep.subr.mxu0 0.0
        %3371 = vmatpush1.msra.mxu0 0.0
        %3372 = vmatprep.subr.mxu0 0.0
        %3373 = vmatpush1.msra.mxu0 0.0
        %3374 = vmatprep.subr.mxu0 0.0
        %3375 = vmatpush1.msra.mxu0 0.0
        %3376 = vmatprep.subr.mxu0 0.0
        %3377 = vmatpush1.msra.mxu0 0.0
        %3378 = vmatprep.subr.mxu0 0.0
        %3379 = vmatpush1.msra.mxu0 0.0
        %3380 = vmatprep.subr.mxu0 0.0
        %3381 = vmatpush1.msra.mxu0 0.0
        %3382 = vmatprep.subr.mxu0 0.0
        %3383 = vmatpush1.msra.mxu0 0.0
        %3384 = vmatprep.subr.mxu0 0.0
        %3385 = vmatpush1.msra.mxu0 0.0
        %3386 = vmatprep.subr.mxu0 0.0
        %3387 = vmatpush1.msra.mxu0 0.0
        %3388 = vmatprep.subr.mxu0 0.0
        %3389 = vmatpush1.msra.mxu0 0.0
        %3390 = vmatprep.subr.mxu0 0.0
        %3391 = vmatpush1.msra.mxu0 0.0
        %3392 = vmatprep.subr.mxu0 0.0
        %3393 = vmatpush1.msra.mxu0 0.0
        %3394 = vmatprep.subr.mxu0 0.0
        %3395 = vmatpush1.msra.mxu0 0.0
        %3396 = vmatprep.subr.mxu0 0.0
        %3397 = vmatpush1.msra.mxu0 0.0
        %3398 = vmatprep.subr.mxu0 0.0
        %3399 = vmatpush1.msra.mxu0 0.0
        %3400 = vmatprep.subr.mxu0 0.0
        %3401 = vmatpush1.msra.mxu0 0.0
        %3402 = vmatprep.subr.mxu0 0.0
        %3403 = vmatpush1.msra.mxu0 0.0
        %3404 = vmatprep.subr.mxu0 0.0
        %3405 = vmatpush1.msra.mxu0 0.0
        %3406 = vmatprep.subr.mxu0 0.0
        %3407 = vmatpush1.msra.mxu0 0.0
        %3408 = vmatprep.subr.mxu0 0.0
        %3409 = vmatpush1.msra.mxu0 0.0
        %3410 = vmatprep.mubr.f32.mxu0 0.0
        %3411 = vmatmul.mubr.f32.gmra.mrb[0].mxu0 %v3271
        %v3412 = vpop.f32.mrb[0].mxu0
        %v3413 = vadd.f32 0.0, %v3412
        %v3414 = vpop.f32.mrb[0].mxu0
        %3415 = vmatprep.mubr.f32.mxu0 0.0
        %3416 = vmatmul.mubr.f32.gmra.mrb[0].mxu0 %v3273
        %v3417 = vpop.f32.mrb[0].mxu0
        %v3418 = vadd.f32 0.0, %v3417
        %v3419 = vpop.f32.mrb[0].mxu0
        %3420 = vmatprep.mubr.f32.mxu0 0.0
        %3421 = vmatmul.mubr.f32.gmra.mrb[0].mxu0 %v3275
        %v3422 = vpop.f32.mrb[0].mxu0
        %v3423 = vadd.f32 0.0, %v3422
        %v3424 = vpop.f32.mrb[0].mxu0
        %3425 = vmatprep.mubr.f32.mxu0 0.0
        %3426 = vmatmul.mubr.f32.gmra.mrb[0].mxu0 %v3277
        %v3427 = vpop.f32.mrb[0].mxu0
        %v3428 = vadd.f32 0.0, %v3427
        %v3429 = vpop.f32.mrb[0].mxu0
        %3430 = vmatprep.mubr.f32.mxu0 0.0
        %3431 = vmatmul.mubr.f32.gmra.mrb[0].mxu0 %v3279
        %v3432 = vpop.f32.mrb[0].mxu0
        %v3433 = vadd.f32 0.0, %v3432
        %v3434 = vpop.f32.mrb[0].mxu0
        %3435 = vmatprep.mubr.f32.mxu0 0.0
        %3436 = vmatmul.mubr.f32.gmra.mrb[0].mxu0 %v3281
        %v3437 = vpop.f32.mrb[0].mxu0
        %v3438 = vadd.f32 0.0, %v3437
        %v3439 = vpop.f32.mrb[0].mxu0
        %3440 = vmatprep.mubr.f32.mxu0 0.0
        %3441 = vmatmul.mubr.f32.gmra.mrb[0].mxu0 %v3283
        %v3442 = vpop.f32.mrb[0].mxu0
        %v3443 = vadd.f32 0.0, %v3442
        %v3444 = vpop.f32.mrb[0].mxu0
        %3445 = vmatprep.mubr.f32.mxu0 0.0
        %3446 = vmatmul.mubr.f32.gmra.mrb[0].mxu0 %v3285
        %v3447 = vpop.f32.mrb[0].mxu0
        %v3448 = vadd.f32 0.0, %v3447
        %v3449 = vpop.f32.mrb[0].mxu0
        %3450 = vmatprep.mubr.f32.mxu0 0.0
        %3451 = vmatmul.mubr.f32.gmra.mrb[0].mxu0 %v3287
        %v3452 = vpop.f32.mrb[0].mxu0
        %v3453 = vadd.f32 0.0, %v3452
        %v3454 = vpop.f32.mrb[0].mxu0
        %3455 = vmatprep.mubr.f32.mxu0 0.0
        %3456 = vmatmul.mubr.f32.gmra.mrb[0].mxu0 %v3289
        %v3457 = vpop.f32.mrb[0].mxu0
        %v3458 = vadd.f32 0.0, %v3457
        %v3459 = vpop.f32.mrb[0].mxu0
        %3460 = vmatprep.mubr.f32.mxu0 0.0
        %3461 = vmatmul.mubr.f32.gmra.mrb[0].mxu0 %v3291
        %v3462 = vpop.f32.mrb[0].mxu0
        %v3463 = vadd.f32 0.0, %v3462
        %v3464 = vpop.f32.mrb[0].mxu0
        %3465 = vmatprep.mubr.f32.mxu0 0.0
        %3466 = vmatmul.mubr.f32.gmra.mrb[0].mxu0 %v3293
        %v3467 = vpop.f32.mrb[0].mxu0
        %v3468 = vadd.f32 0.0, %v3467
        %v3469 = vpop.f32.mrb[0].mxu0
        %3470 = vmatprep.mubr.f32.mxu0 0.0
        %3471 = vmatmul.mubr.f32.gmra.mrb[0].mxu0 %v3295
        %v3472 = vpop.f32.mrb[0].mxu0
        %v3473 = vadd.f32 0.0, %v3472
        %v3474 = vpop.f32.mrb[0].mxu0
        %3475 = vmatprep.mubr.f32.mxu0 0.0
        %3476 = vmatmul.mubr.f32.gmra.mrb[0].mxu0 %v3297
        %v3477 = vpop.f32.mrb[0].mxu0
        %v3478 = vadd.f32 0.0, %v3477
        %v3479 = vpop.f32.mrb[0].mxu0
        %3480 = vmatprep.mubr.f32.mxu0 0.0
        %3481 = vmatmul.mubr.f32.gmra.mrb[0].mxu0 %v3299
        %v3482 = vpop.f32.mrb[0].mxu0
        %v3483 = vadd.f32 0.0, %v3482
        %v3484 = vpop.f32.mrb[0].mxu0
        %3485 = vmatprep.mubr.f32.mxu0 0.0
        %3486 = vmatmul.mubr.f32.gmra.mrb[0].mxu0 %v3301
        %v3487 = vpop.f32.mrb[0].mxu0
        %v3488 = vadd.f32 0.0, %v3487
        %v3489 = vpop.f32.mrb[0].mxu0
        %3490 = vmatprep.mubr.f32.mxu0 0.0
        %3491 = vmatmul.mubr.f32.gmra.mrb[0].mxu0 %v3303
        %v3492 = vpop.f32.mrb[0].mxu0
        %v3493 = vadd.f32 0.0, %v3492
        %v3494 = vpop.f32.mrb[0].mxu0
        %3495 = vmatprep.mubr.f32.mxu0 0.0
        %3496 = vmatmul.mubr.f32.gmra.mrb[0].mxu0 %v3305
        %v3497 = vpop.f32.mrb[0].mxu0
        %v3498 = vadd.f32 0.0, %v3497
        %v3499 = vpop.f32.mrb[0].mxu0
        %3500 = vmatprep.mubr.f32.mxu0 0.0
        %3501 = vmatmul.mubr.f32.gmra.mrb[0].mxu0 %v3307
        %v3502 = vpop.f32.mrb[0].mxu0
        %v3503 = vadd.f32 0.0, %v3502
        %v3504 = vpop.f32.mrb[0].mxu0
        %3505 = vmatprep.mubr.f32.mxu0 0.0
        %3506 = vmatmul.mubr.f32.gmra.mrb[0].mxu0 %v3309
        %v3507 = vpop.f32.mrb[0].mxu0
        %v3508 = vadd.f32 0.0, %v3507
        %v3509 = vpop.f32.mrb[0].mxu0
        %3510 = vmatprep.mubr.f32.mxu0 0.0
        %3511 = vmatmul.mubr.f32.gmra.mrb[0].mxu0 %v3311
        %v3512 = vpop.f32.mrb[0].mxu0
        %v3513 = vadd.f32 0.0, %v3512
        %v3514 = vpop.f32.mrb[0].mxu0
        %3515 = vmatprep.mubr.f32.mxu0 0.0
        %3516 = vmatmul.mubr.f32.gmra.mrb[0].mxu0 %v3313
        %v3517 = vpop.f32.mrb[0].mxu0
        %v3518 = vadd.f32 0.0, %v3517
        %v3519 = vpop.f32.mrb[0].mxu0
        %3520 = vmatprep.mubr.f32.mxu0 0.0
        %3521 = vmatmul.mubr.f32.gmra.mrb[0].mxu0 %v3315
        %v3522 = vpop.f32.mrb[0].mxu0
        %v3523 = vadd.f32 0.0, %v3522
        %v3524 = vpop.f32.mrb[0].mxu0
        %3525 = vmatprep.mubr.f32.mxu0 0.0
        %3526 = vmatmul.mubr.f32.gmra.mrb[0].mxu0 %v3317
        %v3527 = vpop.f32.mrb[0].mxu0
        %v3528 = vadd.f32 0.0, %v3527
        %v3529 = vpop.f32.mrb[0].mxu0
        %3530 = vmatprep.mubr.f32.mxu0 0.0
        %3531 = vmatmul.mubr.f32.gmra.mrb[0].mxu0 %v3319
        %v3532 = vpop.f32.mrb[0].mxu0
        %v3533 = vadd.f32 0.0, %v3532
        %v3534 = vpop.f32.mrb[0].mxu0
        %3535 = vmatprep.mubr.f32.mxu0 0.0
        %3536 = vmatmul.mubr.f32.gmra.mrb[0].mxu0 %v3321
        %v3537 = vpop.f32.mrb[0].mxu0
        %v3538 = vadd.f32 0.0, %v3537
        %v3539 = vpop.f32.mrb[0].mxu0
        %3540 = vmatprep.mubr.f32.mxu0 0.0
        %3541 = vmatmul.mubr.f32.gmra.mrb[0].mxu0 %v3323
        %v3542 = vpop.f32.mrb[0].mxu0
        %v3543 = vadd.f32 0.0, %v3542
        %v3544 = vpop.f32.mrb[0].mxu0
        %3545 = vmatprep.mubr.f32.mxu0 0.0
        %3546 = vmatmul.mubr.f32.gmra.mrb[0].mxu0 %v3325
        %v3547 = vpop.f32.mrb[0].mxu0
        %v3548 = vadd.f32 0.0, %v3547
        %v3549 = vpop.f32.mrb[0].mxu0
        %3550 = vmatprep.mubr.f32.mxu0 0.0
        %3551 = vmatmul.mubr.f32.gmra.mrb[0].mxu0 %v3327
        %v3552 = vpop.f32.mrb[0].mxu0
        %v3553 = vadd.f32 0.0, %v3552
        %v3554 = vpop.f32.mrb[0].mxu0
        %3555 = vmatprep.mubr.f32.mxu0 0.0
        %3556 = vmatmul.mubr.f32.gmra.mrb[0].mxu0 %v3329
        %v3557 = vpop.f32.mrb[0].mxu0
        %v3558 = vadd.f32 0.0, %v3557
        %v3559 = vpop.f32.mrb[0].mxu0
        %3560 = vmatprep.mubr.f32.mxu0 0.0
        %3561 = vmatmul.mubr.f32.gmra.mrb[0].mxu0 %v3331
        %v3562 = vpop.f32.mrb[0].mxu0
        %v3563 = vadd.f32 0.0, %v3562
        %v3564 = vpop.f32.mrb[0].mxu0
        %3565 = vmatprep.mubr.f32.mxu0 0.0
        %3566 = vmatmul.mubr.f32.gmra.mrb[0].mxu0 %v3333
        %v3567 = vpop.f32.mrb[0].mxu0
        %v3568 = vadd.f32 0.0, %v3567
        %v3569 = vpop.f32.mrb[0].mxu0
        %3570 = vmatprep.mubr.f32.mxu0 0.0
        %3571 = vmatmul.mubr.f32.gmra.mrb[0].mxu0 %v3335
        %v3572 = vpop.f32.mrb[0].mxu0
        %v3573 = vadd.f32 0.0, %v3572
        %v3574 = vpop.f32.mrb[0].mxu0
        %3575 = vmatprep.mubr.f32.mxu0 0.0
        %3576 = vmatmul.mubr.f32.gmra.mrb[0].mxu0 %v3337
        %v3577 = vpop.f32.mrb[0].mxu0
        %v3578 = vadd.f32 0.0, %v3577
        %v3579 = vpop.f32.mrb[0].mxu0
        %3580 = vmatprep.mubr.f32.mxu0 0.0
        %3581 = vmatmul.mubr.f32.gmra.mrb[0].mxu0 %v3339
        %v3582 = vpop.f32.mrb[0].mxu0
        %v3583 = vadd.f32 0.0, %v3582
        %v3584 = vpop.f32.mrb[0].mxu0
        %3585 = vmatprep.mubr.f32.mxu0 0.0
        %3586 = vmatmul.mubr.f32.gmra.mrb[0].mxu0 %v3341
        %v3587 = vpop.f32.mrb[0].mxu0
        %v3588 = vadd.f32 0.0, %v3587
        %v3589 = vpop.f32.mrb[0].mxu0
        %3590 = vdwg.mxu0
        %v3591 = vadd.f32 %v3158, %v3413
        %v3592 = vadd.f32 %v3159, %v3418
        %v3593 = vadd.f32 %v3160, %v3423
        %v3594 = vadd.f32 %v3161, %v3428
        %v3595 = vadd.f32 %v3162, %v3433
        %v3596 = vadd.f32 %v3163, %v3438
        %v3597 = vadd.f32 %v3164, %v3443
        %v3598 = vadd.f32 %v3165, %v3448
        %v3599 = vadd.f32 %v3166, %v3453
        %v3600 = vadd.f32 %v3167, %v3458
        %v3601 = vadd.f32 %v3168, %v3463
        %v3602 = vadd.f32 %v3169, %v3468
        %v3603 = vadd.f32 %v3170, %v3473
        %v3604 = vadd.f32 %v3171, %v3478
        %v3605 = vadd.f32 %v3172, %v3483
        %v3606 = vadd.f32 %v3173, %v3488
        %v3607 = vadd.f32 %v3174, %v3493
        %v3608 = vadd.f32 %v3175, %v3498
        %v3609 = vadd.f32 %v3176, %v3503
        %v3610 = vadd.f32 %v3177, %v3508
        %v3611 = vadd.f32 %v3178, %v3513
        %v3612 = vadd.f32 %v3179, %v3518
        %v3613 = vadd.f32 %v3180, %v3523
        %v3614 = vadd.f32 %v3181, %v3528
        %v3615 = vadd.f32 %v3182, %v3533
        %v3616 = vadd.f32 %v3183, %v3538
        %v3617 = vadd.f32 %v3184, %v3543
        %v3618 = vadd.f32 %v3185, %v3548
        %v3619 = vadd.f32 %v3186, %v3553
        %v3620 = vadd.f32 %v3187, %v3558
        %v3621 = vadd.f32 %v3188, %v3563
        %v3622 = vadd.f32 %v3189, %v3568
        %v3623 = vadd.f32 %v3190, %v3573
        %v3624 = vadd.f32 %v3191, %v3578
        %v3625 = vadd.f32 %v3192, %v3583
        %v3626 = vadd.f32 %v3193, %v3588
        %s3627 = scalar_lea.vmem %s2, 16
        %v3628 = vld [vmem:[%s3627] sm:$0x3]
        %v3629 = vunpack.c.l.bf16 %v3628
        %vm3630 = vcmask 1041408
        %v3631 = vrot.slane %v509, 6
        %v3632 = vrot.slane %v510, 6
        %v3633 = vsel %vm3630, %v3631, %v3632
        %v3634 = vrot.slane %v511, 6
        %v3635 = vsel %vm3630, %v3632, %v3634
        %v3636 = vrot.slane %v512, 6
        %v3637 = vsel %vm3630, %v3634, %v3636
        %v3638 = vrot.slane %v513, 6
        %v3639 = vsel %vm3630, %v3636, %v3638
        %v3640 = vrot.slane %v514, 6
        %v3641 = vsel %vm3630, %v3638, %v3640
        %v3642 = vrot.slane %v515, 6
        %v3643 = vsel %vm3630, %v3640, %v3642
        %v3644 = vrot.slane %v516, 6
        %v3645 = vsel %vm3630, %v3642, %v3644
        %v3646 = vrot.slane %v517, 6
        %v3647 = vsel %vm3630, %v3644, %v3646
        %v3648 = vrot.slane %v518, 6
        %v3649 = vsel %vm3630, %v3646, %v3648
        %v3650 = vrot.slane %v519, 6
        %v3651 = vsel %vm3630, %v3648, %v3650
        %v3652 = vrot.slane %v520, 6
        %v3653 = vsel %vm3630, %v3650, %v3652
        %v3654 = vrot.slane %v521, 6
        %v3655 = vsel %vm3630, %v3652, %v3654
        %v3656 = vrot.slane %v522, 6
        %v3657 = vsel %vm3630, %v3654, %v3656
        %v3658 = vrot.slane %v523, 6
        %v3659 = vsel %vm3630, %v3656, %v3658
        %v3660 = vrot.slane %v524, 6
        %v3661 = vsel %vm3630, %v3658, %v3660
        %v3662 = vrot.slane %v525, 6
        %v3663 = vsel %vm3630, %v3660, %v3662
        %v3664 = vrot.slane %v526, 6
        %v3665 = vsel %vm3630, %v3662, %v3664
        %v3666 = vrot.slane %v527, 6
        %v3667 = vsel %vm3630, %v3664, %v3666
        %v3668 = vrot.slane %v528, 6
        %v3669 = vsel %vm3630, %v3666, %v3668
        %v3670 = vrot.slane %v529, 6
        %v3671 = vsel %vm3630, %v3668, %v3670
        %v3672 = vrot.slane %v530, 6
        %v3673 = vsel %vm3630, %v3670, %v3672
        %v3674 = vrot.slane %v531, 6
        %v3675 = vsel %vm3630, %v3672, %v3674
        %v3676 = vrot.slane %v532, 6
        %v3677 = vsel %vm3630, %v3674, %v3676
        %v3678 = vrot.slane %v533, 6
        %v3679 = vsel %vm3630, %v3676, %v3678
        %v3680 = vrot.slane %v534, 6
        %v3681 = vsel %vm3630, %v3678, %v3680
        %v3682 = vrot.slane %v535, 6
        %v3683 = vsel %vm3630, %v3680, %v3682
        %v3684 = vrot.slane %v536, 6
        %v3685 = vsel %vm3630, %v3682, %v3684
        %v3686 = vrot.slane %v537, 6
        %v3687 = vsel %vm3630, %v3684, %v3686
        %v3688 = vrot.slane %v538, 6
        %v3689 = vsel %vm3630, %v3686, %v3688
        %v3690 = vrot.slane %v539, 6
        %v3691 = vsel %vm3630, %v3688, %v3690
        %v3692 = vrot.slane %v540, 6
        %v3693 = vsel %vm3630, %v3690, %v3692
        %v3694 = vrot.slane %v541, 6
        %v3695 = vsel %vm3630, %v3692, %v3694
        %v3696 = vrot.slane %v542, 6
        %v3697 = vsel %vm3630, %v3694, %v3696
        %v3698 = vrot.slane %v543, 6
        %v3699 = vsel %vm3630, %v3696, %v3698
        %v3700 = vrot.slane %v544, 6
        %v3701 = vsel %vm3630, %v3698, %v3700
        %v3702 = vrot.slane %v545, 6
        %v3703 = vsel %vm3630, %v3700, %v3702
        %v3704 = vsel %vm659, %v3633, 0
        %v3706 = vsel %vm659, %v3635, 0
        %v3708 = vsel %vm659, %v3637, 0
        %v3710 = vsel %vm659, %v3639, 0
        %v3712 = vsel %vm659, %v3641, 0
        %v3714 = vsel %vm659, %v3643, 0
        %v3716 = vsel %vm659, %v3645, 0
        %v3718 = vsel %vm659, %v3647, 0
        %v3720 = vsel %vm659, %v3649, 0
        %v3722 = vsel %vm659, %v3651, 0
        %v3724 = vsel %vm659, %v3653, 0
        %v3726 = vsel %vm659, %v3655, 0
        %v3728 = vsel %vm659, %v3657, 0
        %v3730 = vsel %vm659, %v3659, 0
        %v3732 = vsel %vm659, %v3661, 0
        %v3734 = vsel %vm659, %v3663, 0
        %v3736 = vsel %vm659, %v3665, 0
        %v3738 = vsel %vm659, %v3667, 0
        %v3740 = vsel %vm659, %v3669, 0
        %v3742 = vsel %vm659, %v3671, 0
        %v3744 = vsel %vm659, %v3673, 0
        %v3746 = vsel %vm659, %v3675, 0
        %v3748 = vsel %vm659, %v3677, 0
        %v3750 = vsel %vm659, %v3679, 0
        %v3752 = vsel %vm659, %v3681, 0
        %v3754 = vsel %vm659, %v3683, 0
        %v3756 = vsel %vm659, %v3685, 0
        %v3758 = vsel %vm659, %v3687, 0
        %v3760 = vsel %vm659, %v3689, 0
        %v3762 = vsel %vm659, %v3691, 0
        %v3764 = vsel %vm659, %v3693, 0
        %v3766 = vsel %vm659, %v3695, 0
        %v3768 = vsel %vm659, %v3697, 0
        %v3770 = vsel %vm659, %v3699, 0
        %v3772 = vsel %vm659, %v3701, 0
        %v3774 = vsel %vm659, %v3703, 0
        %v3777 = vsel %vm732, %v3629, 0
        %3779 = vmatprep.subr.mxu0 0.0
        %3780 = vmatpush1.msra.mxu0 %v3777
        %3781 = vmatprep.subr.mxu0 0.0
        %3782 = vmatpush1.msra.mxu0 0.0
        %3783 = vmatprep.subr.mxu0 0.0
        %3784 = vmatpush1.msra.mxu0 0.0
        %3785 = vmatprep.subr.mxu0 0.0
        %3786 = vmatpush1.msra.mxu0 0.0
        %3787 = vmatprep.subr.mxu0 0.0
        %3788 = vmatpush1.msra.mxu0 0.0
        %3789 = vmatprep.subr.mxu0 0.0
        %3790 = vmatpush1.msra.mxu0 0.0
        %3791 = vmatprep.subr.mxu0 0.0
        %3792 = vmatpush1.msra.mxu0 0.0
        %3793 = vmatprep.subr.mxu0 0.0
        %3794 = vmatpush1.msra.mxu0 0.0
        %3795 = vmatprep.subr.mxu0 0.0
        %3796 = vmatpush1.msra.mxu0 0.0
        %3797 = vmatprep.subr.mxu0 0.0
        %3798 = vmatpush1.msra.mxu0 0.0
        %3799 = vmatprep.subr.mxu0 0.0
        %3800 = vmatpush1.msra.mxu0 0.0
        %3801 = vmatprep.subr.mxu0 0.0
        %3802 = vmatpush1.msra.mxu0 0.0
        %3803 = vmatprep.subr.mxu0 0.0
        %3804 = vmatpush1.msra.mxu0 0.0
        %3805 = vmatprep.subr.mxu0 0.0
        %3806 = vmatpush1.msra.mxu0 0.0
        %3807 = vmatprep.subr.mxu0 0.0
        %3808 = vmatpush1.msra.mxu0 0.0
        %3809 = vmatprep.subr.mxu0 0.0
        %3810 = vmatpush1.msra.mxu0 0.0
        %3811 = vmatprep.subr.mxu0 0.0
        %3812 = vmatpush1.msra.mxu0 0.0
        %3813 = vmatprep.subr.mxu0 0.0
        %3814 = vmatpush1.msra.mxu0 0.0
        %3815 = vmatprep.subr.mxu0 0.0
        %3816 = vmatpush1.msra.mxu0 0.0
        %3817 = vmatprep.subr.mxu0 0.0
        %3818 = vmatpush1.msra.mxu0 0.0
        %3819 = vmatprep.subr.mxu0 0.0
        %3820 = vmatpush1.msra.mxu0 0.0
        %3821 = vmatprep.subr.mxu0 0.0
        %3822 = vmatpush1.msra.mxu0 0.0
        %3823 = vmatprep.subr.mxu0 0.0
        %3824 = vmatpush1.msra.mxu0 0.0
        %3825 = vmatprep.subr.mxu0 0.0
        %3826 = vmatpush1.msra.mxu0 0.0
        %3827 = vmatprep.subr.mxu0 0.0
        %3828 = vmatpush1.msra.mxu0 0.0
        %3829 = vmatprep.subr.mxu0 0.0
        %3830 = vmatpush1.msra.mxu0 0.0
        %3831 = vmatprep.subr.mxu0 0.0
        %3832 = vmatpush1.msra.mxu0 0.0
        %3833 = vmatprep.subr.mxu0 0.0
        %3834 = vmatpush1.msra.mxu0 0.0
        %3835 = vmatprep.subr.mxu0 0.0
        %3836 = vmatpush1.msra.mxu0 0.0
        %3837 = vmatprep.subr.mxu0 0.0
        %3838 = vmatpush1.msra.mxu0 0.0
        %3839 = vmatprep.subr.mxu0 0.0
        %3840 = vmatpush1.msra.mxu0 0.0
        %3841 = vmatprep.subr.mxu0 0.0
        %3842 = vmatpush1.msra.mxu0 0.0
        %3843 = vmatprep.mubr.f32.mxu0 0.0
        %3844 = vmatmul.mubr.f32.gmra.mrb[0].mxu0 %v3704
        %v3845 = vpop.f32.mrb[0].mxu0
        %v3846 = vadd.f32 0.0, %v3845
        %v3847 = vpop.f32.mrb[0].mxu0
        %3848 = vmatprep.mubr.f32.mxu0 0.0
        %3849 = vmatmul.mubr.f32.gmra.mrb[0].mxu0 %v3706
        %v3850 = vpop.f32.mrb[0].mxu0
        %v3851 = vadd.f32 0.0, %v3850
        %v3852 = vpop.f32.mrb[0].mxu0
        %3853 = vmatprep.mubr.f32.mxu0 0.0
        %3854 = vmatmul.mubr.f32.gmra.mrb[0].mxu0 %v3708
        %v3855 = vpop.f32.mrb[0].mxu0
        %v3856 = vadd.f32 0.0, %v3855
        %v3857 = vpop.f32.mrb[0].mxu0
        %3858 = vmatprep.mubr.f32.mxu0 0.0
        %3859 = vmatmul.mubr.f32.gmra.mrb[0].mxu0 %v3710
        %v3860 = vpop.f32.mrb[0].mxu0
        %v3861 = vadd.f32 0.0, %v3860
        %v3862 = vpop.f32.mrb[0].mxu0
        %3863 = vmatprep.mubr.f32.mxu0 0.0
        %3864 = vmatmul.mubr.f32.gmra.mrb[0].mxu0 %v3712
        %v3865 = vpop.f32.mrb[0].mxu0
        %v3866 = vadd.f32 0.0, %v3865
        %v3867 = vpop.f32.mrb[0].mxu0
        %3868 = vmatprep.mubr.f32.mxu0 0.0
        %3869 = vmatmul.mubr.f32.gmra.mrb[0].mxu0 %v3714
        %v3870 = vpop.f32.mrb[0].mxu0
        %v3871 = vadd.f32 0.0, %v3870
        %v3872 = vpop.f32.mrb[0].mxu0
        %3873 = vmatprep.mubr.f32.mxu0 0.0
        %3874 = vmatmul.mubr.f32.gmra.mrb[0].mxu0 %v3716
        %v3875 = vpop.f32.mrb[0].mxu0
        %v3876 = vadd.f32 0.0, %v3875
        %v3877 = vpop.f32.mrb[0].mxu0
        %3878 = vmatprep.mubr.f32.mxu0 0.0
        %3879 = vmatmul.mubr.f32.gmra.mrb[0].mxu0 %v3718
        %v3880 = vpop.f32.mrb[0].mxu0
        %v3881 = vadd.f32 0.0, %v3880
        %v3882 = vpop.f32.mrb[0].mxu0
        %3883 = vmatprep.mubr.f32.mxu0 0.0
        %3884 = vmatmul.mubr.f32.gmra.mrb[0].mxu0 %v3720
        %v3885 = vpop.f32.mrb[0].mxu0
        %v3886 = vadd.f32 0.0, %v3885
        %v3887 = vpop.f32.mrb[0].mxu0
        %3888 = vmatprep.mubr.f32.mxu0 0.0
        %3889 = vmatmul.mubr.f32.gmra.mrb[0].mxu0 %v3722
        %v3890 = vpop.f32.mrb[0].mxu0
        %v3891 = vadd.f32 0.0, %v3890
        %v3892 = vpop.f32.mrb[0].mxu0
        %3893 = vmatprep.mubr.f32.mxu0 0.0
        %3894 = vmatmul.mubr.f32.gmra.mrb[0].mxu0 %v3724
        %v3895 = vpop.f32.mrb[0].mxu0
        %v3896 = vadd.f32 0.0, %v3895
        %v3897 = vpop.f32.mrb[0].mxu0
        %3898 = vmatprep.mubr.f32.mxu0 0.0
        %3899 = vmatmul.mubr.f32.gmra.mrb[0].mxu0 %v3726
        %v3900 = vpop.f32.mrb[0].mxu0
        %v3901 = vadd.f32 0.0, %v3900
        %v3902 = vpop.f32.mrb[0].mxu0
        %3903 = vmatprep.mubr.f32.mxu0 0.0
        %3904 = vmatmul.mubr.f32.gmra.mrb[0].mxu0 %v3728
        %v3905 = vpop.f32.mrb[0].mxu0
        %v3906 = vadd.f32 0.0, %v3905
        %v3907 = vpop.f32.mrb[0].mxu0
        %3908 = vmatprep.mubr.f32.mxu0 0.0
        %3909 = vmatmul.mubr.f32.gmra.mrb[0].mxu0 %v3730
        %v3910 = vpop.f32.mrb[0].mxu0
        %v3911 = vadd.f32 0.0, %v3910
        %v3912 = vpop.f32.mrb[0].mxu0
        %3913 = vmatprep.mubr.f32.mxu0 0.0
        %3914 = vmatmul.mubr.f32.gmra.mrb[0].mxu0 %v3732
        %v3915 = vpop.f32.mrb[0].mxu0
        %v3916 = vadd.f32 0.0, %v3915
        %v3917 = vpop.f32.mrb[0].mxu0
        %3918 = vmatprep.mubr.f32.mxu0 0.0
        %3919 = vmatmul.mubr.f32.gmra.mrb[0].mxu0 %v3734
        %v3920 = vpop.f32.mrb[0].mxu0
        %v3921 = vadd.f32 0.0, %v3920
        %v3922 = vpop.f32.mrb[0].mxu0
        %3923 = vmatprep.mubr.f32.mxu0 0.0
        %3924 = vmatmul.mubr.f32.gmra.mrb[0].mxu0 %v3736
        %v3925 = vpop.f32.mrb[0].mxu0
        %v3926 = vadd.f32 0.0, %v3925
        %v3927 = vpop.f32.mrb[0].mxu0
        %3928 = vmatprep.mubr.f32.mxu0 0.0
        %3929 = vmatmul.mubr.f32.gmra.mrb[0].mxu0 %v3738
        %v3930 = vpop.f32.mrb[0].mxu0
        %v3931 = vadd.f32 0.0, %v3930
        %v3932 = vpop.f32.mrb[0].mxu0
        %3933 = vmatprep.mubr.f32.mxu0 0.0
        %3934 = vmatmul.mubr.f32.gmra.mrb[0].mxu0 %v3740
        %v3935 = vpop.f32.mrb[0].mxu0
        %v3936 = vadd.f32 0.0, %v3935
        %v3937 = vpop.f32.mrb[0].mxu0
        %3938 = vmatprep.mubr.f32.mxu0 0.0
        %3939 = vmatmul.mubr.f32.gmra.mrb[0].mxu0 %v3742
        %v3940 = vpop.f32.mrb[0].mxu0
        %v3941 = vadd.f32 0.0, %v3940
        %v3942 = vpop.f32.mrb[0].mxu0
        %3943 = vmatprep.mubr.f32.mxu0 0.0
        %3944 = vmatmul.mubr.f32.gmra.mrb[0].mxu0 %v3744
        %v3945 = vpop.f32.mrb[0].mxu0
        %v3946 = vadd.f32 0.0, %v3945
        %v3947 = vpop.f32.mrb[0].mxu0
        %3948 = vmatprep.mubr.f32.mxu0 0.0
        %3949 = vmatmul.mubr.f32.gmra.mrb[0].mxu0 %v3746
        %v3950 = vpop.f32.mrb[0].mxu0
        %v3951 = vadd.f32 0.0, %v3950
        %v3952 = vpop.f32.mrb[0].mxu0
        %3953 = vmatprep.mubr.f32.mxu0 0.0
        %3954 = vmatmul.mubr.f32.gmra.mrb[0].mxu0 %v3748
        %v3955 = vpop.f32.mrb[0].mxu0
        %v3956 = vadd.f32 0.0, %v3955
        %v3957 = vpop.f32.mrb[0].mxu0
        %3958 = vmatprep.mubr.f32.mxu0 0.0
        %3959 = vmatmul.mubr.f32.gmra.mrb[0].mxu0 %v3750
        %v3960 = vpop.f32.mrb[0].mxu0
        %v3961 = vadd.f32 0.0, %v3960
        %v3962 = vpop.f32.mrb[0].mxu0
        %3963 = vmatprep.mubr.f32.mxu0 0.0
        %3964 = vmatmul.mubr.f32.gmra.mrb[0].mxu0 %v3752
        %v3965 = vpop.f32.mrb[0].mxu0
        %v3966 = vadd.f32 0.0, %v3965
        %v3967 = vpop.f32.mrb[0].mxu0
        %3968 = vmatprep.mubr.f32.mxu0 0.0
        %3969 = vmatmul.mubr.f32.gmra.mrb[0].mxu0 %v3754
        %v3970 = vpop.f32.mrb[0].mxu0
        %v3971 = vadd.f32 0.0, %v3970
        %v3972 = vpop.f32.mrb[0].mxu0
        %3973 = vmatprep.mubr.f32.mxu0 0.0
        %3974 = vmatmul.mubr.f32.gmra.mrb[0].mxu0 %v3756
        %v3975 = vpop.f32.mrb[0].mxu0
        %v3976 = vadd.f32 0.0, %v3975
        %v3977 = vpop.f32.mrb[0].mxu0
        %3978 = vmatprep.mubr.f32.mxu0 0.0
        %3979 = vmatmul.mubr.f32.gmra.mrb[0].mxu0 %v3758
        %v3980 = vpop.f32.mrb[0].mxu0
        %v3981 = vadd.f32 0.0, %v3980
        %v3982 = vpop.f32.mrb[0].mxu0
        %3983 = vmatprep.mubr.f32.mxu0 0.0
        %3984 = vmatmul.mubr.f32.gmra.mrb[0].mxu0 %v3760
        %v3985 = vpop.f32.mrb[0].mxu0
        %v3986 = vadd.f32 0.0, %v3985
        %v3987 = vpop.f32.mrb[0].mxu0
        %3988 = vmatprep.mubr.f32.mxu0 0.0
        %3989 = vmatmul.mubr.f32.gmra.mrb[0].mxu0 %v3762
        %v3990 = vpop.f32.mrb[0].mxu0
        %v3991 = vadd.f32 0.0, %v3990
        %v3992 = vpop.f32.mrb[0].mxu0
        %3993 = vmatprep.mubr.f32.mxu0 0.0
        %3994 = vmatmul.mubr.f32.gmra.mrb[0].mxu0 %v3764
        %v3995 = vpop.f32.mrb[0].mxu0
        %v3996 = vadd.f32 0.0, %v3995
        %v3997 = vpop.f32.mrb[0].mxu0
        %3998 = vmatprep.mubr.f32.mxu0 0.0
        %3999 = vmatmul.mubr.f32.gmra.mrb[0].mxu0 %v3766
        %v4000 = vpop.f32.mrb[0].mxu0
        %v4001 = vadd.f32 0.0, %v4000
        %v4002 = vpop.f32.mrb[0].mxu0
        %4003 = vmatprep.mubr.f32.mxu0 0.0
        %4004 = vmatmul.mubr.f32.gmra.mrb[0].mxu0 %v3768
        %v4005 = vpop.f32.mrb[0].mxu0
        %v4006 = vadd.f32 0.0, %v4005
        %v4007 = vpop.f32.mrb[0].mxu0
        %4008 = vmatprep.mubr.f32.mxu0 0.0
        %4009 = vmatmul.mubr.f32.gmra.mrb[0].mxu0 %v3770
        %v4010 = vpop.f32.mrb[0].mxu0
        %v4011 = vadd.f32 0.0, %v4010
        %v4012 = vpop.f32.mrb[0].mxu0
        %4013 = vmatprep.mubr.f32.mxu0 0.0
        %4014 = vmatmul.mubr.f32.gmra.mrb[0].mxu0 %v3772
        %v4015 = vpop.f32.mrb[0].mxu0
        %v4016 = vadd.f32 0.0, %v4015
        %v4017 = vpop.f32.mrb[0].mxu0
        %4018 = vmatprep.mubr.f32.mxu0 0.0
        %4019 = vmatmul.mubr.f32.gmra.mrb[0].mxu0 %v3774
        %v4020 = vpop.f32.mrb[0].mxu0
        %v4021 = vadd.f32 0.0, %v4020
        %v4022 = vpop.f32.mrb[0].mxu0
        %4023 = vdwg.mxu0
        %v4024 = vadd.f32 %v3591, %v3846
        %v4025 = vadd.f32 %v3592, %v3851
        %v4026 = vadd.f32 %v3593, %v3856
        %v4027 = vadd.f32 %v3594, %v3861
        %v4028 = vadd.f32 %v3595, %v3866
        %v4029 = vadd.f32 %v3596, %v3871
        %v4030 = vadd.f32 %v3597, %v3876
        %v4031 = vadd.f32 %v3598, %v3881
        %v4032 = vadd.f32 %v3599, %v3886
        %v4033 = vadd.f32 %v3600, %v3891
        %v4034 = vadd.f32 %v3601, %v3896
        %v4035 = vadd.f32 %v3602, %v3901
        %v4036 = vadd.f32 %v3603, %v3906
        %v4037 = vadd.f32 %v3604, %v3911
        %v4038 = vadd.f32 %v3605, %v3916
        %v4039 = vadd.f32 %v3606, %v3921
        %v4040 = vadd.f32 %v3607, %v3926
        %v4041 = vadd.f32 %v3608, %v3931
        %v4042 = vadd.f32 %v3609, %v3936
        %v4043 = vadd.f32 %v3610, %v3941
        %v4044 = vadd.f32 %v3611, %v3946
        %v4045 = vadd.f32 %v3612, %v3951
        %v4046 = vadd.f32 %v3613, %v3956
        %v4047 = vadd.f32 %v3614, %v3961
        %v4048 = vadd.f32 %v3615, %v3966
        %v4049 = vadd.f32 %v3616, %v3971
        %v4050 = vadd.f32 %v3617, %v3976
        %v4051 = vadd.f32 %v3618, %v3981
        %v4052 = vadd.f32 %v3619, %v3986
        %v4053 = vadd.f32 %v3620, %v3991
        %v4054 = vadd.f32 %v3621, %v3996
        %v4055 = vadd.f32 %v3622, %v4001
        %v4056 = vadd.f32 %v3623, %v4006
        %v4057 = vadd.f32 %v3624, %v4011
        %v4058 = vadd.f32 %v3625, %v4016
        %v4059 = vadd.f32 %v3626, %v4021
        %v4060 = vld [vmem:[%s3] sm:$0x1]
        %v4062 = vlaneseq
        %v4063 = vshrl.u32 %v4062, 7
        %v4064 = vsub.s32 0, %v4063
        %v4065 = vrot.slane %v4060, %v4064
        %v4067 = vadd.f32 %v4024, %v4065
        %v4068 = vadd.f32 %v4025, %v4065
        %v4069 = vadd.f32 %v4026, %v4065
        %v4070 = vadd.f32 %v4027, %v4065
        %v4071 = vadd.f32 %v4028, %v4065
        %v4072 = vadd.f32 %v4029, %v4065
        %v4073 = vadd.f32 %v4030, %v4065
        %v4074 = vadd.f32 %v4031, %v4065
        %v4075 = vadd.f32 %v4032, %v4065
        %v4076 = vadd.f32 %v4033, %v4065
        %v4077 = vadd.f32 %v4034, %v4065
        %v4078 = vadd.f32 %v4035, %v4065
        %v4079 = vadd.f32 %v4036, %v4065
        %v4080 = vadd.f32 %v4037, %v4065
        %v4081 = vadd.f32 %v4038, %v4065
        %v4082 = vadd.f32 %v4039, %v4065
        %v4083 = vadd.f32 %v4040, %v4065
        %v4084 = vadd.f32 %v4041, %v4065
        %v4085 = vadd.f32 %v4042, %v4065
        %v4086 = vadd.f32 %v4043, %v4065
        %v4087 = vadd.f32 %v4044, %v4065
        %v4088 = vadd.f32 %v4045, %v4065
        %v4089 = vadd.f32 %v4046, %v4065
        %v4090 = vadd.f32 %v4047, %v4065
        %v4091 = vadd.f32 %v4048, %v4065
        %v4092 = vadd.f32 %v4049, %v4065
        %v4093 = vadd.f32 %v4050, %v4065
        %v4094 = vadd.f32 %v4051, %v4065
        %v4095 = vadd.f32 %v4052, %v4065
        %v4096 = vadd.f32 %v4053, %v4065
        %v4097 = vadd.f32 %v4054, %v4065
        %v4098 = vadd.f32 %v4055, %v4065
        %v4099 = vadd.f32 %v4056, %v4065
        %v4100 = vadd.f32 %v4057, %v4065
        %v4101 = vadd.f32 %v4058, %v4065
        %v4102 = vadd.f32 %v4059, %v4065
        %v4103 = vmax.f32 %v4067, 0.0
        %v4104 = vmax.f32 %v4068, 0.0
        %v4105 = vmax.f32 %v4069, 0.0
        %v4106 = vmax.f32 %v4070, 0.0
        %v4107 = vmax.f32 %v4071, 0.0
        %v4108 = vmax.f32 %v4072, 0.0
        %v4109 = vmax.f32 %v4073, 0.0
        %v4110 = vmax.f32 %v4074, 0.0
        %v4111 = vmax.f32 %v4075, 0.0
        %v4112 = vmax.f32 %v4076, 0.0
        %v4113 = vmax.f32 %v4077, 0.0
        %v4114 = vmax.f32 %v4078, 0.0
        %v4115 = vmax.f32 %v4079, 0.0
        %v4116 = vmax.f32 %v4080, 0.0
        %v4117 = vmax.f32 %v4081, 0.0
        %v4118 = vmax.f32 %v4082, 0.0
        %v4119 = vmax.f32 %v4083, 0.0
        %v4120 = vmax.f32 %v4084, 0.0
        %v4121 = vmax.f32 %v4085, 0.0
        %v4122 = vmax.f32 %v4086, 0.0
        %v4123 = vmax.f32 %v4087, 0.0
        %v4124 = vmax.f32 %v4088, 0.0
        %v4125 = vmax.f32 %v4089, 0.0
        %v4126 = vmax.f32 %v4090, 0.0
        %v4127 = vmax.f32 %v4091, 0.0
        %v4128 = vmax.f32 %v4092, 0.0
        %v4129 = vmax.f32 %v4093, 0.0
        %v4130 = vmax.f32 %v4094, 0.0
        %v4131 = vmax.f32 %v4095, 0.0
        %v4132 = vmax.f32 %v4096, 0.0
        %v4133 = vmax.f32 %v4097, 0.0
        %v4134 = vmax.f32 %v4098, 0.0
        %v4135 = vmax.f32 %v4099, 0.0
        %v4136 = vmax.f32 %v4100, 0.0
        %v4137 = vmax.f32 %v4101, 0.0
        %v4138 = vmax.f32 %v4102, 0.0
        %v4139 = vld [vmem:[%s1] sm:$0xff]
        %v4140 = vld [vmem:[%s1 + $0x8] sm:$0xff]
        %v4141 = vld [vmem:[%s1 + $0x10] sm:$0xff]
        %v4142 = vld [vmem:[%s1 + $0x18] sm:$0xff]
        %v4143 = vld [vmem:[%s1 + $0x20] sm:$0xff]
        %v4144 = vld [vmem:[%s1 + $0x28] sm:$0xff]
        %v4145 = vld [vmem:[%s1 + $0x30] sm:$0xff]
        %v4146 = vld [vmem:[%s1 + $0x38] sm:$0xff]
        %v4147 = vld [vmem:[%s1 + $0x40] sm:$0xff]
        %v4148 = vld [vmem:[%s1 + $0x48] sm:$0xff]
        %v4149 = vld [vmem:[%s1 + $0x50] sm:$0xff]
        %v4150 = vld [vmem:[%s1 + $0x58] sm:$0xff]
        %v4151 = vld [vmem:[%s1 + $0x60] sm:$0xff]
        %v4152 = vld [vmem:[%s1 + $0x68] sm:$0xff]
        %v4153 = vld [vmem:[%s1 + $0x70] sm:$0xff]
        %v4154 = vld [vmem:[%s1 + $0x78] sm:$0xff]
        %v4155 = vld [vmem:[%s1 + $0x80] sm:$0xff]
        %v4156 = vld [vmem:[%s1 + $0x88] sm:$0xff]
        %v4157 = vld [vmem:[%s1 + $0x90] sm:$0xff]
        %v4158 = vld [vmem:[%s1 + $0x98] sm:$0xff]
        %v4159 = vld [vmem:[%s1 + $0xa0] sm:$0xff]
        %v4160 = vld [vmem:[%s1 + $0xa8] sm:$0xff]
        %v4161 = vld [vmem:[%s1 + $0xb0] sm:$0xff]
        %v4162 = vld [vmem:[%s1 + $0xb8] sm:$0xff]
        %v4163 = vld [vmem:[%s1 + $0xc0] sm:$0xff]
        %v4164 = vld [vmem:[%s1 + $0xc8] sm:$0xff]
        %v4165 = vld [vmem:[%s1 + $0xd0] sm:$0xff]
        %v4166 = vld [vmem:[%s1 + $0xd8] sm:$0xff]
        %v4167 = vld [vmem:[%s1 + $0xe0] sm:$0xff]
        %v4168 = vld [vmem:[%s1 + $0xe8] sm:$0xff]
        %v4169 = vld [vmem:[%s1 + $0xf0] sm:$0xff]
        %v4170 = vld [vmem:[%s1 + $0xf8] sm:$0xff]
        %v4171 = vld [vmem:[%s1 + $0x100] sm:$0xff]
        %v4172 = vld [vmem:[%s1 + $0x108] sm:$0xff]
        %v4173 = vld [vmem:[%s1 + $0x110] sm:$0xff]
        %v4174 = vld [vmem:[%s1 + $0x118] sm:$0x3f]
        %4176 = vset.pattern.permute.xlu0 0
        %4177 = vperm.xlu0 %4176, %v4139
        %v4178 = vpop.permute.xlu0 %4177
        %4181 = vset.pattern.permute.xlu0 0
        %4182 = vperm.xlu0 %4181, %v4140
        %v4183 = vpop.permute.xlu0 %4182
        %4186 = vset.pattern.permute.xlu0 0
        %4187 = vperm.xlu0 %4186, %v4141
        %v4188 = vpop.permute.xlu0 %4187
        %4191 = vset.pattern.permute.xlu0 0
        %4192 = vperm.xlu0 %4191, %v4142
        %v4193 = vpop.permute.xlu0 %4192
        %4196 = vset.pattern.permute.xlu0 0
        %4197 = vperm.xlu0 %4196, %v4143
        %v4198 = vpop.permute.xlu0 %4197
        %4201 = vset.pattern.permute.xlu0 0
        %4202 = vperm.xlu0 %4201, %v4144
        %v4203 = vpop.permute.xlu0 %4202
        %4206 = vset.pattern.permute.xlu0 0
        %4207 = vperm.xlu0 %4206, %v4145
        %v4208 = vpop.permute.xlu0 %4207
        %4211 = vset.pattern.permute.xlu0 0
        %4212 = vperm.xlu0 %4211, %v4146
        %v4213 = vpop.permute.xlu0 %4212
        %4216 = vset.pattern.permute.xlu0 0
        %4217 = vperm.xlu0 %4216, %v4147
        %v4218 = vpop.permute.xlu0 %4217
        %4221 = vset.pattern.permute.xlu0 0
        %4222 = vperm.xlu0 %4221, %v4148
        %v4223 = vpop.permute.xlu0 %4222
        %4226 = vset.pattern.permute.xlu0 0
        %4227 = vperm.xlu0 %4226, %v4149
        %v4228 = vpop.permute.xlu0 %4227
        %4231 = vset.pattern.permute.xlu0 0
        %4232 = vperm.xlu0 %4231, %v4150
        %v4233 = vpop.permute.xlu0 %4232
        %4236 = vset.pattern.permute.xlu0 0
        %4237 = vperm.xlu0 %4236, %v4151
        %v4238 = vpop.permute.xlu0 %4237
        %4241 = vset.pattern.permute.xlu0 0
        %4242 = vperm.xlu0 %4241, %v4152
        %v4243 = vpop.permute.xlu0 %4242
        %4246 = vset.pattern.permute.xlu0 0
        %4247 = vperm.xlu0 %4246, %v4153
        %v4248 = vpop.permute.xlu0 %4247
        %4251 = vset.pattern.permute.xlu0 0
        %4252 = vperm.xlu0 %4251, %v4154
        %v4253 = vpop.permute.xlu0 %4252
        %4256 = vset.pattern.permute.xlu0 0
        %4257 = vperm.xlu0 %4256, %v4155
        %v4258 = vpop.permute.xlu0 %4257
        %4261 = vset.pattern.permute.xlu0 0
        %4262 = vperm.xlu0 %4261, %v4156
        %v4263 = vpop.permute.xlu0 %4262
        %4266 = vset.pattern.permute.xlu0 0
        %4267 = vperm.xlu0 %4266, %v4157
        %v4268 = vpop.permute.xlu0 %4267
        %4271 = vset.pattern.permute.xlu0 0
        %4272 = vperm.xlu0 %4271, %v4158
        %v4273 = vpop.permute.xlu0 %4272
        %4276 = vset.pattern.permute.xlu0 0
        %4277 = vperm.xlu0 %4276, %v4159
        %v4278 = vpop.permute.xlu0 %4277
        %4281 = vset.pattern.permute.xlu0 0
        %4282 = vperm.xlu0 %4281, %v4160
        %v4283 = vpop.permute.xlu0 %4282
        %4286 = vset.pattern.permute.xlu0 0
        %4287 = vperm.xlu0 %4286, %v4161
        %v4288 = vpop.permute.xlu0 %4287
        %4291 = vset.pattern.permute.xlu0 0
        %4292 = vperm.xlu0 %4291, %v4162
        %v4293 = vpop.permute.xlu0 %4292
        %4296 = vset.pattern.permute.xlu0 0
        %4297 = vperm.xlu0 %4296, %v4163
        %v4298 = vpop.permute.xlu0 %4297
        %4301 = vset.pattern.permute.xlu0 0
        %4302 = vperm.xlu0 %4301, %v4164
        %v4303 = vpop.permute.xlu0 %4302
        %4306 = vset.pattern.permute.xlu0 0
        %4307 = vperm.xlu0 %4306, %v4165
        %v4308 = vpop.permute.xlu0 %4307
        %4311 = vset.pattern.permute.xlu0 0
        %4312 = vperm.xlu0 %4311, %v4166
        %v4313 = vpop.permute.xlu0 %4312
        %4316 = vset.pattern.permute.xlu0 0
        %4317 = vperm.xlu0 %4316, %v4167
        %v4318 = vpop.permute.xlu0 %4317
        %4321 = vset.pattern.permute.xlu0 0
        %4322 = vperm.xlu0 %4321, %v4168
        %v4323 = vpop.permute.xlu0 %4322
        %4326 = vset.pattern.permute.xlu0 0
        %4327 = vperm.xlu0 %4326, %v4169
        %v4328 = vpop.permute.xlu0 %4327
        %4331 = vset.pattern.permute.xlu0 0
        %4332 = vperm.xlu0 %4331, %v4170
        %v4333 = vpop.permute.xlu0 %4332
        %4336 = vset.pattern.permute.xlu0 0
        %4337 = vperm.xlu0 %4336, %v4171
        %v4338 = vpop.permute.xlu0 %4337
        %4341 = vset.pattern.permute.xlu0 0
        %4342 = vperm.xlu0 %4341, %v4172
        %v4343 = vpop.permute.xlu0 %4342
        %4346 = vset.pattern.permute.xlu0 0
        %4347 = vperm.xlu0 %4346, %v4173
        %v4348 = vpop.permute.xlu0 %4347
        %4351 = vset.pattern.permute.xlu0 0
        %4352 = vperm.xlu0 %4351, %v4174
        %v4353 = vpop.permute.xlu0 %4352
        %v4355 = vmul.f32 %v4103, %v4178
        %v4356 = vmul.f32 %v4104, %v4183
        %v4357 = vmul.f32 %v4105, %v4188
        %v4358 = vmul.f32 %v4106, %v4193
        %v4359 = vmul.f32 %v4107, %v4198
        %v4360 = vmul.f32 %v4108, %v4203
        %v4361 = vmul.f32 %v4109, %v4208
        %v4362 = vmul.f32 %v4110, %v4213
        %v4363 = vmul.f32 %v4111, %v4218
        %v4364 = vmul.f32 %v4112, %v4223
        %v4365 = vmul.f32 %v4113, %v4228
        %v4366 = vmul.f32 %v4114, %v4233
        %v4367 = vmul.f32 %v4115, %v4238
        %v4368 = vmul.f32 %v4116, %v4243
        %v4369 = vmul.f32 %v4117, %v4248
        %v4370 = vmul.f32 %v4118, %v4253
        %v4371 = vmul.f32 %v4119, %v4258
        %v4372 = vmul.f32 %v4120, %v4263
        %v4373 = vmul.f32 %v4121, %v4268
        %v4374 = vmul.f32 %v4122, %v4273
        %v4375 = vmul.f32 %v4123, %v4278
        %v4376 = vmul.f32 %v4124, %v4283
        %v4377 = vmul.f32 %v4125, %v4288
        %v4378 = vmul.f32 %v4126, %v4293
        %v4379 = vmul.f32 %v4127, %v4298
        %v4380 = vmul.f32 %v4128, %v4303
        %v4381 = vmul.f32 %v4129, %v4308
        %v4382 = vmul.f32 %v4130, %v4313
        %v4383 = vmul.f32 %v4131, %v4318
        %v4384 = vmul.f32 %v4132, %v4323
        %v4385 = vmul.f32 %v4133, %v4328
        %v4386 = vmul.f32 %v4134, %v4333
        %v4387 = vmul.f32 %v4135, %v4338
        %v4388 = vmul.f32 %v4136, %v4343
        %v4389 = vmul.f32 %v4137, %v4348
        %v4390 = vmul.f32 %v4138, %v4353
        %v4391 = vadd.f32 %v4355, %v4356
        %v4392 = vadd.f32 %v4391, %v4357
        %v4393 = vadd.f32 %v4392, %v4358
        %v4394 = vadd.f32 %v4393, %v4359
        %v4395 = vadd.f32 %v4394, %v4360
        %v4396 = vadd.f32 %v4395, %v4361
        %v4397 = vadd.f32 %v4396, %v4362
        %v4398 = vadd.f32 %v4397, %v4363
        %v4399 = vadd.f32 %v4398, %v4364
        %v4400 = vadd.f32 %v4399, %v4365
        %v4401 = vadd.f32 %v4400, %v4366
        %v4402 = vadd.f32 %v4401, %v4367
        %v4403 = vadd.f32 %v4402, %v4368
        %v4404 = vadd.f32 %v4403, %v4369
        %v4405 = vadd.f32 %v4404, %v4370
        %v4406 = vadd.f32 %v4405, %v4371
        %v4407 = vadd.f32 %v4406, %v4372
        %v4408 = vadd.f32 %v4407, %v4373
        %v4409 = vadd.f32 %v4408, %v4374
        %v4410 = vadd.f32 %v4409, %v4375
        %v4411 = vadd.f32 %v4410, %v4376
        %v4412 = vadd.f32 %v4411, %v4377
        %v4413 = vadd.f32 %v4412, %v4378
        %v4414 = vadd.f32 %v4413, %v4379
        %v4415 = vadd.f32 %v4414, %v4380
        %v4416 = vadd.f32 %v4415, %v4381
        %v4417 = vadd.f32 %v4416, %v4382
        %v4418 = vadd.f32 %v4417, %v4383
        %v4419 = vadd.f32 %v4418, %v4384
        %v4420 = vadd.f32 %v4419, %v4385
        %v4421 = vadd.f32 %v4420, %v4386
        %v4422 = vadd.f32 %v4421, %v4387
        %v4423 = vadd.f32 %v4422, %v4388
        %v4424 = vadd.f32 %v4423, %v4389
        %v4425 = vsel %vm1304, %v4390, 0.0
        %v4426 = vadd.f32 %v4424, %v4425
        %v4427 = vrot.slane %v4426, 4
        %v4428 = vadd.f32 %v4426, %v4427
        %v4429 = vrot.slane %v4428, 2
        %v4430 = vadd.f32 %v4428, %v4429
        %v4431 = vrot.slane %v4430, 1
        %v4432 = vadd.f32 %v4430, %v4431
        %v4433 = vld [vmem:[%s4] sm:$0xf]
        %v4434 = vld [vmem:[%s4 + $0x4] sm:$0xf]
        %v4435 = vld [vmem:[%s4 + $0x8] sm:$0xf]
        %v4436 = vld [vmem:[%s4 + $0xc] sm:$0xf]
        %v4437 = vld [vmem:[%s4 + $0x10] sm:$0xf]
        %v4438 = vld [vmem:[%s4 + $0x14] sm:$0xf]
        %v4439 = vld [vmem:[%s4 + $0x18] sm:$0xf]
        %v4440 = vld [vmem:[%s4 + $0x1c] sm:$0xf]
        %v4441 = vld [vmem:[%s4 + $0x20] sm:$0xf]
        %v4442 = vld [vmem:[%s4 + $0x24] sm:$0xf]
        %v4443 = vld [vmem:[%s4 + $0x28] sm:$0xf]
        %v4444 = vld [vmem:[%s4 + $0x2c] sm:$0xf]
        %v4445 = vld [vmem:[%s4 + $0x30] sm:$0xf]
        %v4446 = vld [vmem:[%s4 + $0x34] sm:$0xf]
        %v4447 = vld [vmem:[%s4 + $0x38] sm:$0xf]
        %v4448 = vld [vmem:[%s4 + $0x3c] sm:$0xf]
        %v4449 = vunpack.c.l.bf16 %v4433
        %v4450 = vunpack.c.l.bf16 %v4434
        %v4451 = vunpack.c.l.bf16 %v4435
        %v4452 = vunpack.c.l.bf16 %v4436
        %v4453 = vunpack.c.l.bf16 %v4437
        %v4454 = vunpack.c.l.bf16 %v4438
        %v4455 = vunpack.c.l.bf16 %v4439
        %v4456 = vunpack.c.l.bf16 %v4440
        %v4457 = vunpack.c.l.bf16 %v4441
        %v4458 = vunpack.c.l.bf16 %v4442
        %v4459 = vunpack.c.l.bf16 %v4443
        %v4460 = vunpack.c.l.bf16 %v4444
        %v4461 = vunpack.c.l.bf16 %v4445
        %v4462 = vunpack.c.l.bf16 %v4446
        %v4463 = vunpack.c.l.bf16 %v4447
        %v4464 = vunpack.c.l.bf16 %v4448
        %v4465 = vld [vmem:[%s5] sm:$0x1]
        %4466 = vmatprep.subr.mxu0 0.0
        %4467 = vmatpush1.msra.mxu0 %v4449
        %4468 = vmatprep.subr.mxu0 0.0
        %4469 = vmatpush1.msra.mxu0 %v4450
        %4470 = vmatprep.subr.mxu0 0.0
        %4471 = vmatpush1.msra.mxu0 %v4451
        %4472 = vmatprep.subr.mxu0 0.0
        %4473 = vmatpush1.msra.mxu0 %v4452
        %4474 = vmatprep.subr.mxu0 0.0
        %4475 = vmatpush1.msra.mxu0 %v4453
        %4476 = vmatprep.subr.mxu0 0.0
        %4477 = vmatpush1.msra.mxu0 %v4454
        %4478 = vmatprep.subr.mxu0 0.0
        %4479 = vmatpush1.msra.mxu0 %v4455
        %4480 = vmatprep.subr.mxu0 0.0
        %4481 = vmatpush1.msra.mxu0 %v4456
        %4482 = vmatprep.subr.mxu0 0.0
        %4483 = vmatpush1.msra.mxu0 %v4457
        %4484 = vmatprep.subr.mxu0 0.0
        %4485 = vmatpush1.msra.mxu0 %v4458
        %4486 = vmatprep.subr.mxu0 0.0
        %4487 = vmatpush1.msra.mxu0 %v4459
        %4488 = vmatprep.subr.mxu0 0.0
        %4489 = vmatpush1.msra.mxu0 %v4460
        %4490 = vmatprep.subr.mxu0 0.0
        %4491 = vmatpush1.msra.mxu0 %v4461
        %4492 = vmatprep.subr.mxu0 0.0
        %4493 = vmatpush1.msra.mxu0 %v4462
        %4494 = vmatprep.subr.mxu0 0.0
        %4495 = vmatpush1.msra.mxu0 %v4463
        %4496 = vmatprep.subr.mxu0 0.0
        %4497 = vmatpush1.msra.mxu0 %v4464
        %4498 = vmatprep.subr.mxu0 0.0
        %4499 = vmatpush1.msra.mxu0 0.0
        %4500 = vmatprep.subr.mxu0 0.0
        %4501 = vmatpush1.msra.mxu0 0.0
        %4502 = vmatprep.subr.mxu0 0.0
        %4503 = vmatpush1.msra.mxu0 0.0
        %4504 = vmatprep.subr.mxu0 0.0
        %4505 = vmatpush1.msra.mxu0 0.0
        %4506 = vmatprep.subr.mxu0 0.0
        %4507 = vmatpush1.msra.mxu0 0.0
        %4508 = vmatprep.subr.mxu0 0.0
        %4509 = vmatpush1.msra.mxu0 0.0
        %4510 = vmatprep.subr.mxu0 0.0
        %4511 = vmatpush1.msra.mxu0 0.0
        %4512 = vmatprep.subr.mxu0 0.0
        %4513 = vmatpush1.msra.mxu0 0.0
        %4514 = vmatprep.subr.mxu0 0.0
        %4515 = vmatpush1.msra.mxu0 0.0
        %4516 = vmatprep.subr.mxu0 0.0
        %4517 = vmatpush1.msra.mxu0 0.0
        %4518 = vmatprep.subr.mxu0 0.0
        %4519 = vmatpush1.msra.mxu0 0.0
        %4520 = vmatprep.subr.mxu0 0.0
        %4521 = vmatpush1.msra.mxu0 0.0
        %4522 = vmatprep.subr.mxu0 0.0
        %4523 = vmatpush1.msra.mxu0 0.0
        %4524 = vmatprep.subr.mxu0 0.0
        %4525 = vmatpush1.msra.mxu0 0.0
        %4526 = vmatprep.subr.mxu0 0.0
        %4527 = vmatpush1.msra.mxu0 0.0
        %4528 = vmatprep.subr.mxu0 0.0
        %4529 = vmatpush1.msra.mxu0 0.0
        %4530 = vmatprep.mubr.f32.mxu0 0.0
        %4531 = vmatmul.mubr.f32.gmra.mrb[0].mxu0 %v4432
        %v4532 = vpop.f32.mrb[0].mxu0
        %v4533 = vadd.f32 %v4465, %v4532
        %v4534 = vpop.f32.mrb[0].mxu0
        %4535 = vdwg.mxu0
        %v4536 = vmax.f32 %v4533, 0.0
        %v4537 = vmul.f32 %v4536, 0.33333334
        %p4538 = scmp.eq.s32.totalorder %s35, 0
        // Predicated region
        $region65: #{context_module_forward.1} parent=63 // pred_check
          %p4539 = pneg %p4538
        $region66: #{context_module_forward.1} parent=63 // pred_check_branch
          %4541 = sbr.rel (%p4539) target = $region68
        $region67: #{context_module_forward.1} parent=63 // pred_region
          %4542 = vst [vmem:[%s444] sm:$0x1] %v4537
          %v4543 = vld [vmem:[%s463] sm:$0x7]
          %v4544 = vld [vmem:[%s7] sm:$0xff]
          %v4545 = vld [vmem:[%s8] sm:$0x1]
          %v4547 = vlaneseq
          %v4548 = vshrl.u32 %v4547, 7
          %v4549 = vsub.s32 0, %v4548
          %v4550 = vrot.slane %v4545, %v4549
          %vm4552 = vcmask 64512
          %v4554 = vsel %vm4552, %v4543, 0
          %4556 = vmatprep.subr.mxu0 0.0
          %4557 = vmatpush1.msra.mxu0 %v4544
          %4558 = vmatprep.subr.mxu0 0.0
          %4559 = vmatpush1.msra.mxu0 0.0
          %4560 = vmatprep.subr.mxu0 0.0
          %4561 = vmatpush1.msra.mxu0 0.0
          %4562 = vmatprep.subr.mxu0 0.0
          %4563 = vmatpush1.msra.mxu0 0.0
          %4564 = vmatprep.subr.mxu0 0.0
          %4565 = vmatpush1.msra.mxu0 0.0
          %4566 = vmatprep.subr.mxu0 0.0
          %4567 = vmatpush1.msra.mxu0 0.0
          %4568 = vmatprep.subr.mxu0 0.0
          %4569 = vmatpush1.msra.mxu0 0.0
          %4570 = vmatprep.subr.mxu0 0.0
          %4571 = vmatpush1.msra.mxu0 0.0
          %4572 = vmatprep.subr.mxu0 0.0
          %4573 = vmatpush1.msra.mxu0 0.0
          %4574 = vmatprep.subr.mxu0 0.0
          %4575 = vmatpush1.msra.mxu0 0.0
          %4576 = vmatprep.subr.mxu0 0.0
          %4577 = vmatpush1.msra.mxu0 0.0
          %4578 = vmatprep.subr.mxu0 0.0
          %4579 = vmatpush1.msra.mxu0 0.0
          %4580 = vmatprep.subr.mxu0 0.0
          %4581 = vmatpush1.msra.mxu0 0.0
          %4582 = vmatprep.subr.mxu0 0.0
          %4583 = vmatpush1.msra.mxu0 0.0
          %4584 = vmatprep.subr.mxu0 0.0
          %4585 = vmatpush1.msra.mxu0 0.0
          %4586 = vmatprep.subr.mxu0 0.0
          %4587 = vmatpush1.msra.mxu0 0.0
          %4588 = vmatprep.subr.mxu0 0.0
          %4589 = vmatpush1.msra.mxu0 0.0
          %4590 = vmatprep.subr.mxu0 0.0
          %4591 = vmatpush1.msra.mxu0 0.0
          %4592 = vmatprep.subr.mxu0 0.0
          %4593 = vmatpush1.msra.mxu0 0.0
          %4594 = vmatprep.subr.mxu0 0.0
          %4595 = vmatpush1.msra.mxu0 0.0
          %4596 = vmatprep.subr.mxu0 0.0
          %4597 = vmatpush1.msra.mxu0 0.0
          %4598 = vmatprep.subr.mxu0 0.0
          %4599 = vmatpush1.msra.mxu0 0.0
          %4600 = vmatprep.subr.mxu0 0.0
          %4601 = vmatpush1.msra.mxu0 0.0
          %4602 = vmatprep.subr.mxu0 0.0
          %4603 = vmatpush1.msra.mxu0 0.0
          %4604 = vmatprep.subr.mxu0 0.0
          %4605 = vmatpush1.msra.mxu0 0.0
          %4606 = vmatprep.subr.mxu0 0.0
          %4607 = vmatpush1.msra.mxu0 0.0
          %4608 = vmatprep.subr.mxu0 0.0
          %4609 = vmatpush1.msra.mxu0 0.0
          %4610 = vmatprep.subr.mxu0 0.0
          %4611 = vmatpush1.msra.mxu0 0.0
          %4612 = vmatprep.subr.mxu0 0.0
          %4613 = vmatpush1.msra.mxu0 0.0
          %4614 = vmatprep.subr.mxu0 0.0
          %4615 = vmatpush1.msra.mxu0 0.0
          %4616 = vmatprep.subr.mxu0 0.0
          %4617 = vmatpush1.msra.mxu0 0.0
          %4618 = vmatprep.subr.mxu0 0.0
          %4619 = vmatpush1.msra.mxu0 0.0
          %4620 = vmatprep.mubr.f32.mxu0 0.0
          %4621 = vmatmul.mubr.f32.gmra.mrb[0].mxu0 %v4554
          %v4622 = vpop.f32.mrb[0].mxu0
          %v4623 = vadd.f32 %v4550, %v4622
          %v4624 = vpop.f32.mrb[0].mxu0
          %4625 = vdwg.mxu0
          %v4626 = vmax.f32 %v4623, 0.0
          %v4627 = vsel %vm3197, %v4626, 0.0
          %v4628 = vrot.slane %v4627, 4
          %v4629 = vadd.f32 %v4627, %v4628
          %v4630 = vrot.slane %v4629, 2
          %v4631 = vadd.f32 %v4629, %v4630
          %v4632 = vrot.slane %v4631, 1
          %v4633 = vadd.f32 %v4631, %v4632
          %v4634 = vrcp.pop 3.0
          %v4635 = vmul.f32 %v4633, %v4634
          %v4636 = vld [vmem:[%s9] sm:$0xff]
          %v4637 = vld [vmem:[%s9 + $0x8] sm:$0xff]
          %v4638 = vld [vmem:[%s9 + $0x10] sm:$0xff]
          %v4639 = vld [vmem:[%s9 + $0x18] sm:$0xff]
          %v4640 = vld [vmem:[%s9 + $0x20] sm:$0xff]
          %v4641 = vld [vmem:[%s9 + $0x28] sm:$0xff]
          %v4642 = vld [vmem:[%s9 + $0x30] sm:$0xff]
          %v4643 = vld [vmem:[%s9 + $0x38] sm:$0xff]
          %v4644 = vld [vmem:[%s9 + $0x40] sm:$0xff]
          %v4645 = vld [vmem:[%s9 + $0x48] sm:$0xff]
          %v4646 = vld [vmem:[%s9 + $0x50] sm:$0xff]
          %v4647 = vld [vmem:[%s9 + $0x58] sm:$0xff]
          %v4648 = vld [vmem:[%s9 + $0x60] sm:$0xff]
          %v4649 = vld [vmem:[%s9 + $0x68] sm:$0xff]
          %v4650 = vld [vmem:[%s9 + $0x70] sm:$0xff]
          %v4651 = vld [vmem:[%s9 + $0x78] sm:$0xff]
          %v4652 = vld [vmem:[%s10] sm:$0x1]
          %4653 = vmatprep.subr.mxu0 0.0
          %4654 = vmatpush1.msra.mxu0 %v4636
          %4655 = vmatprep.subr.mxu0 0.0
          %4656 = vmatpush1.msra.mxu0 %v4637
          %4657 = vmatprep.subr.mxu0 0.0
          %4658 = vmatpush1.msra.mxu0 %v4638
          %4659 = vmatprep.subr.mxu0 0.0
          %4660 = vmatpush1.msra.mxu0 %v4639
          %4661 = vmatprep.subr.mxu0 0.0
          %4662 = vmatpush1.msra.mxu0 %v4640
          %4663 = vmatprep.subr.mxu0 0.0
          %4664 = vmatpush1.msra.mxu0 %v4641
          %4665 = vmatprep.subr.mxu0 0.0
          %4666 = vmatpush1.msra.mxu0 %v4642
          %4667 = vmatprep.subr.mxu0 0.0
          %4668 = vmatpush1.msra.mxu0 %v4643
          %4669 = vmatprep.subr.mxu0 0.0
          %4670 = vmatpush1.msra.mxu0 %v4644
          %4671 = vmatprep.subr.mxu0 0.0
          %4672 = vmatpush1.msra.mxu0 %v4645
          %4673 = vmatprep.subr.mxu0 0.0
          %4674 = vmatpush1.msra.mxu0 %v4646
          %4675 = vmatprep.subr.mxu0 0.0
          %4676 = vmatpush1.msra.mxu0 %v4647
          %4677 = vmatprep.subr.mxu0 0.0
          %4678 = vmatpush1.msra.mxu0 %v4648
          %4679 = vmatprep.subr.mxu0 0.0
          %4680 = vmatpush1.msra.mxu0 %v4649
          %4681 = vmatprep.subr.mxu0 0.0
          %4682 = vmatpush1.msra.mxu0 %v4650
          %4683 = vmatprep.subr.mxu0 0.0
          %4684 = vmatpush1.msra.mxu0 %v4651
          %4685 = vmatprep.subr.mxu0 0.0
          %4686 = vmatpush1.msra.mxu0 0.0
          %4687 = vmatprep.subr.mxu0 0.0
          %4688 = vmatpush1.msra.mxu0 0.0
          %4689 = vmatprep.subr.mxu0 0.0
          %4690 = vmatpush1.msra.mxu0 0.0
          %4691 = vmatprep.subr.mxu0 0.0
          %4692 = vmatpush1.msra.mxu0 0.0
          %4693 = vmatprep.subr.mxu0 0.0
          %4694 = vmatpush1.msra.mxu0 0.0
          %4695 = vmatprep.subr.mxu0 0.0
          %4696 = vmatpush1.msra.mxu0 0.0
          %4697 = vmatprep.subr.mxu0 0.0
          %4698 = vmatpush1.msra.mxu0 0.0
          %4699 = vmatprep.subr.mxu0 0.0
          %4700 = vmatpush1.msra.mxu0 0.0
          %4701 = vmatprep.subr.mxu0 0.0
          %4702 = vmatpush1.msra.mxu0 0.0
          %4703 = vmatprep.subr.mxu0 0.0
          %4704 = vmatpush1.msra.mxu0 0.0
          %4705 = vmatprep.subr.mxu0 0.0
          %4706 = vmatpush1.msra.mxu0 0.0
          %4707 = vmatprep.subr.mxu0 0.0
          %4708 = vmatpush1.msra.mxu0 0.0
          %4709 = vmatprep.subr.mxu0 0.0
          %4710 = vmatpush1.msra.mxu0 0.0
          %4711 = vmatprep.subr.mxu0 0.0
          %4712 = vmatpush1.msra.mxu0 0.0
          %4713 = vmatprep.subr.mxu0 0.0
          %4714 = vmatpush1.msra.mxu0 0.0
          %4715 = vmatprep.subr.mxu0 0.0
          %4716 = vmatpush1.msra.mxu0 0.0
          %4717 = vmatprep.mubr.f32.mxu0 0.0
          %4718 = vmatmul.mubr.f32.gmra.mrb[0].mxu0 %v4635
          %v4719 = vpop.f32.mrb[0].mxu0
          %v4720 = vadd.f32 %v4652, %v4719
          %v4721 = vpop.f32.mrb[0].mxu0
          %4722 = vdwg.mxu0
          %4723 = vst [vmem:[%s450] sm:$0x1] %v4720
        $region68: #{context_module_forward.1} parent=63 // pred_fallthru
          _
        %p4724 = scmp.gt.s32.totalorder %s35, 0
        // Predicated region
        $region69: #{context_module_forward.1} parent=63 // pred_check
          %p4725 = pneg %p4724
        $region70: #{context_module_forward.1} parent=63 // pred_check_branch
          %4727 = sbr.rel (%p4725) target = $region72
        $region71: #{context_module_forward.1} parent=63 // pred_region
          %v4728 = vld [vmem:[%s444] sm:$0x1]
          %v4729 = vadd.f32 %v4728, %v4537
          %4730 = vst [vmem:[%s444] sm:$0x1] %v4729
        $region72: #{context_module_forward.1} parent=63 // pred_fallthru
          _
        %s4731 = sand.u32 %s293, 1
        %s4732 = scalar_lea.sflag [#allocation3], %s4731
        %s4733 = sand.u32 %s293, 1
        %s4734 = scalar_lea.vmem [#allocation2], %s4733
        %s4735 = sand.u32 %s319, 1
        %s4736 = scalar_lea.sflag [#allocation5], %s4735
        %s4737 = sand.u32 %s319, 1
        %s4738 = scalar_lea.vmem [#allocation4], %s4737
        // Predicated region
        $region73: #{context_module_forward.1} parent=63 // pred_check
          %p4739 = pneg %p303
        $region74: #{context_module_forward.1} parent=63 // pred_check_branch
          %4741 = sbr.rel (%p4739) target = $region76
        $region75: #{context_module_forward.1} parent=63 // pred_region
          %s4743 = ssub.s32 16, 16
          %4744 = vsyncadd %s4732, %s4743
          %s4745 = smul.addr %s34, 16
          %s4746 = scalar_lea.hbm %s11, %s4745
          %s4748 = sshll.u32 %s4734, 4
          %s4749 = int_to_ptr.vmem [resolvable:$true] %s4748
          %4751 = dma.vmem_to_hbm [thread:$0]  %s4749, 16, %s4746, %s4732
        $region76: #{context_module_forward.1} parent=63 // pred_fallthru
          _
        // Predicated region
        $region77: #{context_module_forward.1} parent=63 // pred_check
          %p4752 = pneg %p329
        $region78: #{context_module_forward.1} parent=63 // pred_check_branch
          %4754 = sbr.rel (%p4752) target = $region80
        $region79: #{context_module_forward.1} parent=63 // pred_region
          %s4756 = ssub.s32 16, 16
          %4757 = vsyncadd %s4736, %s4756
          %s4758 = smul.addr %s34, 16
          %s4759 = scalar_lea.hbm %s12, %s4758
          %s4761 = sshll.u32 %s4738, 4
          %s4762 = int_to_ptr.vmem [resolvable:$true] %s4761
          %4764 = dma.vmem_to_hbm [thread:$0]  %s4762, 16, %s4759, %s4736
        $region80: #{context_module_forward.1} parent=63 // pred_fallthru
          _
      $region64: #{context_module_forward.1} parent=5 // pred_fallthru
        _
      %p4765 = scmp.le.s32.totalorder 2, %s25
      // Predicated region
      $region81: #{context_module_forward.1} parent=5 // pred_check
        %p4766 = pneg %p4765
      $region82: #{context_module_forward.1} parent=5 // pred_check_branch
        %4768 = sbr.rel (%p4766) target = $region84
      $region83: #{context_module_forward.1} parent=5 // pred_region
        %s4769 = ssub.s32 %s25, 2
        // Predicated region
        $region85: #{context_module_forward.1} parent=83 // pred_check
          %p4770 = pneg %p309
        $region86: #{context_module_forward.1} parent=83 // pred_check_branch
          %4772 = sbr.rel (%p4770) target = $region88
        $region87: #{context_module_forward.1} parent=83 // pred_region
          %s4773 = sand.u32 %s294, 1
          %s4774 = scalar_lea.sflag [#allocation3], %s4773
          %s4775 = sand.u32 %s294, 1
          %s4776 = scalar_lea.vmem [#allocation2], %s4775
          %4777 = dma.done %s4774, 16
        $region88: #{context_module_forward.1} parent=83 // pred_fallthru
          _
        // Predicated region
        $region89: #{context_module_forward.1} parent=83 // pred_check
          %p4778 = pneg %p335
        $region90: #{context_module_forward.1} parent=83 // pred_check_branch
          %4780 = sbr.rel (%p4778) target = $region92
        $region91: #{context_module_forward.1} parent=83 // pred_region
          %s4781 = sand.u32 %s320, 1
          %s4782 = scalar_lea.sflag [#allocation5], %s4781
          %s4783 = sand.u32 %s320, 1
          %s4784 = scalar_lea.vmem [#allocation4], %s4783
          %4785 = dma.done %s4782, 16
        $region92: #{context_module_forward.1} parent=83 // pred_fallthru
          _
      $region84: #{context_module_forward.1} parent=5 // pred_fallthru
        _
    $region6: #{context_module_forward.1} parent=1 // loop_footer
      %s29 = sadd.s32 1, %s25
    $region7: #{context_module_forward.1} parent=1 // loop_footer_branch
      %24 = sbr.rel target = $region3
    $region8: #{context_module_forward.1} parent=1 // loop_exit
      _
    %4786 = vsyncpa [#allocation3], 1
    %s4787 = scalar_lea.sflag [#allocation3], 1
    %4788 = vsyncpa %s4787, 1
    %4789 = vsyncpa [#allocation5], 1
    %s4790 = scalar_lea.sflag [#allocation5], 1
    %4791 = vsyncpa %s4790, 1

</llo_original>
